<compile_context>
chip_gen: v6e
topology: v6e:2x2x1
jax: 0.10.0
libtpu: 0.0.40
codegen_flags: <defaults>
</compile_context>

<pallas_src>
import functools

import jax
import jax.numpy as jnp
from jax.experimental import pallas as pl
from jax.experimental.pallas import tpu as pltpu

LN_EPS = 1e-5


def _gelu(x):
    # tanh-approximation GELU.
    # TODO(synk): PyTorch nn.GELU() default is the exact erf variant; the
    # original module takes `activation` as a constructor arg.
    c = jnp.float32(0.7978845608028654)  # sqrt(2/pi)
    return 0.5 * x * (1.0 + jnp.tanh(c * (x + 0.044715 * x * x * x)))


# ---------------------------------------------------------------------------
# Pallas kernel: in_proj + residual + layernorm + FFN + residual, fused.
# ---------------------------------------------------------------------------
def _residual_kernel(n_mid, x_ref, y_ref, pw_ref, vec_ref, w1_ref, bias_ref,
                     *refs):
    # refs = [w_mid_0, ..., w_mid_{n_mid-1}, w_out, o_ref]
    o_ref = refs[-1]
    w_out_ref = refs[-2]
    mid_refs = refs[:-2]

    x = x_ref[...].astype(jnp.float32)          # (bm, D)
    y = y_ref[...]                              # (bm, D)

    in_b = vec_ref[0:1, :]                      # (1, D) f32
    gamma = vec_ref[1:2, :]
    beta = vec_ref[2:3, :]
    out_b = vec_ref[3:4, :]

    # x = x + in_proj(y)   (feat_dropout == identity in eval mode)
    # bf16 MXU operands, f32 accumulation.
    h = x + jnp.dot(y.astype(jnp.bfloat16), pw_ref[...],
                    preferred_element_type=jnp.float32) + in_b

    # LayerNorm (fused: var = E[h^2] - mu^2, gamma folded into rsqrt scale)
    mu = jnp.mean(h, axis=-1, keepdims=True)
    var = jnp.mean(h * h, axis=-1, keepdims=True) - mu * mu
    scale = jax.lax.rsqrt(var + LN_EPS) * gamma
    z = (h - mu) * scale + beta

    # FFN: Linear(D,4D) -> act -> [Linear(4D,4D) -> act]*n_mid -> Linear(4D,D)
    z = _gelu(jnp.dot(z.astype(jnp.bfloat16), w1_ref[...],
                      preferred_element_type=jnp.float32)
              + bias_ref[0:1, :])
    for i in range(n_mid):                      # static unroll
        z = _gelu(jnp.dot(z.astype(jnp.bfloat16), mid_refs[i][...],
                          preferred_element_type=jnp.float32)
                  + bias_ref[i + 1:i + 2, :])
    z = jnp.dot(z.astype(jnp.bfloat16), w_out_ref[...],
                preferred_element_type=jnp.float32) + out_b

    # x = x + dropout(ffn(...))  (dropout == identity)
    o_ref[...] = (h + z).astype(o_ref.dtype)


# ---------------------------------------------------------------------------
# wrapper
# ---------------------------------------------------------------------------
def residual_forward(x, y, params, *, block_rows=128):
    N, D = x.shape
    H = params['w1'].shape[1]                   # FFN hidden = 4*D
    n_mid = len(params['mid'])
    assert N % block_rows == 0, "N must be divisible by block_rows"
    assert N // block_rows >= 2, "want >=2 grid steps for pipelining"

    bf16 = jnp.bfloat16
    f32 = jnp.float32

    # Pack the four D-sized vectors into one lane-dense slab (kept f32).
    vec = jnp.stack([params['in_b'], params['gamma'],
                     params['beta'], params['out_b']], axis=0).astype(f32)
    # Pack b1 + all mid biases into one (1+n_mid, H) slab (kept f32).
    bias_slab = jnp.stack([params['b1']]
                          + [bm for (_, bm) in params['mid']],
                          axis=0).astype(f32)

    # Weights as bf16 MXU operands (pre-transposed to (in, out) in params).
    in_w = params['in_w'].astype(bf16)
    w1 = params['w1'].astype(bf16)
    w_out = params['w_out'].astype(bf16)
    mids = [wm.astype(bf16) for (wm, _) in params['mid']]

    weight_inputs = [in_w, vec, w1, bias_slab]
    weight_shapes = [(D, D), (4, D), (D, H), (1 + n_mid, H)]
    for wm in mids:
        weight_inputs.append(wm)
        weight_shapes.append((H, H))
    weight_inputs.append(w_out)
    weight_shapes.append((H, D))

    # --- VMEM budget (weights resident + double-buffered row tiles + live f32
    #     intermediates), with headroom, clamped to a safe range. ---
    io_item = x.dtype.itemsize
    weight_bytes = int(sum(int(w.size) * w.dtype.itemsize for w in weight_inputs))
    io_bytes = 2 * 2 * block_rows * D * 4 + 2 * block_rows * D * io_item
    live_bytes = 8 * block_rows * max(D, H) * 4
    vmem_limit = int(2 * (weight_bytes + io_bytes + live_bytes))
    vmem_limit = max(vmem_limit, 32 * 1024 * 1024)
    vmem_limit = min(vmem_limit, 64 * 1024 * 1024)

    # --- advisory cost estimate for the XLA scheduler ---
    flops = 2 * N * (D * D + D * H + n_mid * H * H + H * D)
    transcendentals = N * H * (1 + n_mid) + N          # gelu tanh + rsqrt
    bytes_accessed = 3 * N * D * io_item + weight_bytes
    cost = pl.CostEstimate(flops=int(flops),
                           transcendentals=int(transcendentals),
                           bytes_accessed=int(bytes_accessed))

    kernel = functools.partial(_residual_kernel, n_mid)

    def run(single_buffer_weights):
        def const_spec(shape):
            nd = len(shape)
            idx = lambda i, _nd=nd: (0,) * _nd
            if single_buffer_weights:
                # Constant index_map -> weights never change block; a single
                # buffer halves their VMEM footprint.
                return pl.BlockSpec(shape, idx, pipeline_mode=pl.Buffered(1))
            return pl.BlockSpec(shape, idx)

        weight_specs = [const_spec(s) for s in weight_shapes]
        return pl.pallas_call(
            kernel,
            out_shape=jax.ShapeDtypeStruct((N, D), x.dtype),
            grid=(N // block_rows,),
            in_specs=[pl.BlockSpec((block_rows, D), lambda i: (i, 0)),
                      pl.BlockSpec((block_rows, D), lambda i: (i, 0))]
                     + weight_specs,
            out_specs=pl.BlockSpec((block_rows, D), lambda i: (i, 0)),
            compiler_params=pltpu.CompilerParams(
                dimension_semantics=("parallel",),
                vmem_limit_bytes=vmem_limit),
            cost_estimate=cost,
        )(x, y, *weight_inputs)

    try:
        return run(True)
    except Exception:
        # TODO(synk): pl.Buffered(1) not accepted by this jax build; fall back
        # to default double-buffered weight specs.
        return run(False)


# ---------------------------------------------------------------------------
# pure-JAX reference (same math, no Pallas). mxu_dtype=bf16 mirrors the kernel
# exactly; mxu_dtype=f32 gives the "exact" eval-mode module output.
# ---------------------------------------------------------------------------
def reference(x, y, params, *, mxu_dtype=jnp.bfloat16):
    def mm(a, w):
        return jnp.dot(a.astype(mxu_dtype), w.astype(mxu_dtype),
                       preferred_element_type=jnp.float32)

    h = x + mm(y, params['in_w']) + params['in_b'][None]
    mu = jnp.mean(h, axis=-1, keepdims=True)
    var = jnp.mean(h * h, axis=-1, keepdims=True) - mu * mu
    z = (h - mu) * jax.lax.rsqrt(var + LN_EPS) * params['gamma'][None] \
        + params['beta'][None]
    z = _gelu(mm(z, params['w1']) + params['b1'][None])
    for (wm, bm) in params['mid']:
        z = _gelu(mm(z, wm) + bm[None])
    z = mm(z, params['w_out']) + params['out_b'][None]
    return h + z


# ---------------------------------------------------------------------------
def make_params(key, D, n_ffn_dense_layers=2):
    H = 4 * D
    n_mid = max(n_ffn_dense_layers - 2, 0)
    ks = jax.random.split(key, 8 + 2 * max(n_mid, 1))
    n = lambda k, shape, s=0.1: s * jax.random.normal(k, shape, jnp.float32)
    params = {
        # weights are stored pre-transposed as (in, out)
        'in_w': n(ks[0], (D, D)), 'in_b': n(ks[1], (D,)),
        'gamma': 1.0 + n(ks[2], (D,)), 'beta': n(ks[3], (D,)),
        'w1': n(ks[4], (D, H)), 'b1': n(ks[5], (H,)),
        'w_out': n(ks[6], (H, D)), 'out_b': n(ks[7], (D,)),
        'mid': [],
    }
    for i in range(n_mid):
        params['mid'].append((n(ks[8 + 2 * i], (H, H)),
                              n(ks[9 + 2 * i], (H,))))
    return params


if __name__ == "__main__":
    key = jax.random.PRNGKey(0)
    k_p, k_x, k_y = jax.random.split(key, 3)

    # N rows of D-dim features; D is lane-dense (multiple of 128).
    N, D = 256, 128
    params = make_params(k_p, D, n_ffn_dense_layers=2)

    x = jax.random.normal(k_x, (N, D), jnp.float32)
    y = jax.random.normal(k_y, (N, D), jnp.float32)

    out = residual_forward(x, y, params, block_rows=128)
    out = jax.block_until_ready(out)
    assert out.shape == (N, D)

    # Tight check against a reference doing the identical bf16-MXU math.
    ref_bf16 = reference(x, y, params, mxu_dtype=jnp.bfloat16)
    diff_bf16 = jnp.max(jnp.abs(out - ref_bf16))
    assert jnp.allclose(out, ref_bf16, atol=2e-3, rtol=2e-3), (
        f"max abs diff vs bf16-matmul reference: {diff_bf16}")

    # Looser sanity check against the full-f32 eval-mode module math.
    ref_f32 = reference(x, y, params, mxu_dtype=jnp.float32)
    diff_f32 = jnp.max(jnp.abs(out - ref_f32))
    assert jnp.allclose(out, ref_f32, atol=5e-2, rtol=5e-2), (
        f"max abs diff vs f32 reference: {diff_f32}")

    print("KERNEL_OK")
</pallas_src>

<mosaic_0001>
module attributes {stable_mosaic.version = 11 : i64} {
  func.func @_residual_kernel(%arg0: i32, %arg1: memref<128x128xf32, #tpu.memory_space<vmem>>, %arg2: memref<128x128xf32, #tpu.memory_space<vmem>>, %arg3: memref<128x128xbf16, #tpu.memory_space<vmem>>, %arg4: memref<4x128xf32, #tpu.memory_space<vmem>>, %arg5: memref<128x512xbf16, #tpu.memory_space<vmem>>, %arg6: memref<1x512xf32, #tpu.memory_space<vmem>>, %arg7: memref<512x128xbf16, #tpu.memory_space<vmem>>, %arg8: memref<128x128xf32, #tpu.memory_space<vmem>>) attributes {dimension_semantics = [#tpu.dimension_semantics<parallel>], iteration_bounds = array<i64: 2>, scalar_prefetch = 0 : i64, scratch_operands = 0 : i64, tpu.core_type = #tpu.core_type<tc>, window_params = [{transform_indices = @transform_0, window_bounds = array<i64: 128, 128>}, {transform_indices = @transform_1, window_bounds = array<i64: 128, 128>}, {pipeline_mode = #tpu.pipeline_mode<synchronous>, transform_indices = @transform_2, window_bounds = array<i64: 128, 128>}, {pipeline_mode = #tpu.pipeline_mode<synchronous>, transform_indices = @transform_3, window_bounds = array<i64: 4, 128>}, {pipeline_mode = #tpu.pipeline_mode<synchronous>, transform_indices = @transform_4, window_bounds = array<i64: 128, 512>}, {pipeline_mode = #tpu.pipeline_mode<synchronous>, transform_indices = @transform_5, window_bounds = array<i64: 1, 512>}, {pipeline_mode = #tpu.pipeline_mode<synchronous>, transform_indices = @transform_6, window_bounds = array<i64: 512, 128>}, {transform_indices = @transform_7, window_bounds = array<i64: 128, 128>}]} {
    %c0 = arith.constant 0 : index
    %c0_0 = arith.constant 0 : index
    %0 = vector.load %arg1[%c0, %c0_0] : memref<128x128xf32, #tpu.memory_space<vmem>>, vector<128x128xf32>
    %c0_1 = arith.constant 0 : index
    %c0_2 = arith.constant 0 : index
    %1 = vector.load %arg2[%c0_1, %c0_2] : memref<128x128xf32, #tpu.memory_space<vmem>>, vector<128x128xf32>
    %c0_3 = arith.constant 0 : index
    %c0_4 = arith.constant 0 : index
    %2 = vector.load %arg4[%c0_3, %c0_4] : memref<4x128xf32, #tpu.memory_space<vmem>>, vector<1x128xf32>
    %c1 = arith.constant 1 : index
    %c0_5 = arith.constant 0 : index
    %3 = vector.load %arg4[%c1, %c0_5] : memref<4x128xf32, #tpu.memory_space<vmem>>, vector<1x128xf32>
    %c2 = arith.constant 2 : index
    %c0_6 = arith.constant 0 : index
    %4 = vector.load %arg4[%c2, %c0_6] : memref<4x128xf32, #tpu.memory_space<vmem>>, vector<1x128xf32>
    %c3 = arith.constant 3 : index
    %c0_7 = arith.constant 0 : index
    %5 = vector.load %arg4[%c3, %c0_7] : memref<4x128xf32, #tpu.memory_space<vmem>>, vector<1x128xf32>
    %6 = arith.truncf %1 : vector<128x128xf32> to vector<128x128xbf16>
    %c0_8 = arith.constant 0 : index
    %c0_9 = arith.constant 0 : index
    %7 = vector.load %arg3[%c0_8, %c0_9] : memref<128x128xbf16, #tpu.memory_space<vmem>>, vector<128x128xbf16>
    %cst = arith.constant dense<0.000000e+00> : vector<128x128xf32>
    %8 = tpu.matmul %6, %7, %cst {dimension_numbers = #tpu.dot_dimension_numbers<[1], [0], [0], [1], [0, 0, 1, 1], [], []>} : vector<128x128xbf16>, vector<128x128xbf16>, vector<128x128xf32> -> vector<128x128xf32>
    %9 = arith.addf %0, %8 : vector<128x128xf32>
    %10 = vector.broadcast %2 : vector<1x128xf32> to vector<128x128xf32>
    %11 = arith.addf %9, %10 : vector<128x128xf32>
    %cst_10 = arith.constant dense<0.000000e+00> : vector<128xf32>
    %12 = vector.multi_reduction <add>, %11, %cst_10 [1] : vector<128x128xf32> to vector<128xf32>
    %13 = vector.shape_cast %12 : vector<128xf32> to vector<128x1xf32>
    %cst_11 = arith.constant 1.280000e+02 : f32
    %14 = vector.broadcast %cst_11 : f32 to vector<128x1xf32>
    %15 = arith.divf %13, %14 : vector<128x1xf32>
    %16 = arith.mulf %11, %11 : vector<128x128xf32>
    %cst_12 = arith.constant dense<0.000000e+00> : vector<128xf32>
    %17 = vector.multi_reduction <add>, %16, %cst_12 [1] : vector<128x128xf32> to vector<128xf32>
    %18 = vector.shape_cast %17 : vector<128xf32> to vector<128x1xf32>
    %cst_13 = arith.constant 1.280000e+02 : f32
    %19 = vector.broadcast %cst_13 : f32 to vector<128x1xf32>
    %20 = arith.divf %18, %19 : vector<128x1xf32>
    %21 = arith.mulf %15, %15 : vector<128x1xf32>
    %22 = arith.subf %20, %21 : vector<128x1xf32>
    %cst_14 = arith.constant 9.99999974E-6 : f32
    %23 = vector.broadcast %cst_14 : f32 to vector<128x1xf32>
    %24 = arith.addf %22, %23 : vector<128x1xf32>
    %25 = math.rsqrt %24 : vector<128x1xf32>
    %26 = vector.broadcast %25 : vector<128x1xf32> to vector<128x128xf32>
    %27 = vector.broadcast %3 : vector<1x128xf32> to vector<128x128xf32>
    %28 = arith.mulf %26, %27 : vector<128x128xf32>
    %29 = vector.broadcast %15 : vector<128x1xf32> to vector<128x128xf32>
    %30 = arith.subf %11, %29 : vector<128x128xf32>
    %31 = arith.mulf %30, %28 : vector<128x128xf32>
    %32 = vector.broadcast %4 : vector<1x128xf32> to vector<128x128xf32>
    %33 = arith.addf %31, %32 : vector<128x128xf32>
    %34 = arith.truncf %33 : vector<128x128xf32> to vector<128x128xbf16>
    %c0_15 = arith.constant 0 : index
    %c0_16 = arith.constant 0 : index
    %35 = vector.load %arg5[%c0_15, %c0_16] : memref<128x512xbf16, #tpu.memory_space<vmem>>, vector<128x512xbf16>
    %cst_17 = arith.constant dense<0.000000e+00> : vector<128x512xf32>
    %36 = tpu.matmul %34, %35, %cst_17 {dimension_numbers = #tpu.dot_dimension_numbers<[1], [0], [0], [1], [0, 0, 1, 1], [], []>} : vector<128x128xbf16>, vector<128x512xbf16>, vector<128x512xf32> -> vector<128x512xf32>
    %c0_18 = arith.constant 0 : index
    %c0_19 = arith.constant 0 : index
    %37 = vector.load %arg6[%c0_18, %c0_19] : memref<1x512xf32, #tpu.memory_space<vmem>>, vector<1x512xf32>
    %38 = vector.broadcast %37 : vector<1x512xf32> to vector<128x512xf32>
    %39 = arith.addf %36, %38 : vector<128x512xf32>
    %cst_20 = arith.constant 5.000000e-01 : f32
    %40 = vector.broadcast %cst_20 : f32 to vector<128x512xf32>
    %41 = arith.mulf %40, %39 : vector<128x512xf32>
    %cst_21 = arith.constant 4.471500e-02 : f32
    %42 = vector.broadcast %cst_21 : f32 to vector<128x512xf32>
    %43 = arith.mulf %42, %39 : vector<128x512xf32>
    %44 = arith.mulf %43, %39 : vector<128x512xf32>
    %45 = arith.mulf %44, %39 : vector<128x512xf32>
    %46 = arith.addf %39, %45 : vector<128x512xf32>
    %cst_22 = arith.constant 0.797884583 : f32
    %47 = vector.broadcast %cst_22 : f32 to vector<128x512xf32>
    %48 = arith.mulf %47, %46 : vector<128x512xf32>
    %49 = math.tanh %48 : vector<128x512xf32>
    %cst_23 = arith.constant 1.000000e+00 : f32
    %50 = vector.broadcast %cst_23 : f32 to vector<128x512xf32>
    %51 = arith.addf %50, %49 : vector<128x512xf32>
    %52 = arith.mulf %41, %51 : vector<128x512xf32>
    %53 = arith.truncf %52 : vector<128x512xf32> to vector<128x512xbf16>
    %c0_24 = arith.constant 0 : index
    %c0_25 = arith.constant 0 : index
    %54 = vector.load %arg7[%c0_24, %c0_25] : memref<512x128xbf16, #tpu.memory_space<vmem>>, vector<512x128xbf16>
    %cst_26 = arith.constant dense<0.000000e+00> : vector<128x128xf32>
    %55 = tpu.matmul %53, %54, %cst_26 {dimension_numbers = #tpu.dot_dimension_numbers<[1], [0], [0], [1], [0, 0, 1, 1], [], []>} : vector<128x512xbf16>, vector<512x128xbf16>, vector<128x128xf32> -> vector<128x128xf32>
    %56 = vector.broadcast %5 : vector<1x128xf32> to vector<128x128xf32>
    %57 = arith.addf %55, %56 : vector<128x128xf32>
    %58 = arith.addf %11, %57 : vector<128x128xf32>
    %c0_27 = arith.constant 0 : index
    %c0_28 = arith.constant 0 : index
    %59 = vector.load %arg8[%c0_27, %c0_28] : memref<128x128xf32, #tpu.memory_space<vmem>>, vector<128x128xf32>
    tpu.vector_store %arg8[%c0_27, %c0_28], %58 {strides = array<i32>} : memref<128x128xf32, #tpu.memory_space<vmem>>, vector<128x128xf32>,
    return
  }
  func.func @transform_0(%arg0: i32) -> (i32, i32) {
    %c0_i32 = arith.constant 0 : i32
    %c0_i32_0 = arith.constant 0 : i32
    return %arg0, %c0_i32 : i32, i32
  }
  func.func @transform_1(%arg0: i32) -> (i32, i32) {
    %c0_i32 = arith.constant 0 : i32
    %c0_i32_0 = arith.constant 0 : i32
    return %arg0, %c0_i32 : i32, i32
  }
  func.func @transform_2(%arg0: i32) -> (i32, i32) {
    %c0_i32 = arith.constant 0 : i32
    %c0_i32_0 = arith.constant 0 : i32
    %c0_i32_1 = arith.constant 0 : i32
    return %c0_i32, %c0_i32_0 : i32, i32
  }
  func.func @transform_3(%arg0: i32) -> (i32, i32) {
    %c0_i32 = arith.constant 0 : i32
    %c0_i32_0 = arith.constant 0 : i32
    %c0_i32_1 = arith.constant 0 : i32
    return %c0_i32, %c0_i32_0 : i32, i32
  }
  func.func @transform_4(%arg0: i32) -> (i32, i32) {
    %c0_i32 = arith.constant 0 : i32
    %c0_i32_0 = arith.constant 0 : i32
    %c0_i32_1 = arith.constant 0 : i32
    return %c0_i32, %c0_i32_0 : i32, i32
  }
  func.func @transform_5(%arg0: i32) -> (i32, i32) {
    %c0_i32 = arith.constant 0 : i32
    %c0_i32_0 = arith.constant 0 : i32
    %c0_i32_1 = arith.constant 0 : i32
    return %c0_i32, %c0_i32_0 : i32, i32
  }
  func.func @transform_6(%arg0: i32) -> (i32, i32) {
    %c0_i32 = arith.constant 0 : i32
    %c0_i32_0 = arith.constant 0 : i32
    %c0_i32_1 = arith.constant 0 : i32
    return %c0_i32, %c0_i32_0 : i32, i32
  }
  func.func @transform_7(%arg0: i32) -> (i32, i32) {
    %c0_i32 = arith.constant 0 : i32
    %c0_i32_0 = arith.constant 0 : i32
    return %arg0, %c0_i32 : i32, i32
  }
}

module attributes {stable_mosaic.version = 11 : i64} {
  func.func @_residual_kernel(%arg0: i32, %arg1: memref<128x128xf32, #tpu.memory_space<vmem>>, %arg2: memref<128x128xf32, #tpu.memory_space<vmem>>, %arg3: memref<128x128xbf16, #tpu.memory_space<vmem>>, %arg4: memref<4x128xf32, #tpu.memory_space<vmem>>, %arg5: memref<128x512xbf16, #tpu.memory_space<vmem>>, %arg6: memref<1x512xf32, #tpu.memory_space<vmem>>, %arg7: memref<512x128xbf16, #tpu.memory_space<vmem>>, %arg8: memref<128x128xf32, #tpu.memory_space<vmem>>) attributes {dimension_semantics = [#tpu.dimension_semantics<parallel>], iteration_bounds = array<i64: 2>, scalar_prefetch = 0 : i64, scratch_operands = 0 : i64, tpu.core_type = #tpu.core_type<tc>, window_params = [{transform_indices = @transform_0, window_bounds = array<i64: 128, 128>}, {transform_indices = @transform_1, window_bounds = array<i64: 128, 128>}, {pipeline_mode = #tpu.pipeline_mode<synchronous>, transform_indices = @transform_2, window_bounds = array<i64: 128, 128>}, {pipeline_mode = #tpu.pipeline_mode<synchronous>, transform_indices = @transform_3, window_bounds = array<i64: 4, 128>}, {pipeline_mode = #tpu.pipeline_mode<synchronous>, transform_indices = @transform_4, window_bounds = array<i64: 128, 512>}, {pipeline_mode = #tpu.pipeline_mode<synchronous>, transform_indices = @transform_5, window_bounds = array<i64: 1, 512>}, {pipeline_mode = #tpu.pipeline_mode<synchronous>, transform_indices = @transform_6, window_bounds = array<i64: 512, 128>}, {transform_indices = @transform_7, window_bounds = array<i64: 128, 128>}]} {
    %c0 = arith.constant 0 : index
    %c0_0 = arith.constant 0 : index
    %0 = vector.load %arg1[%c0, %c0_0] : memref<128x128xf32, #tpu.memory_space<vmem>>, vector<128x128xf32>
    %c0_1 = arith.constant 0 : index
    %c0_2 = arith.constant 0 : index
    %1 = vector.load %arg2[%c0_1, %c0_2] : memref<128x128xf32, #tpu.memory_space<vmem>>, vector<128x128xf32>
    %c0_3 = arith.constant 0 : index
    %c0_4 = arith.constant 0 : index
    %2 = vector.load %arg4[%c0_3, %c0_4] : memref<4x128xf32, #tpu.memory_space<vmem>>, vector<1x128xf32>
    %c1 = arith.constant 1 : index
    %c0_5 = arith.constant 0 : index
    %3 = vector.load %arg4[%c1, %c0_5] : memref<4x128xf32, #tpu.memory_space<vmem>>, vector<1x128xf32>
    %c2 = arith.constant 2 : index
    %c0_6 = arith.constant 0 : index
    %4 = vector.load %arg4[%c2, %c0_6] : memref<4x128xf32, #tpu.memory_space<vmem>>, vector<1x128xf32>
    %c3 = arith.constant 3 : index
    %c0_7 = arith.constant 0 : index
    %5 = vector.load %arg4[%c3, %c0_7] : memref<4x128xf32, #tpu.memory_space<vmem>>, vector<1x128xf32>
    %6 = arith.truncf %1 : vector<128x128xf32> to vector<128x128xbf16>
    %c0_8 = arith.constant 0 : index
    %c0_9 = arith.constant 0 : index
    %7 = vector.load %arg3[%c0_8, %c0_9] : memref<128x128xbf16, #tpu.memory_space<vmem>>, vector<128x128xbf16>
    %cst = arith.constant dense<0.000000e+00> : vector<128x128xf32>
    %8 = tpu.matmul %6, %7, %cst {dimension_numbers = #tpu.dot_dimension_numbers<[1], [0], [0], [1], [0, 0, 1, 1], [], []>} : vector<128x128xbf16>, vector<128x128xbf16>, vector<128x128xf32> -> vector<128x128xf32>
    %9 = arith.addf %0, %8 : vector<128x128xf32>
    %10 = vector.broadcast %2 : vector<1x128xf32> to vector<128x128xf32>
    %11 = arith.addf %9, %10 : vector<128x128xf32>
    %cst_10 = arith.constant dense<0.000000e+00> : vector<128xf32>
    %12 = vector.multi_reduction <add>, %11, %cst_10 [1] : vector<128x128xf32> to vector<128xf32>
    %13 = vector.shape_cast %12 : vector<128xf32> to vector<128x1xf32>
    %cst_11 = arith.constant 1.280000e+02 : f32
    %14 = vector.broadcast %cst_11 : f32 to vector<128x1xf32>
    %15 = arith.divf %13, %14 : vector<128x1xf32>
    %16 = arith.mulf %11, %11 : vector<128x128xf32>
    %cst_12 = arith.constant dense<0.000000e+00> : vector<128xf32>
    %17 = vector.multi_reduction <add>, %16, %cst_12 [1] : vector<128x128xf32> to vector<128xf32>
    %18 = vector.shape_cast %17 : vector<128xf32> to vector<128x1xf32>
    %cst_13 = arith.constant 1.280000e+02 : f32
    %19 = vector.broadcast %cst_13 : f32 to vector<128x1xf32>
    %20 = arith.divf %18, %19 : vector<128x1xf32>
    %21 = arith.mulf %15, %15 : vector<128x1xf32>
    %22 = arith.subf %20, %21 : vector<128x1xf32>
    %cst_14 = arith.constant 9.99999974E-6 : f32
    %23 = vector.broadcast %cst_14 : f32 to vector<128x1xf32>
    %24 = arith.addf %22, %23 : vector<128x1xf32>
    %25 = math.rsqrt %24 : vector<128x1xf32>
    %26 = vector.broadcast %25 : vector<128x1xf32> to vector<128x128xf32>
    %27 = vector.broadcast %3 : vector<1x128xf32> to vector<128x128xf32>
    %28 = arith.mulf %26, %27 : vector<128x128xf32>
    %29 = vector.broadcast %15 : vector<128x1xf32> to vector<128x128xf32>
    %30 = arith.subf %11, %29 : vector<128x128xf32>
    %31 = arith.mulf %30, %28 : vector<128x128xf32>
    %32 = vector.broadcast %4 : vector<1x128xf32> to vector<128x128xf32>
    %33 = arith.addf %31, %32 : vector<128x128xf32>
    %34 = arith.truncf %33 : vector<128x128xf32> to vector<128x128xbf16>
    %c0_15 = arith.constant 0 : index
    %c0_16 = arith.constant 0 : index
    %35 = vector.load %arg5[%c0_15, %c0_16] : memref<128x512xbf16, #tpu.memory_space<vmem>>, vector<128x512xbf16>
    %cst_17 = arith.constant dense<0.000000e+00> : vector<128x512xf32>
    %36 = tpu.matmul %34, %35, %cst_17 {dimension_numbers = #tpu.dot_dimension_numbers<[1], [0], [0], [1], [0, 0, 1, 1], [], []>} : vector<128x128xbf16>, vector<128x512xbf16>, vector<128x512xf32> -> vector<128x512xf32>
    %c0_18 = arith.constant 0 : index
    %c0_19 = arith.constant 0 : index
    %37 = vector.load %arg6[%c0_18, %c0_19] : memref<1x512xf32, #tpu.memory_space<vmem>>, vector<1x512xf32>
    %38 = vector.broadcast %37 : vector<1x512xf32> to vector<128x512xf32>
    %39 = arith.addf %36, %38 : vector<128x512xf32>
    %cst_20 = arith.constant 5.000000e-01 : f32
    %40 = vector.broadcast %cst_20 : f32 to vector<128x512xf32>
    %41 = arith.mulf %40, %39 : vector<128x512xf32>
    %cst_21 = arith.constant 4.471500e-02 : f32
    %42 = vector.broadcast %cst_21 : f32 to vector<128x512xf32>
    %43 = arith.mulf %42, %39 : vector<128x512xf32>
    %44 = arith.mulf %43, %39 : vector<128x512xf32>
    %45 = arith.mulf %44, %39 : vector<128x512xf32>
    %46 = arith.addf %39, %45 : vector<128x512xf32>
    %cst_22 = arith.constant 0.797884583 : f32
    %47 = vector.broadcast %cst_22 : f32 to vector<128x512xf32>
    %48 = arith.mulf %47, %46 : vector<128x512xf32>
    %49 = math.tanh %48 : vector<128x512xf32>
    %cst_23 = arith.constant 1.000000e+00 : f32
    %50 = vector.broadcast %cst_23 : f32 to vector<128x512xf32>
    %51 = arith.addf %50, %49 : vector<128x512xf32>
    %52 = arith.mulf %41, %51 : vector<128x512xf32>
    %53 = arith.truncf %52 : vector<128x512xf32> to vector<128x512xbf16>
    %c0_24 = arith.constant 0 : index
    %c0_25 = arith.constant 0 : index
    %54 = vector.load %arg7[%c0_24, %c0_25] : memref<512x128xbf16, #tpu.memory_space<vmem>>, vector<512x128xbf16>
    %cst_26 = arith.constant dense<0.000000e+00> : vector<128x128xf32>
    %55 = tpu.matmul %53, %54, %cst_26 {dimension_numbers = #tpu.dot_dimension_numbers<[1], [0], [0], [1], [0, 0, 1, 1], [], []>} : vector<128x512xbf16>, vector<512x128xbf16>, vector<128x128xf32> -> vector<128x128xf32>
    %56 = vector.broadcast %5 : vector<1x128xf32> to vector<128x128xf32>
    %57 = arith.addf %55, %56 : vector<128x128xf32>
    %58 = arith.addf %11, %57 : vector<128x128xf32>
    %c0_27 = arith.constant 0 : index
    %c0_28 = arith.constant 0 : index
    %59 = vector.load %arg8[%c0_27, %c0_28] : memref<128x128xf32, #tpu.memory_space<vmem>>, vector<128x128xf32>
    tpu.vector_store %arg8[%c0_27, %c0_28], %58 {strides = array<i32>} : memref<128x128xf32, #tpu.memory_space<vmem>>, vector<128x128xf32>,
    return
  }
  func.func @transform_0(%arg0: i32) -> (i32, i32) {
    %c0_i32 = arith.constant 0 : i32
    %c0_i32_0 = arith.constant 0 : i32
    return %arg0, %c0_i32 : i32, i32
  }
  func.func @transform_1(%arg0: i32) -> (i32, i32) {
    %c0_i32 = arith.constant 0 : i32
    %c0_i32_0 = arith.constant 0 : i32
    return %arg0, %c0_i32 : i32, i32
  }
  func.func @transform_2(%arg0: i32) -> (i32, i32) {
    %c0_i32 = arith.constant 0 : i32
    %c0_i32_0 = arith.constant 0 : i32
    %c0_i32_1 = arith.constant 0 : i32
    return %c0_i32, %c0_i32_0 : i32, i32
  }
  func.func @transform_3(%arg0: i32) -> (i32, i32) {
    %c0_i32 = arith.constant 0 : i32
    %c0_i32_0 = arith.constant 0 : i32
    %c0_i32_1 = arith.constant 0 : i32
    return %c0_i32, %c0_i32_0 : i32, i32
  }
  func.func @transform_4(%arg0: i32) -> (i32, i32) {
    %c0_i32 = arith.constant 0 : i32
    %c0_i32_0 = arith.constant 0 : i32
    %c0_i32_1 = arith.constant 0 : i32
    return %c0_i32, %c0_i32_0 : i32, i32
  }
  func.func @transform_5(%arg0: i32) -> (i32, i32) {
    %c0_i32 = arith.constant 0 : i32
    %c0_i32_0 = arith.constant 0 : i32
    %c0_i32_1 = arith.constant 0 : i32
    return %c0_i32, %c0_i32_0 : i32, i32
  }
  func.func @transform_6(%arg0: i32) -> (i32, i32) {
    %c0_i32 = arith.constant 0 : i32
    %c0_i32_0 = arith.constant 0 : i32
    %c0_i32_1 = arith.constant 0 : i32
    return %c0_i32, %c0_i32_0 : i32, i32
  }
  func.func @transform_7(%arg0: i32) -> (i32, i32) {
    %c0_i32 = arith.constant 0 : i32
    %c0_i32_0 = arith.constant 0 : i32
    return %arg0, %c0_i32 : i32, i32
  }
}

</mosaic_0001>

<llo_original>
// kernel: tpu_custom_call.1
$region0: #{tpu_custom_call.1}
  #allocation0 [shape = 'u32[]', space=smem, size = 0x4, offset = 0x4, fixed_abs, tag = 'smem constant byte address 0x4 - core index']
  #allocation1 [shape = 'u32[144,128]{1,0:T(1,128)}', space=vmem, size = 0x12000, scoped, tag = 'internal scratch']
  %s0 = inlined_call_operand.hbm [shape: f32[256,128], index: 0, kind: input, shape index: {}]
  %s1 = inlined_call_operand.hbm [shape: f32[256,128], index: 1, kind: input, shape index: {}]
  %s2 = inlined_call_operand.hbm [shape: bf16[128,128], index: 2, kind: input, shape index: {}]
  %s3 = inlined_call_operand.vmem [shape: f32[4,128], index: 3, kind: input, shape index: {}]
  %s4 = inlined_call_operand.hbm [shape: bf16[128,512], index: 4, kind: input, shape index: {}]
  %s5 = inlined_call_operand.vmem [shape: f32[1,512], index: 5, kind: input, shape index: {}]
  %s6 = inlined_call_operand.hbm [shape: bf16[512,128], index: 6, kind: input, shape index: {}]
  %s7 = inlined_call_operand.hbm [shape: f32[256,128], index: 7, kind: output, shape index: {}]
  %s8 = sld [smem:[#allocation0]]
  $region81: #{tpu_custom_call.1} parent=0
    _
  %s10 = ssub.s32 1, %s8
  %s11 = scalar_select 0, %s10, %s8
  $region1: #{tpu_custom_call.1} parent=0
    #allocation2 [shape = 'u8[131072]{0}', space=vmem, size = 0x20000, scoped, tag = 'input window, operand 0']
    #allocation3 [shape = 's32[2]{0}', space=sflag, size = 0x8, scoped, tag = 'scoped memory for tpu_custom_call.1']
    #allocation4 [shape = 's32[2]{0}', space=sflag, size = 0x8, scoped, tag = 'scoped memory for tpu_custom_call.1']
    #allocation5 [shape = 'u8[131072]{0}', space=vmem, size = 0x20000, scoped, tag = 'input window, operand 1']
    #allocation6 [shape = 's32[2]{0}', space=sflag, size = 0x8, scoped, tag = 'scoped memory for tpu_custom_call.1']
    #allocation7 [shape = 'u8[32768]{0}', space=vmem, size = 0x8000, scoped, tag = 'input window, operand 2, single buffered']
    #allocation8 [shape = 'u8[131072]{0}', space=vmem, size = 0x20000, scoped, tag = 'input window, operand 4, single buffered']
    #allocation9 [shape = 's32[1]{0}', space=sflag, size = 0x4, scoped, tag = 'scoped memory for tpu_custom_call.1']
    #allocation10 [shape = 'u8[131072]{0}', space=vmem, size = 0x20000, scoped, tag = 'input window, operand 6, single buffered']
    #allocation11 [shape = 'u8[131072]{0}', space=vmem, size = 0x20000, scoped, tag = 'output window, operand 0']
    %12 = vsyncpa [#allocation3], 0
    %s13 = scalar_lea.sflag [#allocation3], 1
    %14 = vsyncpa %s13, 0
    %15 = vsyncpa [#allocation6], 0
    %s16 = scalar_lea.sflag [#allocation6], 1
    %17 = vsyncpa %s16, 0
    %18 = vsyncpa [#allocation9], 0
    %19 = vsyncpa [#allocation4], 0
    %s20 = scalar_lea.sflag [#allocation4], 1
    %21 = vsyncpa %s20, 0
    loop: start=0, step=1, limit=4
    $region2: #{tpu_custom_call.1} parent=1 // loop_pre_header
      _
    $region3: #{tpu_custom_call.1} parent=1 // loop_header
      %s23 = sphi 0, %s27
      %p24 = scmp.ge.s32.totalorder %s23, 4
      %s33 = sphi 0, %s35
      %s36 = sphi 0, %s33
      %s37 = sphi 0, %s36
      %s53 = sphi 0, %s37
      %s59 = sphi 0, %s61
      %s62 = sphi 0, %s59
      %s63 = sphi 0, %s62
      %s79 = sphi 0, %s63
      %s83 = sphi 0, %s83
      %s85 = sphi 0, %s83
      %s86 = sphi 0, %s85
      %s100 = sphi 0, %s86
      %s104 = sphi 0, %s104
      %s106 = sphi 0, %s104
      %s107 = sphi 0, %s106
      %s121 = sphi 0, %s107
      %s125 = sphi 0, %s125
      %s127 = sphi 0, %s125
      %s128 = sphi 0, %s127
      %s142 = sphi 0, %s128
      %s146 = sphi 0, %s146
      %s148 = sphi 0, %s146
      %s149 = sphi 0, %s148
      %s163 = sphi 0, %s149
      %s167 = sphi 0, %s167
      %s169 = sphi 0, %s167
      %s170 = sphi 0, %s169
      %s184 = sphi 0, %s170
      %s190 = sphi 0, %s192
      %s193 = sphi 0, %s190
      %s194 = sphi 0, %s193
      %s210 = sphi 0, %s194
    $region4: #{tpu_custom_call.1} parent=1 // loop_header_branch
      %26 = sbr.rel (%p24) target = $region8
    $region5: #{tpu_custom_call.1} parent=1 // loop_body
      %s28 = ssub.s32 %s23, 1
      %s29 = ssub.s32 %s23, 2
      %s30 = sadd.s32 %s23, 1
      %s31 = ssub.s32 %s23, %s30
      %p32 = scmp.eq.s32.totalorder %s31, 0
      %s34 = sadd.s32 %s33, 1
      %s35 = scalar_select %p32, %s33, %s34
      %p38 = pneg %p32
      %p39 = scmp.eq.s32.totalorder %s23, 1
      %p40 = por %p38, %p39
      %p41 = scmp.ne.s32.totalorder %s33, %s36
      %p42 = scmp.eq.s32.totalorder %s23, 0
      %p43 = por %p41, %p42
      %p44 = scmp.ne.s32.totalorder %s33, %s36
      %p45 = scmp.eq.s32.totalorder %s28, 1
      %p46 = por %p44, %p45
      %p47 = scmp.ne.s32.totalorder %s36, %s37
      %p48 = scmp.eq.s32.totalorder %s28, 0
      %p49 = por %p47, %p48
      %p50 = scmp.ne.s32.totalorder %s36, %s37
      %p51 = scmp.eq.s32.totalorder %s29, 1
      %p52 = por %p50, %p51
      %p54 = scmp.ne.s32.totalorder %s37, %s53
      %p55 = scmp.eq.s32.totalorder %s29, 0
      %p56 = por %p54, %p55
      %s57 = ssub.s32 %s23, %s30
      %p58 = scmp.eq.s32.totalorder %s57, 0
      %s60 = sadd.s32 %s59, 1
      %s61 = scalar_select %p58, %s59, %s60
      %p64 = pneg %p58
      %p65 = scmp.eq.s32.totalorder %s23, 1
      %p66 = por %p64, %p65
      %p67 = scmp.ne.s32.totalorder %s59, %s62
      %p68 = scmp.eq.s32.totalorder %s23, 0
      %p69 = por %p67, %p68
      %p70 = scmp.ne.s32.totalorder %s59, %s62
      %p71 = scmp.eq.s32.totalorder %s28, 1
      %p72 = por %p70, %p71
      %p73 = scmp.ne.s32.totalorder %s62, %s63
      %p74 = scmp.eq.s32.totalorder %s28, 0
      %p75 = por %p73, %p74
      %p76 = scmp.ne.s32.totalorder %s62, %s63
      %p77 = scmp.eq.s32.totalorder %s29, 1
      %p78 = por %p76, %p77
      %p80 = scmp.ne.s32.totalorder %s63, %s79
      %p81 = scmp.eq.s32.totalorder %s29, 0
      %p82 = por %p80, %p81
      %s84 = sadd.s32 %s83, 1
      %p87 = scmp.eq.s32.totalorder %s23, 1
      %p88 = scmp.ne.s32.totalorder %s83, %s85
      %p89 = scmp.eq.s32.totalorder %s23, 0
      %p90 = por %p88, %p89
      %p91 = scmp.ne.s32.totalorder %s83, %s85
      %p92 = scmp.eq.s32.totalorder %s28, 1
      %p93 = por %p91, %p92
      %p94 = scmp.ne.s32.totalorder %s85, %s86
      %p95 = scmp.eq.s32.totalorder %s28, 0
      %p96 = por %p94, %p95
      %p97 = scmp.ne.s32.totalorder %s85, %s86
      %p98 = scmp.eq.s32.totalorder %s29, 1
      %p99 = por %p97, %p98
      %p101 = scmp.ne.s32.totalorder %s86, %s100
      %p102 = scmp.eq.s32.totalorder %s29, 0
      %p103 = por %p101, %p102
      %s105 = sadd.s32 %s104, 1
      %p108 = scmp.eq.s32.totalorder %s23, 1
      %p109 = scmp.ne.s32.totalorder %s104, %s106
      %p110 = scmp.eq.s32.totalorder %s23, 0
      %p111 = por %p109, %p110
      %p112 = scmp.ne.s32.totalorder %s104, %s106
      %p113 = scmp.eq.s32.totalorder %s28, 1
      %p114 = por %p112, %p113
      %p115 = scmp.ne.s32.totalorder %s106, %s107
      %p116 = scmp.eq.s32.totalorder %s28, 0
      %p117 = por %p115, %p116
      %p118 = scmp.ne.s32.totalorder %s106, %s107
      %p119 = scmp.eq.s32.totalorder %s29, 1
      %p120 = por %p118, %p119
      %p122 = scmp.ne.s32.totalorder %s107, %s121
      %p123 = scmp.eq.s32.totalorder %s29, 0
      %p124 = por %p122, %p123
      %s126 = sadd.s32 %s125, 1
      %p129 = scmp.eq.s32.totalorder %s23, 1
      %p130 = scmp.ne.s32.totalorder %s125, %s127
      %p131 = scmp.eq.s32.totalorder %s23, 0
      %p132 = por %p130, %p131
      %p133 = scmp.ne.s32.totalorder %s125, %s127
      %p134 = scmp.eq.s32.totalorder %s28, 1
      %p135 = por %p133, %p134
      %p136 = scmp.ne.s32.totalorder %s127, %s128
      %p137 = scmp.eq.s32.totalorder %s28, 0
      %p138 = por %p136, %p137
      %p139 = scmp.ne.s32.totalorder %s127, %s128
      %p140 = scmp.eq.s32.totalorder %s29, 1
      %p141 = por %p139, %p140
      %p143 = scmp.ne.s32.totalorder %s128, %s142
      %p144 = scmp.eq.s32.totalorder %s29, 0
      %p145 = por %p143, %p144
      %s147 = sadd.s32 %s146, 1
      %p150 = scmp.eq.s32.totalorder %s23, 1
      %p151 = scmp.ne.s32.totalorder %s146, %s148
      %p152 = scmp.eq.s32.totalorder %s23, 0
      %p153 = por %p151, %p152
      %p154 = scmp.ne.s32.totalorder %s146, %s148
      %p155 = scmp.eq.s32.totalorder %s28, 1
      %p156 = por %p154, %p155
      %p157 = scmp.ne.s32.totalorder %s148, %s149
      %p158 = scmp.eq.s32.totalorder %s28, 0
      %p159 = por %p157, %p158
      %p160 = scmp.ne.s32.totalorder %s148, %s149
      %p161 = scmp.eq.s32.totalorder %s29, 1
      %p162 = por %p160, %p161
      %p164 = scmp.ne.s32.totalorder %s149, %s163
      %p165 = scmp.eq.s32.totalorder %s29, 0
      %p166 = por %p164, %p165
      %s168 = sadd.s32 %s167, 1
      %p171 = scmp.eq.s32.totalorder %s23, 1
      %p172 = scmp.ne.s32.totalorder %s167, %s169
      %p173 = scmp.eq.s32.totalorder %s23, 0
      %p174 = por %p172, %p173
      %p175 = scmp.ne.s32.totalorder %s167, %s169
      %p176 = scmp.eq.s32.totalorder %s28, 1
      %p177 = por %p175, %p176
      %p178 = scmp.ne.s32.totalorder %s169, %s170
      %p179 = scmp.eq.s32.totalorder %s28, 0
      %p180 = por %p178, %p179
      %p181 = scmp.ne.s32.totalorder %s169, %s170
      %p182 = scmp.eq.s32.totalorder %s29, 1
      %p183 = por %p181, %p182
      %p185 = scmp.ne.s32.totalorder %s170, %s184
      %p186 = scmp.eq.s32.totalorder %s29, 0
      %p187 = por %p185, %p186
      %s188 = ssub.s32 %s23, %s30
      %p189 = scmp.eq.s32.totalorder %s188, 0
      %s191 = sadd.s32 %s190, 1
      %s192 = scalar_select %p189, %s190, %s191
      %p195 = pneg %p189
      %p196 = scmp.eq.s32.totalorder %s23, 1
      %p197 = por %p195, %p196
      %p198 = scmp.ne.s32.totalorder %s190, %s193
      %p199 = scmp.eq.s32.totalorder %s23, 0
      %p200 = por %p198, %p199
      %p201 = scmp.ne.s32.totalorder %s190, %s193
      %p202 = scmp.eq.s32.totalorder %s28, 1
      %p203 = por %p201, %p202
      %p204 = scmp.ne.s32.totalorder %s193, %s194
      %p205 = scmp.eq.s32.totalorder %s28, 0
      %p206 = por %p204, %p205
      %p207 = scmp.ne.s32.totalorder %s193, %s194
      %p208 = scmp.eq.s32.totalorder %s29, 1
      %p209 = por %p207, %p208
      %p211 = scmp.ne.s32.totalorder %s194, %s210
      %p212 = scmp.eq.s32.totalorder %s29, 0
      %p213 = por %p211, %p212
      %p214 = scmp.le.s32.totalorder 1, %s23
      %p215 = scmp.lt.s32.totalorder %s23, 3
      %p216 = pnand %p214, %p215
      %p217 = pneg %p216
      // Predicated region
      $region9: #{tpu_custom_call.1} parent=5 // pred_check
        _
      $region10: #{tpu_custom_call.1} parent=5 // pred_check_branch
        %219 = sbr.rel (%p216) target = $region12
      $region11: #{tpu_custom_call.1} parent=5 // pred_region
        %s220 = ssub.s32 %s23, 1
        // Predicated region
        $region13: #{tpu_custom_call.1} parent=11 // pred_check
          %p221 = pneg %p96
        $region14: #{tpu_custom_call.1} parent=11 // pred_check_branch
          %223 = sbr.rel (%p221) target = $region16
        $region15: #{tpu_custom_call.1} parent=11 // pred_region
          %s225 = ssub.s32 1024, 1024
          %226 = vsyncadd [#allocation6], %s225
          %s227 = sshll.u32 [#allocation7], 4
          %s228 = int_to_ptr.vmem [resolvable:$true] %s227
          %233 = dma.hbm_to_vmem [thread:$0]  %s2, 1024, %s228, [#allocation6], 64, 64, 4
        $region16: #{tpu_custom_call.1} parent=11 // pred_fallthru
          _
        // Predicated region
        $region17: #{tpu_custom_call.1} parent=11 // pred_check
          %p234 = pneg %p117
        $region18: #{tpu_custom_call.1} parent=11 // pred_check_branch
          %236 = sbr.rel (%p234) target = $region20
        $region19: #{tpu_custom_call.1} parent=11 // pred_region
          _
        $region20: #{tpu_custom_call.1} parent=11 // pred_fallthru
          _
        // Predicated region
        $region21: #{tpu_custom_call.1} parent=11 // pred_check
          %p237 = pneg %p138
        $region22: #{tpu_custom_call.1} parent=11 // pred_check_branch
          %239 = sbr.rel (%p237) target = $region24
        $region23: #{tpu_custom_call.1} parent=11 // pred_region
          %s241 = ssub.s32 4096, 4096
          %242 = vsyncadd [#allocation9], %s241
          %s243 = sshll.u32 [#allocation8], 4
          %s244 = int_to_ptr.vmem [resolvable:$true] %s243
          %249 = dma.hbm_to_vmem [thread:$0]  %s4, 4096, %s244, [#allocation9], 256, 256, 16
        $region24: #{tpu_custom_call.1} parent=11 // pred_fallthru
          _
        // Predicated region
        $region25: #{tpu_custom_call.1} parent=11 // pred_check
          %p250 = pneg %p159
        $region26: #{tpu_custom_call.1} parent=11 // pred_check_branch
          %252 = sbr.rel (%p250) target = $region28
        $region27: #{tpu_custom_call.1} parent=11 // pred_region
          _
        $region28: #{tpu_custom_call.1} parent=11 // pred_fallthru
          _
        // Predicated region
        $region29: #{tpu_custom_call.1} parent=11 // pred_check
          %p253 = pneg %p180
        $region30: #{tpu_custom_call.1} parent=11 // pred_check_branch
          %255 = sbr.rel (%p253) target = $region32
        $region31: #{tpu_custom_call.1} parent=11 // pred_region
          %s257 = ssub.s32 4096, 4096
          %258 = vsyncadd [#allocation9], %s257
          %s259 = sshll.u32 [#allocation10], 4
          %s260 = int_to_ptr.vmem [resolvable:$true] %s259
          %265 = dma.hbm_to_vmem [thread:$0]  %s6, 4096, %s260, [#allocation9], 64, 64, 4
        $region32: #{tpu_custom_call.1} parent=11 // pred_fallthru
          _
      $region12: #{tpu_custom_call.1} parent=5 // pred_fallthru
        _
      %p266 = scmp.lt.s32.totalorder %s23, 2
      // Predicated region
      $region33: #{tpu_custom_call.1} parent=5 // pred_check
        %p267 = pneg %p266
      $region34: #{tpu_custom_call.1} parent=5 // pred_check_branch
        %269 = sbr.rel (%p267) target = $region36
      $region35: #{tpu_custom_call.1} parent=5 // pred_region
        // Predicated region
        $region37: #{tpu_custom_call.1} parent=35 // pred_check
          %p270 = pneg %p43
        $region38: #{tpu_custom_call.1} parent=35 // pred_check_branch
          %272 = sbr.rel (%p270) target = $region40
        $region39: #{tpu_custom_call.1} parent=35 // pred_region
          %s273 = sand.u32 %s33, 1
          %s274 = scalar_lea.sflag [#allocation3], %s273
          %s275 = sand.u32 %s33, 1
          %s276 = smul.addr %s275, 128
          %s277 = scalar_lea.vmem [#allocation2], %s276
          %s278 = smul.u32 16, %s23
          %s280 = ssub.s32 2048, 2048
          %281 = vsyncadd %s274, %s280
          %s282 = smul.addr %s278, 128
          %s283 = scalar_lea.hbm %s0, %s282
          %s284 = sshll.u32 %s277, 4
          %s285 = int_to_ptr.vmem [resolvable:$true] %s284
          %290 = dma.hbm_to_vmem [thread:$0]  %s283, 2048, %s285, %s274, 128, 128, 8
        $region40: #{tpu_custom_call.1} parent=35 // pred_fallthru
          _
        // Predicated region
        $region41: #{tpu_custom_call.1} parent=35 // pred_check
          %p291 = pneg %p69
        $region42: #{tpu_custom_call.1} parent=35 // pred_check_branch
          %293 = sbr.rel (%p291) target = $region44
        $region43: #{tpu_custom_call.1} parent=35 // pred_region
          %s294 = sand.u32 %s23, 1
          %s295 = scalar_lea.sflag [#allocation6], %s294
          %s296 = sand.u32 %s59, 1
          %s297 = smul.addr %s296, 128
          %s298 = scalar_lea.vmem [#allocation5], %s297
          %s299 = smul.u32 16, %s23
          %s301 = ssub.s32 2048, 2048
          %302 = vsyncadd %s295, %s301
          %s303 = smul.addr %s299, 128
          %s304 = scalar_lea.hbm %s1, %s303
          %s305 = sshll.u32 %s298, 4
          %s306 = int_to_ptr.vmem [resolvable:$true] %s305
          %311 = dma.hbm_to_vmem [thread:$0]  %s304, 2048, %s306, %s295, 128, 128, 8
        $region44: #{tpu_custom_call.1} parent=35 // pred_fallthru
          _
      $region36: #{tpu_custom_call.1} parent=5 // pred_fallthru
        _
      %p312 = scmp.le.s32.totalorder 1, %s23
      %p313 = scmp.lt.s32.totalorder %s23, 3
      %p314 = pnand %p312, %p313
      %p315 = pneg %p314
      // Predicated region
      $region45: #{tpu_custom_call.1} parent=5 // pred_check
        _
      $region46: #{tpu_custom_call.1} parent=5 // pred_check_branch
        %317 = sbr.rel (%p314) target = $region48
      $region47: #{tpu_custom_call.1} parent=5 // pred_region
        %s318 = ssub.s32 %s23, 1
        %s319 = sand.u32 %s36, 1
        %s320 = scalar_lea.sflag [#allocation3], %s319
        %s321 = sand.u32 %s36, 1
        %s322 = smul.addr %s321, 128
        %s323 = scalar_lea.vmem [#allocation2], %s322
        // Predicated region
        $region49: #{tpu_custom_call.1} parent=47 // pred_check
          %p324 = pneg %p49
        $region50: #{tpu_custom_call.1} parent=47 // pred_check_branch
          %326 = sbr.rel (%p324) target = $region52
        $region51: #{tpu_custom_call.1} parent=47 // pred_region
          %327 = dma.done %s320, 2048
        $region52: #{tpu_custom_call.1} parent=47 // pred_fallthru
          _
        %s328 = sand.u32 %s28, 1
        %s329 = scalar_lea.sflag [#allocation6], %s328
        %s330 = sand.u32 %s62, 1
        %s331 = smul.addr %s330, 128
        %s332 = scalar_lea.vmem [#allocation5], %s331
        // Predicated region
        $region53: #{tpu_custom_call.1} parent=47 // pred_check
          %p333 = pneg %p75
        $region54: #{tpu_custom_call.1} parent=47 // pred_check_branch
          %335 = sbr.rel (%p333) target = $region56
        $region55: #{tpu_custom_call.1} parent=47 // pred_region
          %336 = dma.done %s329, 2048
        $region56: #{tpu_custom_call.1} parent=47 // pred_fallthru
          _
        // Predicated region
        $region57: #{tpu_custom_call.1} parent=47 // pred_check
          %p337 = pneg %p96
        $region58: #{tpu_custom_call.1} parent=47 // pred_check_branch
          %339 = sbr.rel (%p337) target = $region60
        $region59: #{tpu_custom_call.1} parent=47 // pred_region
          %340 = dma.done [#allocation6], 1024
        $region60: #{tpu_custom_call.1} parent=47 // pred_fallthru
          _
        // Predicated region
        $region61: #{tpu_custom_call.1} parent=47 // pred_check
          %p341 = pneg %p138
        $region62: #{tpu_custom_call.1} parent=47 // pred_check_branch
          %343 = sbr.rel (%p341) target = $region64
        $region63: #{tpu_custom_call.1} parent=47 // pred_region
          %344 = dma.done [#allocation9], 4096
        $region64: #{tpu_custom_call.1} parent=47 // pred_fallthru
          _
        // Predicated region
        $region65: #{tpu_custom_call.1} parent=47 // pred_check
          %p345 = pneg %p180
        $region66: #{tpu_custom_call.1} parent=47 // pred_check_branch
          %347 = sbr.rel (%p345) target = $region68
        $region67: #{tpu_custom_call.1} parent=47 // pred_region
          %348 = dma.done [#allocation9], 4096
        $region68: #{tpu_custom_call.1} parent=47 // pred_fallthru
          _
        %s349 = sand.u32 %s36, 1
        %s350 = scalar_lea.sflag [#allocation3], %s349
        %s351 = sand.u32 %s36, 1
        %s352 = smul.addr %s351, 128
        %s353 = scalar_lea.vmem [#allocation2], %s352
        %p354 = pneg %p49
        %p355 = pneg %p46
        %s356 = sand.u32 %s28, 1
        %s357 = scalar_lea.sflag [#allocation6], %s356
        %s358 = sand.u32 %s62, 1
        %s359 = smul.addr %s358, 128
        %s360 = scalar_lea.vmem [#allocation5], %s359
        %p361 = pneg %p75
        %p362 = pneg %p72
        %p363 = pneg %p96
        %p364 = pneg %p93
        %p365 = pneg %p117
        %p366 = pneg %p114
        %p367 = pneg %p138
        %p368 = pneg %p135
        %p369 = pneg %p159
        %p370 = pneg %p156
        %p371 = pneg %p180
        %p372 = pneg %p177
        %p373 = pneg %p206
        %p374 = pneg %p203
        %s375 = sand.u32 %s193, 1
        %s376 = scalar_lea.sflag [#allocation4], %s375
        %s377 = sand.u32 %s193, 1
        %s378 = smul.addr %s377, 128
        %s379 = scalar_lea.vmem [#allocation11], %s378
        %s380 = smul.u32 16, %s28
        %s381 = smul.u32 16, %s28
        %s382 = smul.u32 16, %s28
        %v384 = vld [vmem:[%s323] sm:$0xff]
        %v385 = vld [vmem:[%s323 + $0x8] sm:$0xff]
        %v386 = vld [vmem:[%s323 + $0x10] sm:$0xff]
        %v387 = vld [vmem:[%s323 + $0x18] sm:$0xff]
        %v388 = vld [vmem:[%s323 + $0x20] sm:$0xff]
        %v389 = vld [vmem:[%s323 + $0x28] sm:$0xff]
        %v390 = vld [vmem:[%s323 + $0x30] sm:$0xff]
        %v391 = vld [vmem:[%s323 + $0x38] sm:$0xff]
        %v392 = vld [vmem:[%s323 + $0x40] sm:$0xff]
        %v393 = vld [vmem:[%s323 + $0x48] sm:$0xff]
        %v394 = vld [vmem:[%s323 + $0x50] sm:$0xff]
        %v395 = vld [vmem:[%s323 + $0x58] sm:$0xff]
        %v396 = vld [vmem:[%s323 + $0x60] sm:$0xff]
        %v397 = vld [vmem:[%s323 + $0x68] sm:$0xff]
        %v398 = vld [vmem:[%s323 + $0x70] sm:$0xff]
        %v399 = vld [vmem:[%s323 + $0x78] sm:$0xff]
        %v400 = vld [vmem:[%s332] sm:$0xff]
        %v401 = vld [vmem:[%s332 + $0x8] sm:$0xff]
        %v402 = vld [vmem:[%s332 + $0x10] sm:$0xff]
        %v403 = vld [vmem:[%s332 + $0x18] sm:$0xff]
        %v404 = vld [vmem:[%s332 + $0x20] sm:$0xff]
        %v405 = vld [vmem:[%s332 + $0x28] sm:$0xff]
        %v406 = vld [vmem:[%s332 + $0x30] sm:$0xff]
        %v407 = vld [vmem:[%s332 + $0x38] sm:$0xff]
        %v408 = vld [vmem:[%s332 + $0x40] sm:$0xff]
        %v409 = vld [vmem:[%s332 + $0x48] sm:$0xff]
        %v410 = vld [vmem:[%s332 + $0x50] sm:$0xff]
        %v411 = vld [vmem:[%s332 + $0x58] sm:$0xff]
        %v412 = vld [vmem:[%s332 + $0x60] sm:$0xff]
        %v413 = vld [vmem:[%s332 + $0x68] sm:$0xff]
        %v414 = vld [vmem:[%s332 + $0x70] sm:$0xff]
        %v415 = vld [vmem:[%s332 + $0x78] sm:$0xff]
        %v416 = vld [vmem:[%s3] sm:$0x1]
        %v417 = vld [vmem:[%s3 + $0x1] sm:$0x1]
        %v418 = vld [vmem:[%s3 + $0x2] sm:$0x1]
        %v419 = vld [vmem:[%s3 + $0x3] sm:$0x1]
        %v420 = vpack.c.bf16 %v401, %v400
        %v421 = vpack.c.bf16 %v403, %v402
        %v422 = vpack.c.bf16 %v405, %v404
        %v423 = vpack.c.bf16 %v407, %v406
        %v424 = vpack.c.bf16 %v409, %v408
        %v425 = vpack.c.bf16 %v411, %v410
        %v426 = vpack.c.bf16 %v413, %v412
        %v427 = vpack.c.bf16 %v415, %v414
        %v428 = vld [vmem:[#allocation7] sm:$0xf]
        %v429 = vld [vmem:[#allocation7 + $0x4] sm:$0xf]
        %v430 = vld [vmem:[#allocation7 + $0x8] sm:$0xf]
        %v431 = vld [vmem:[#allocation7 + $0xc] sm:$0xf]
        %v432 = vld [vmem:[#allocation7 + $0x10] sm:$0xf]
        %v433 = vld [vmem:[#allocation7 + $0x14] sm:$0xf]
        %v434 = vld [vmem:[#allocation7 + $0x18] sm:$0xf]
        %v435 = vld [vmem:[#allocation7 + $0x1c] sm:$0xf]
        %v436 = vld [vmem:[#allocation7 + $0x20] sm:$0xf]
        %v437 = vld [vmem:[#allocation7 + $0x24] sm:$0xf]
        %v438 = vld [vmem:[#allocation7 + $0x28] sm:$0xf]
        %v439 = vld [vmem:[#allocation7 + $0x2c] sm:$0xf]
        %v440 = vld [vmem:[#allocation7 + $0x30] sm:$0xf]
        %v441 = vld [vmem:[#allocation7 + $0x34] sm:$0xf]
        %v442 = vld [vmem:[#allocation7 + $0x38] sm:$0xf]
        %v443 = vld [vmem:[#allocation7 + $0x3c] sm:$0xf]
        %v460 = vunpack.c.l.b16 %v428
        %v461 = vunpack.c.l.b16 %v429
        %v462 = vunpack.c.l.b16 %v430
        %v463 = vunpack.c.l.b16 %v431
        %v464 = vunpack.c.l.b16 %v432
        %v465 = vunpack.c.l.b16 %v433
        %v466 = vunpack.c.l.b16 %v434
        %v467 = vunpack.c.l.b16 %v435
        %v468 = vunpack.c.l.b16 %v436
        %v469 = vunpack.c.l.b16 %v437
        %v470 = vunpack.c.l.b16 %v438
        %v471 = vunpack.c.l.b16 %v439
        %v472 = vunpack.c.l.b16 %v440
        %v473 = vunpack.c.l.b16 %v441
        %v474 = vunpack.c.l.b16 %v442
        %v475 = vunpack.c.l.b16 %v443
        %v476 = vpack.c.b16 %v461, %v460
        %v477 = vpack.c.b16 %v463, %v462
        %v478 = vpack.c.b16 %v465, %v464
        %v479 = vpack.c.b16 %v467, %v466
        %v480 = vpack.c.b16 %v469, %v468
        %v481 = vpack.c.b16 %v471, %v470
        %v482 = vpack.c.b16 %v473, %v472
        %v483 = vpack.c.b16 %v475, %v474
        %492 = vmatprep.subr.bf16.mxu0 0
        %493 = vmatpush1.bf16.msra.mxu0 %v483
        %494 = vmatprep.subr.bf16.mxu0 0
        %495 = vmatpush1.bf16.msra.mxu0 %v482
        %496 = vmatprep.subr.bf16.mxu0 0
        %497 = vmatpush1.bf16.msra.mxu0 %v481
        %498 = vmatprep.subr.bf16.mxu0 0
        %499 = vmatpush1.bf16.msra.mxu0 %v480
        %500 = vmatprep.subr.bf16.mxu0 0
        %501 = vmatpush1.bf16.msra.mxu0 %v479
        %502 = vmatprep.subr.bf16.mxu0 0
        %503 = vmatpush1.bf16.msra.mxu0 %v478
        %504 = vmatprep.subr.bf16.mxu0 0
        %505 = vmatpush1.bf16.msra.mxu0 %v477
        %506 = vmatprep.subr.bf16.mxu0 0
        %507 = vmatpush1.bf16.msra.mxu0 %v476
        %508 = vmatprep.subr.bf16.mxu0 0
        %509 = vmatpush2.bf16.msra.mxu0 0
        %510 = vmatprep.subr.bf16.mxu0 0
        %511 = vmatpush2.bf16.msra.mxu0 0
        %512 = vmatprep.subr.bf16.mxu0 0
        %513 = vmatpush2.bf16.msra.mxu0 0
        %514 = vmatprep.subr.bf16.mxu0 0
        %515 = vmatpush2.bf16.msra.mxu0 0
        %516 = vmatprep.subr.bf16.mxu0 0
        %517 = vmatpush2.bf16.msra.mxu0 0
        %518 = vmatprep.subr.bf16.mxu0 0
        %519 = vmatpush2.bf16.msra.mxu0 0
        %520 = vmatprep.subr.bf16.mxu0 0
        %521 = vmatpush2.bf16.msra.mxu0 0
        %522 = vmatprep.subr.bf16.mxu0 0
        %523 = vmatpush2.bf16.msra.mxu0 0
        %524 = vmatprep.mubr.bf16.mxu0 0
        %525 = vmatmul.mubr.bf16.gmra.mxu0 %v420
        %v526 = vpop.f32.mrf.mxu0
        %v527 = vadd.f32 0.0, %v526
        %v528 = vpop.f32.mrf.mxu0
        %v529 = vpop.f32.mrf.mxu0
        %v530 = vadd.f32 0.0, %v529
        %v531 = vpop.f32.mrf.mxu0
        %532 = vmatprep.mubr.bf16.mxu0 0
        %533 = vmatmul.mubr.bf16.gmra.mxu0 %v421
        %v534 = vpop.f32.mrf.mxu0
        %v535 = vadd.f32 0.0, %v534
        %v536 = vpop.f32.mrf.mxu0
        %v537 = vpop.f32.mrf.mxu0
        %v538 = vadd.f32 0.0, %v537
        %v539 = vpop.f32.mrf.mxu0
        %540 = vmatprep.mubr.bf16.mxu0 0
        %541 = vmatmul.mubr.bf16.gmra.mxu0 %v422
        %v542 = vpop.f32.mrf.mxu0
        %v543 = vadd.f32 0.0, %v542
        %v544 = vpop.f32.mrf.mxu0
        %v545 = vpop.f32.mrf.mxu0
        %v546 = vadd.f32 0.0, %v545
        %v547 = vpop.f32.mrf.mxu0
        %548 = vmatprep.mubr.bf16.mxu0 0
        %549 = vmatmul.mubr.bf16.gmra.mxu0 %v423
        %v550 = vpop.f32.mrf.mxu0
        %v551 = vadd.f32 0.0, %v550
        %v552 = vpop.f32.mrf.mxu0
        %v553 = vpop.f32.mrf.mxu0
        %v554 = vadd.f32 0.0, %v553
        %v555 = vpop.f32.mrf.mxu0
        %556 = vmatprep.mubr.bf16.mxu0 0
        %557 = vmatmul.mubr.bf16.gmra.mxu0 %v424
        %v558 = vpop.f32.mrf.mxu0
        %v559 = vadd.f32 0.0, %v558
        %v560 = vpop.f32.mrf.mxu0
        %v561 = vpop.f32.mrf.mxu0
        %v562 = vadd.f32 0.0, %v561
        %v563 = vpop.f32.mrf.mxu0
        %564 = vmatprep.mubr.bf16.mxu0 0
        %565 = vmatmul.mubr.bf16.gmra.mxu0 %v425
        %v566 = vpop.f32.mrf.mxu0
        %v567 = vadd.f32 0.0, %v566
        %v568 = vpop.f32.mrf.mxu0
        %v569 = vpop.f32.mrf.mxu0
        %v570 = vadd.f32 0.0, %v569
        %v571 = vpop.f32.mrf.mxu0
        %572 = vmatprep.mubr.bf16.mxu0 0
        %573 = vmatmul.mubr.bf16.gmra.mxu0 %v426
        %v574 = vpop.f32.mrf.mxu0
        %v575 = vadd.f32 0.0, %v574
        %v576 = vpop.f32.mrf.mxu0
        %v577 = vpop.f32.mrf.mxu0
        %v578 = vadd.f32 0.0, %v577
        %v579 = vpop.f32.mrf.mxu0
        %580 = vmatprep.mubr.bf16.mxu0 0
        %581 = vmatmul.mubr.bf16.gmra.mxu0 %v427
        %v582 = vpop.f32.mrf.mxu0
        %v583 = vadd.f32 0.0, %v582
        %v584 = vpop.f32.mrf.mxu0
        %v585 = vpop.f32.mrf.mxu0
        %v586 = vadd.f32 0.0, %v585
        %v587 = vpop.f32.mrf.mxu0
        %588 = vdwg.mxu0
        %v589 = vadd.f32 %v384, %v527
        %v590 = vadd.f32 %v385, %v530
        %v591 = vadd.f32 %v386, %v535
        %v592 = vadd.f32 %v387, %v538
        %v593 = vadd.f32 %v388, %v543
        %v594 = vadd.f32 %v389, %v546
        %v595 = vadd.f32 %v390, %v551
        %v596 = vadd.f32 %v391, %v554
        %v597 = vadd.f32 %v392, %v559
        %v598 = vadd.f32 %v393, %v562
        %v599 = vadd.f32 %v394, %v567
        %v600 = vadd.f32 %v395, %v570
        %v601 = vadd.f32 %v396, %v575
        %v602 = vadd.f32 %v397, %v578
        %v603 = vadd.f32 %v398, %v583
        %v604 = vadd.f32 %v399, %v586
        %v605 = vlaneseq
        %v606 = vshrl.u32 %v605, 7
        %v607 = vsub.s32 0, %v606
        %v608 = vrot.slane %v416, %v607
        %v609 = vadd.f32 %v589, %v608
        %v610 = vadd.f32 %v590, %v608
        %v611 = vadd.f32 %v591, %v608
        %v612 = vadd.f32 %v592, %v608
        %v613 = vadd.f32 %v593, %v608
        %v614 = vadd.f32 %v594, %v608
        %v615 = vadd.f32 %v595, %v608
        %v616 = vadd.f32 %v596, %v608
        %v617 = vadd.f32 %v597, %v608
        %v618 = vadd.f32 %v598, %v608
        %v619 = vadd.f32 %v599, %v608
        %v620 = vadd.f32 %v600, %v608
        %v621 = vadd.f32 %v601, %v608
        %v622 = vadd.f32 %v602, %v608
        %v623 = vadd.f32 %v603, %v608
        %v624 = vadd.f32 %v604, %v608
        %625 = vadd.xlane.f32.xlu0 %v609
        %v626 = vpop.xlane.xlu0 %625
        %627 = vadd.xlane.f32.xlu0 %v610
        %v628 = vpop.xlane.xlu0 %627
        %629 = vadd.xlane.f32.xlu0 %v611
        %v630 = vpop.xlane.xlu0 %629
        %631 = vadd.xlane.f32.xlu0 %v612
        %v632 = vpop.xlane.xlu0 %631
        %633 = vadd.xlane.f32.xlu0 %v613
        %v634 = vpop.xlane.xlu0 %633
        %635 = vadd.xlane.f32.xlu0 %v614
        %v636 = vpop.xlane.xlu0 %635
        %637 = vadd.xlane.f32.xlu0 %v615
        %v638 = vpop.xlane.xlu0 %637
        %639 = vadd.xlane.f32.xlu0 %v616
        %v640 = vpop.xlane.xlu0 %639
        %641 = vadd.xlane.f32.xlu0 %v617
        %v642 = vpop.xlane.xlu0 %641
        %643 = vadd.xlane.f32.xlu0 %v618
        %v644 = vpop.xlane.xlu0 %643
        %645 = vadd.xlane.f32.xlu0 %v619
        %v646 = vpop.xlane.xlu0 %645
        %647 = vadd.xlane.f32.xlu0 %v620
        %v648 = vpop.xlane.xlu0 %647
        %649 = vadd.xlane.f32.xlu0 %v621
        %v650 = vpop.xlane.xlu0 %649
        %651 = vadd.xlane.f32.xlu0 %v622
        %v652 = vpop.xlane.xlu0 %651
        %653 = vadd.xlane.f32.xlu0 %v623
        %v654 = vpop.xlane.xlu0 %653
        %655 = vadd.xlane.f32.xlu0 %v624
        %v656 = vpop.xlane.xlu0 %655
        %v657 = vrcp.pop 128.0
        %v658 = vmul.f32 %v626, %v657
        %v659 = vmul.f32 %v628, %v657
        %v660 = vmul.f32 %v630, %v657
        %v661 = vmul.f32 %v632, %v657
        %v662 = vmul.f32 %v634, %v657
        %v663 = vmul.f32 %v636, %v657
        %v664 = vmul.f32 %v638, %v657
        %v665 = vmul.f32 %v640, %v657
        %v666 = vmul.f32 %v642, %v657
        %v667 = vmul.f32 %v644, %v657
        %v668 = vmul.f32 %v646, %v657
        %v669 = vmul.f32 %v648, %v657
        %v670 = vmul.f32 %v650, %v657
        %v671 = vmul.f32 %v652, %v657
        %v672 = vmul.f32 %v654, %v657
        %v673 = vmul.f32 %v656, %v657
        %v674 = vmul.f32 %v609, %v609
        %v675 = vmul.f32 %v610, %v610
        %v676 = vmul.f32 %v611, %v611
        %v677 = vmul.f32 %v612, %v612
        %v678 = vmul.f32 %v613, %v613
        %v679 = vmul.f32 %v614, %v614
        %v680 = vmul.f32 %v615, %v615
        %v681 = vmul.f32 %v616, %v616
        %v682 = vmul.f32 %v617, %v617
        %v683 = vmul.f32 %v618, %v618
        %v684 = vmul.f32 %v619, %v619
        %v685 = vmul.f32 %v620, %v620
        %v686 = vmul.f32 %v621, %v621
        %v687 = vmul.f32 %v622, %v622
        %v688 = vmul.f32 %v623, %v623
        %v689 = vmul.f32 %v624, %v624
        %690 = vadd.xlane.f32.xlu0 %v674
        %v691 = vpop.xlane.xlu0 %690
        %692 = vadd.xlane.f32.xlu0 %v675
        %v693 = vpop.xlane.xlu0 %692
        %694 = vadd.xlane.f32.xlu0 %v676
        %v695 = vpop.xlane.xlu0 %694
        %696 = vadd.xlane.f32.xlu0 %v677
        %v697 = vpop.xlane.xlu0 %696
        %698 = vadd.xlane.f32.xlu0 %v678
        %v699 = vpop.xlane.xlu0 %698
        %700 = vadd.xlane.f32.xlu0 %v679
        %v701 = vpop.xlane.xlu0 %700
        %702 = vadd.xlane.f32.xlu0 %v680
        %v703 = vpop.xlane.xlu0 %702
        %704 = vadd.xlane.f32.xlu0 %v681
        %v705 = vpop.xlane.xlu0 %704
        %706 = vadd.xlane.f32.xlu0 %v682
        %v707 = vpop.xlane.xlu0 %706
        %708 = vadd.xlane.f32.xlu0 %v683
        %v709 = vpop.xlane.xlu0 %708
        %710 = vadd.xlane.f32.xlu0 %v684
        %v711 = vpop.xlane.xlu0 %710
        %712 = vadd.xlane.f32.xlu0 %v685
        %v713 = vpop.xlane.xlu0 %712
        %714 = vadd.xlane.f32.xlu0 %v686
        %v715 = vpop.xlane.xlu0 %714
        %716 = vadd.xlane.f32.xlu0 %v687
        %v717 = vpop.xlane.xlu0 %716
        %718 = vadd.xlane.f32.xlu0 %v688
        %v719 = vpop.xlane.xlu0 %718
        %720 = vadd.xlane.f32.xlu0 %v689
        %v721 = vpop.xlane.xlu0 %720
        %v722 = vmul.f32 %v691, %v657
        %v723 = vmul.f32 %v693, %v657
        %v724 = vmul.f32 %v695, %v657
        %v725 = vmul.f32 %v697, %v657
        %v726 = vmul.f32 %v699, %v657
        %v727 = vmul.f32 %v701, %v657
        %v728 = vmul.f32 %v703, %v657
        %v729 = vmul.f32 %v705, %v657
        %v730 = vmul.f32 %v707, %v657
        %v731 = vmul.f32 %v709, %v657
        %v732 = vmul.f32 %v711, %v657
        %v733 = vmul.f32 %v713, %v657
        %v734 = vmul.f32 %v715, %v657
        %v735 = vmul.f32 %v717, %v657
        %v736 = vmul.f32 %v719, %v657
        %v737 = vmul.f32 %v721, %v657
        %v738 = vmul.f32 %v658, %v658
        %v739 = vmul.f32 %v659, %v659
        %v740 = vmul.f32 %v660, %v660
        %v741 = vmul.f32 %v661, %v661
        %v742 = vmul.f32 %v662, %v662
        %v743 = vmul.f32 %v663, %v663
        %v744 = vmul.f32 %v664, %v664
        %v745 = vmul.f32 %v665, %v665
        %v746 = vmul.f32 %v666, %v666
        %v747 = vmul.f32 %v667, %v667
        %v748 = vmul.f32 %v668, %v668
        %v749 = vmul.f32 %v669, %v669
        %v750 = vmul.f32 %v670, %v670
        %v751 = vmul.f32 %v671, %v671
        %v752 = vmul.f32 %v672, %v672
        %v753 = vmul.f32 %v673, %v673
        %v754 = vsub.f32 %v722, %v738
        %v755 = vsub.f32 %v723, %v739
        %v756 = vsub.f32 %v724, %v740
        %v757 = vsub.f32 %v725, %v741
        %v758 = vsub.f32 %v726, %v742
        %v759 = vsub.f32 %v727, %v743
        %v760 = vsub.f32 %v728, %v744
        %v761 = vsub.f32 %v729, %v745
        %v762 = vsub.f32 %v730, %v746
        %v763 = vsub.f32 %v731, %v747
        %v764 = vsub.f32 %v732, %v748
        %v765 = vsub.f32 %v733, %v749
        %v766 = vsub.f32 %v734, %v750
        %v767 = vsub.f32 %v735, %v751
        %v768 = vsub.f32 %v736, %v752
        %v769 = vsub.f32 %v737, %v753
        %v770 = vadd.f32 %v754, 1e-05
        %v771 = vadd.f32 %v755, 1e-05
        %v772 = vadd.f32 %v756, 1e-05
        %v773 = vadd.f32 %v757, 1e-05
        %v774 = vadd.f32 %v758, 1e-05
        %v775 = vadd.f32 %v759, 1e-05
        %v776 = vadd.f32 %v760, 1e-05
        %v777 = vadd.f32 %v761, 1e-05
        %v778 = vadd.f32 %v762, 1e-05
        %v779 = vadd.f32 %v763, 1e-05
        %v780 = vadd.f32 %v764, 1e-05
        %v781 = vadd.f32 %v765, 1e-05
        %v782 = vadd.f32 %v766, 1e-05
        %v783 = vadd.f32 %v767, 1e-05
        %v784 = vadd.f32 %v768, 1e-05
        %v785 = vadd.f32 %v769, 1e-05
        %v786 = vrsqrt.pop %v770
        %v787 = vrsqrt.pop %v771
        %v788 = vrsqrt.pop %v772
        %v789 = vrsqrt.pop %v773
        %v790 = vrsqrt.pop %v774
        %v791 = vrsqrt.pop %v775
        %v792 = vrsqrt.pop %v776
        %v793 = vrsqrt.pop %v777
        %v794 = vrsqrt.pop %v778
        %v795 = vrsqrt.pop %v779
        %v796 = vrsqrt.pop %v780
        %v797 = vrsqrt.pop %v781
        %v798 = vrsqrt.pop %v782
        %v799 = vrsqrt.pop %v783
        %v800 = vrsqrt.pop %v784
        %v801 = vrsqrt.pop %v785
        %v802 = vlaneseq
        %v803 = vshrl.u32 %v802, 7
        %v804 = vsub.s32 0, %v803
        %v805 = vrot.slane %v417, %v804
        %v806 = vmul.f32 %v786, %v805
        %v807 = vmul.f32 %v787, %v805
        %v808 = vmul.f32 %v788, %v805
        %v809 = vmul.f32 %v789, %v805
        %v810 = vmul.f32 %v790, %v805
        %v811 = vmul.f32 %v791, %v805
        %v812 = vmul.f32 %v792, %v805
        %v813 = vmul.f32 %v793, %v805
        %v814 = vmul.f32 %v794, %v805
        %v815 = vmul.f32 %v795, %v805
        %v816 = vmul.f32 %v796, %v805
        %v817 = vmul.f32 %v797, %v805
        %v818 = vmul.f32 %v798, %v805
        %v819 = vmul.f32 %v799, %v805
        %v820 = vmul.f32 %v800, %v805
        %v821 = vmul.f32 %v801, %v805
        %v822 = vsub.f32 %v609, %v658
        %v823 = vsub.f32 %v610, %v659
        %v824 = vsub.f32 %v611, %v660
        %v825 = vsub.f32 %v612, %v661
        %v826 = vsub.f32 %v613, %v662
        %v827 = vsub.f32 %v614, %v663
        %v828 = vsub.f32 %v615, %v664
        %v829 = vsub.f32 %v616, %v665
        %v830 = vsub.f32 %v617, %v666
        %v831 = vsub.f32 %v618, %v667
        %v832 = vsub.f32 %v619, %v668
        %v833 = vsub.f32 %v620, %v669
        %v834 = vsub.f32 %v621, %v670
        %v835 = vsub.f32 %v622, %v671
        %v836 = vsub.f32 %v623, %v672
        %v837 = vsub.f32 %v624, %v673
        %v838 = vmul.f32 %v822, %v806
        %v839 = vmul.f32 %v823, %v807
        %v840 = vmul.f32 %v824, %v808
        %v841 = vmul.f32 %v825, %v809
        %v842 = vmul.f32 %v826, %v810
        %v843 = vmul.f32 %v827, %v811
        %v844 = vmul.f32 %v828, %v812
        %v845 = vmul.f32 %v829, %v813
        %v846 = vmul.f32 %v830, %v814
        %v847 = vmul.f32 %v831, %v815
        %v848 = vmul.f32 %v832, %v816
        %v849 = vmul.f32 %v833, %v817
        %v850 = vmul.f32 %v834, %v818
        %v851 = vmul.f32 %v835, %v819
        %v852 = vmul.f32 %v836, %v820
        %v853 = vmul.f32 %v837, %v821
        %v854 = vlaneseq
        %v855 = vshrl.u32 %v854, 7
        %v856 = vsub.s32 0, %v855
        %v857 = vrot.slane %v418, %v856
        %v858 = vadd.f32 %v838, %v857
        %v859 = vadd.f32 %v839, %v857
        %v860 = vadd.f32 %v840, %v857
        %v861 = vadd.f32 %v841, %v857
        %v862 = vadd.f32 %v842, %v857
        %v863 = vadd.f32 %v843, %v857
        %v864 = vadd.f32 %v844, %v857
        %v865 = vadd.f32 %v845, %v857
        %v866 = vadd.f32 %v846, %v857
        %v867 = vadd.f32 %v847, %v857
        %v868 = vadd.f32 %v848, %v857
        %v869 = vadd.f32 %v849, %v857
        %v870 = vadd.f32 %v850, %v857
        %v871 = vadd.f32 %v851, %v857
        %v872 = vadd.f32 %v852, %v857
        %v873 = vadd.f32 %v853, %v857
        %v874 = vpack.c.bf16 %v859, %v858
        %v875 = vpack.c.bf16 %v861, %v860
        %v876 = vpack.c.bf16 %v863, %v862
        %v877 = vpack.c.bf16 %v865, %v864
        %v878 = vpack.c.bf16 %v867, %v866
        %v879 = vpack.c.bf16 %v869, %v868
        %v880 = vpack.c.bf16 %v871, %v870
        %v881 = vpack.c.bf16 %v873, %v872
        %v882 = vld [vmem:[#allocation8] sm:$0xff]
        %v883 = vld [vmem:[#allocation8 + $0x8] sm:$0xff]
        %v884 = vld [vmem:[#allocation8 + $0x10] sm:$0xff]
        %v885 = vld [vmem:[#allocation8 + $0x18] sm:$0xff]
        %v886 = vld [vmem:[#allocation8 + $0x20] sm:$0xff]
        %v887 = vld [vmem:[#allocation8 + $0x28] sm:$0xff]
        %v888 = vld [vmem:[#allocation8 + $0x30] sm:$0xff]
        %v889 = vld [vmem:[#allocation8 + $0x38] sm:$0xff]
        %v890 = vld [vmem:[#allocation8 + $0x40] sm:$0xff]
        %v891 = vld [vmem:[#allocation8 + $0x48] sm:$0xff]
        %v892 = vld [vmem:[#allocation8 + $0x50] sm:$0xff]
        %v893 = vld [vmem:[#allocation8 + $0x58] sm:$0xff]
        %v894 = vld [vmem:[#allocation8 + $0x60] sm:$0xff]
        %v895 = vld [vmem:[#allocation8 + $0x68] sm:$0xff]
        %v896 = vld [vmem:[#allocation8 + $0x70] sm:$0xff]
        %v897 = vld [vmem:[#allocation8 + $0x78] sm:$0xff]
        %v898 = vld [vmem:[#allocation8 + $0x80] sm:$0xff]
        %v899 = vld [vmem:[#allocation8 + $0x88] sm:$0xff]
        %v900 = vld [vmem:[#allocation8 + $0x90] sm:$0xff]
        %v901 = vld [vmem:[#allocation8 + $0x98] sm:$0xff]
        %v902 = vld [vmem:[#allocation8 + $0xa0] sm:$0xff]
        %v903 = vld [vmem:[#allocation8 + $0xa8] sm:$0xff]
        %v904 = vld [vmem:[#allocation8 + $0xb0] sm:$0xff]
        %v905 = vld [vmem:[#allocation8 + $0xb8] sm:$0xff]
        %v906 = vld [vmem:[#allocation8 + $0xc0] sm:$0xff]
        %v907 = vld [vmem:[#allocation8 + $0xc8] sm:$0xff]
        %v908 = vld [vmem:[#allocation8 + $0xd0] sm:$0xff]
        %v909 = vld [vmem:[#allocation8 + $0xd8] sm:$0xff]
        %v910 = vld [vmem:[#allocation8 + $0xe0] sm:$0xff]
        %v911 = vld [vmem:[#allocation8 + $0xe8] sm:$0xff]
        %v912 = vld [vmem:[#allocation8 + $0xf0] sm:$0xff]
        %v913 = vld [vmem:[#allocation8 + $0xf8] sm:$0xff]
        %v914 = vld [vmem:[%s5] sm:$0xf]
        %v916 = vlaneseq
        %v917 = vshrl.u32 %v916, 7
        %v918 = vsub.s32 0, %v917
        %v919 = vrot.slane %v914, %v918
        %v920 = vlaneseq
        %v921 = vshrl.u32 %v920, 7
        %v922 = vsub.s32 1, %v921
        %v923 = vrot.slane %v914, %v922
        %v924 = vlaneseq
        %v925 = vshrl.u32 %v924, 7
        %v926 = vsub.s32 2, %v925
        %v927 = vrot.slane %v914, %v926
        %v928 = vlaneseq
        %v929 = vshrl.u32 %v928, 7
        %v930 = vsub.s32 3, %v929
        %v931 = vrot.slane %v914, %v930
        %v968 = vunpack.c.l.b16 %v882
        %v969 = vunpack.c.h.b16 %v882
        %v970 = vunpack.c.l.b16 %v883
        %v971 = vunpack.c.h.b16 %v883
        %v972 = vunpack.c.l.b16 %v884
        %v973 = vunpack.c.h.b16 %v884
        %v974 = vunpack.c.l.b16 %v885
        %v975 = vunpack.c.h.b16 %v885
        %v976 = vunpack.c.l.b16 %v886
        %v977 = vunpack.c.h.b16 %v886
        %v978 = vunpack.c.l.b16 %v887
        %v979 = vunpack.c.h.b16 %v887
        %v980 = vunpack.c.l.b16 %v888
        %v981 = vunpack.c.h.b16 %v888
        %v982 = vunpack.c.l.b16 %v889
        %v983 = vunpack.c.h.b16 %v889
        %v984 = vunpack.c.l.b16 %v890
        %v985 = vunpack.c.h.b16 %v890
        %v986 = vunpack.c.l.b16 %v891
        %v987 = vunpack.c.h.b16 %v891
        %v988 = vunpack.c.l.b16 %v892
        %v989 = vunpack.c.h.b16 %v892
        %v990 = vunpack.c.l.b16 %v893
        %v991 = vunpack.c.h.b16 %v893
        %v992 = vunpack.c.l.b16 %v894
        %v993 = vunpack.c.h.b16 %v894
        %v994 = vunpack.c.l.b16 %v895
        %v995 = vunpack.c.h.b16 %v895
        %v996 = vunpack.c.l.b16 %v896
        %v997 = vunpack.c.h.b16 %v896
        %v998 = vunpack.c.l.b16 %v897
        %v999 = vunpack.c.h.b16 %v897
        %v1000 = vunpack.c.l.b16 %v898
        %v1001 = vunpack.c.h.b16 %v898
        %v1002 = vunpack.c.l.b16 %v899
        %v1003 = vunpack.c.h.b16 %v899
        %v1004 = vunpack.c.l.b16 %v900
        %v1005 = vunpack.c.h.b16 %v900
        %v1006 = vunpack.c.l.b16 %v901
        %v1007 = vunpack.c.h.b16 %v901
        %v1008 = vunpack.c.l.b16 %v902
        %v1009 = vunpack.c.h.b16 %v902
        %v1010 = vunpack.c.l.b16 %v903
        %v1011 = vunpack.c.h.b16 %v903
        %v1012 = vunpack.c.l.b16 %v904
        %v1013 = vunpack.c.h.b16 %v904
        %v1014 = vunpack.c.l.b16 %v905
        %v1015 = vunpack.c.h.b16 %v905
        %v1016 = vunpack.c.l.b16 %v906
        %v1017 = vunpack.c.h.b16 %v906
        %v1018 = vunpack.c.l.b16 %v907
        %v1019 = vunpack.c.h.b16 %v907
        %v1020 = vunpack.c.l.b16 %v908
        %v1021 = vunpack.c.h.b16 %v908
        %v1022 = vunpack.c.l.b16 %v909
        %v1023 = vunpack.c.h.b16 %v909
        %v1024 = vunpack.c.l.b16 %v910
        %v1025 = vunpack.c.h.b16 %v910
        %v1026 = vunpack.c.l.b16 %v911
        %v1027 = vunpack.c.h.b16 %v911
        %v1028 = vunpack.c.l.b16 %v912
        %v1029 = vunpack.c.h.b16 %v912
        %v1030 = vunpack.c.l.b16 %v913
        %v1031 = vunpack.c.h.b16 %v913
        %v1032 = vpack.c.b16 %v972, %v968
        %v1033 = vpack.c.b16 %v973, %v969
        %v1034 = vpack.c.b16 %v974, %v970
        %v1035 = vpack.c.b16 %v975, %v971
        %v1036 = vpack.c.b16 %v980, %v976
        %v1037 = vpack.c.b16 %v981, %v977
        %v1038 = vpack.c.b16 %v982, %v978
        %v1039 = vpack.c.b16 %v983, %v979
        %v1040 = vpack.c.b16 %v988, %v984
        %v1041 = vpack.c.b16 %v989, %v985
        %v1042 = vpack.c.b16 %v990, %v986
        %v1043 = vpack.c.b16 %v991, %v987
        %v1044 = vpack.c.b16 %v996, %v992
        %v1045 = vpack.c.b16 %v997, %v993
        %v1046 = vpack.c.b16 %v998, %v994
        %v1047 = vpack.c.b16 %v999, %v995
        %v1048 = vpack.c.b16 %v1004, %v1000
        %v1049 = vpack.c.b16 %v1005, %v1001
        %v1050 = vpack.c.b16 %v1006, %v1002
        %v1051 = vpack.c.b16 %v1007, %v1003
        %v1052 = vpack.c.b16 %v1012, %v1008
        %v1053 = vpack.c.b16 %v1013, %v1009
        %v1054 = vpack.c.b16 %v1014, %v1010
        %v1055 = vpack.c.b16 %v1015, %v1011
        %v1056 = vpack.c.b16 %v1020, %v1016
        %v1057 = vpack.c.b16 %v1021, %v1017
        %v1058 = vpack.c.b16 %v1022, %v1018
        %v1059 = vpack.c.b16 %v1023, %v1019
        %v1060 = vpack.c.b16 %v1028, %v1024
        %v1061 = vpack.c.b16 %v1029, %v1025
        %v1062 = vpack.c.b16 %v1030, %v1026
        %v1063 = vpack.c.b16 %v1031, %v1027
        %1096 = vmatprep.subr.bf16.mxu0 %v1061
        %1097 = vmatpush1.bf16.msra.mxu0 %v1060
        %1098 = vmatprep.subr.bf16.mxu0 %v1057
        %1099 = vmatpush1.bf16.msra.mxu0 %v1056
        %1100 = vmatprep.subr.bf16.mxu0 %v1053
        %1101 = vmatpush1.bf16.msra.mxu0 %v1052
        %1102 = vmatprep.subr.bf16.mxu0 %v1049
        %1103 = vmatpush1.bf16.msra.mxu0 %v1048
        %1104 = vmatprep.subr.bf16.mxu0 %v1045
        %1105 = vmatpush1.bf16.msra.mxu0 %v1044
        %1106 = vmatprep.subr.bf16.mxu0 %v1041
        %1107 = vmatpush1.bf16.msra.mxu0 %v1040
        %1108 = vmatprep.subr.bf16.mxu0 %v1037
        %1109 = vmatpush1.bf16.msra.mxu0 %v1036
        %1110 = vmatprep.subr.bf16.mxu0 %v1033
        %1111 = vmatpush1.bf16.msra.mxu0 %v1032
        %1112 = vmatprep.subr.bf16.mxu0 0
        %1113 = vmatpush2.bf16.msra.mxu0 0
        %1114 = vmatprep.subr.bf16.mxu0 0
        %1115 = vmatpush2.bf16.msra.mxu0 0
        %1116 = vmatprep.subr.bf16.mxu0 0
        %1117 = vmatpush2.bf16.msra.mxu0 0
        %1118 = vmatprep.subr.bf16.mxu0 0
        %1119 = vmatpush2.bf16.msra.mxu0 0
        %1120 = vmatprep.subr.bf16.mxu0 0
        %1121 = vmatpush2.bf16.msra.mxu0 0
        %1122 = vmatprep.subr.bf16.mxu0 0
        %1123 = vmatpush2.bf16.msra.mxu0 0
        %1124 = vmatprep.subr.bf16.mxu0 0
        %1125 = vmatpush2.bf16.msra.mxu0 0
        %1126 = vmatprep.subr.bf16.mxu0 0
        %1127 = vmatpush2.bf16.msra.mxu0 0
        %1128 = vmatprep.mubr.bf16.mxu0 0
        %1129 = vmatmul.mubr.bf16.gmra.mxu0 %v874
        %v1130 = vpop.f32.mrf.mxu0
        %v1131 = vadd.f32 %v919, %v1130
        %v1132 = vpop.f32.mrf.mxu0
        %v1133 = vadd.f32 %v923, %v1132
        %v1134 = vpop.f32.mrf.mxu0
        %v1135 = vadd.f32 %v919, %v1134
        %v1136 = vpop.f32.mrf.mxu0
        %v1137 = vadd.f32 %v923, %v1136
        %1138 = vmatprep.mubr.bf16.mxu0 0
        %1139 = vmatmul.mubr.bf16.gmra.mxu0 %v875
        %v1140 = vpop.f32.mrf.mxu0
        %v1141 = vadd.f32 %v919, %v1140
        %v1142 = vpop.f32.mrf.mxu0
        %v1143 = vadd.f32 %v923, %v1142
        %v1144 = vpop.f32.mrf.mxu0
        %v1145 = vadd.f32 %v919, %v1144
        %v1146 = vpop.f32.mrf.mxu0
        %v1147 = vadd.f32 %v923, %v1146
        %1148 = vmatprep.mubr.bf16.mxu0 0
        %1149 = vmatmul.mubr.bf16.gmra.mxu0 %v876
        %v1150 = vpop.f32.mrf.mxu0
        %v1151 = vadd.f32 %v919, %v1150
        %v1152 = vpop.f32.mrf.mxu0
        %v1153 = vadd.f32 %v923, %v1152
        %v1154 = vpop.f32.mrf.mxu0
        %v1155 = vadd.f32 %v919, %v1154
        %v1156 = vpop.f32.mrf.mxu0
        %v1157 = vadd.f32 %v923, %v1156
        %1158 = vmatprep.mubr.bf16.mxu0 0
        %1159 = vmatmul.mubr.bf16.gmra.mxu0 %v877
        %v1160 = vpop.f32.mrf.mxu0
        %v1161 = vadd.f32 %v919, %v1160
        %v1162 = vpop.f32.mrf.mxu0
        %v1163 = vadd.f32 %v923, %v1162
        %v1164 = vpop.f32.mrf.mxu0
        %v1165 = vadd.f32 %v919, %v1164
        %v1166 = vpop.f32.mrf.mxu0
        %v1167 = vadd.f32 %v923, %v1166
        %1168 = vmatprep.mubr.bf16.mxu0 0
        %1169 = vmatmul.mubr.bf16.gmra.mxu0 %v878
        %v1170 = vpop.f32.mrf.mxu0
        %v1171 = vadd.f32 %v919, %v1170
        %v1172 = vpop.f32.mrf.mxu0
        %v1173 = vadd.f32 %v923, %v1172
        %v1174 = vpop.f32.mrf.mxu0
        %v1175 = vadd.f32 %v919, %v1174
        %v1176 = vpop.f32.mrf.mxu0
        %v1177 = vadd.f32 %v923, %v1176
        %1178 = vmatprep.mubr.bf16.mxu0 0
        %1179 = vmatmul.mubr.bf16.gmra.mxu0 %v879
        %v1180 = vpop.f32.mrf.mxu0
        %v1181 = vadd.f32 %v919, %v1180
        %v1182 = vpop.f32.mrf.mxu0
        %v1183 = vadd.f32 %v923, %v1182
        %v1184 = vpop.f32.mrf.mxu0
        %v1185 = vadd.f32 %v919, %v1184
        %v1186 = vpop.f32.mrf.mxu0
        %v1187 = vadd.f32 %v923, %v1186
        %1188 = vmatprep.mubr.bf16.mxu0 0
        %1189 = vmatmul.mubr.bf16.gmra.mxu0 %v880
        %v1190 = vpop.f32.mrf.mxu0
        %v1191 = vadd.f32 %v919, %v1190
        %v1192 = vpop.f32.mrf.mxu0
        %v1193 = vadd.f32 %v923, %v1192
        %v1194 = vpop.f32.mrf.mxu0
        %v1195 = vadd.f32 %v919, %v1194
        %v1196 = vpop.f32.mrf.mxu0
        %v1197 = vadd.f32 %v923, %v1196
        %1198 = vmatprep.mubr.bf16.mxu0 0
        %1199 = vmatmul.mubr.bf16.gmra.mxu0 %v881
        %v1200 = vpop.f32.mrf.mxu0
        %v1201 = vadd.f32 %v919, %v1200
        %v1202 = vpop.f32.mrf.mxu0
        %v1203 = vadd.f32 %v923, %v1202
        %v1204 = vpop.f32.mrf.mxu0
        %v1205 = vadd.f32 %v919, %v1204
        %v1206 = vpop.f32.mrf.mxu0
        %v1207 = vadd.f32 %v923, %v1206
        %1208 = vdwg.mxu0
        %1209 = vmatprep.subr.bf16.mxu0 %v1063
        %1210 = vmatpush1.bf16.msra.mxu0 %v1062
        %1211 = vmatprep.subr.bf16.mxu0 %v1059
        %1212 = vmatpush1.bf16.msra.mxu0 %v1058
        %1213 = vmatprep.subr.bf16.mxu0 %v1055
        %1214 = vmatpush1.bf16.msra.mxu0 %v1054
        %1215 = vmatprep.subr.bf16.mxu0 %v1051
        %1216 = vmatpush1.bf16.msra.mxu0 %v1050
        %1217 = vmatprep.subr.bf16.mxu0 %v1047
        %1218 = vmatpush1.bf16.msra.mxu0 %v1046
        %1219 = vmatprep.subr.bf16.mxu0 %v1043
        %1220 = vmatpush1.bf16.msra.mxu0 %v1042
        %1221 = vmatprep.subr.bf16.mxu0 %v1039
        %1222 = vmatpush1.bf16.msra.mxu0 %v1038
        %1223 = vmatprep.subr.bf16.mxu0 %v1035
        %1224 = vmatpush1.bf16.msra.mxu0 %v1034
        %1225 = vmatprep.subr.bf16.mxu0 0
        %1226 = vmatpush2.bf16.msra.mxu0 0
        %1227 = vmatprep.subr.bf16.mxu0 0
        %1228 = vmatpush2.bf16.msra.mxu0 0
        %1229 = vmatprep.subr.bf16.mxu0 0
        %1230 = vmatpush2.bf16.msra.mxu0 0
        %1231 = vmatprep.subr.bf16.mxu0 0
        %1232 = vmatpush2.bf16.msra.mxu0 0
        %1233 = vmatprep.subr.bf16.mxu0 0
        %1234 = vmatpush2.bf16.msra.mxu0 0
        %1235 = vmatprep.subr.bf16.mxu0 0
        %1236 = vmatpush2.bf16.msra.mxu0 0
        %1237 = vmatprep.subr.bf16.mxu0 0
        %1238 = vmatpush2.bf16.msra.mxu0 0
        %1239 = vmatprep.subr.bf16.mxu0 0
        %1240 = vmatpush2.bf16.msra.mxu0 0
        %1241 = vmatprep.mubr.bf16.mxu0 0
        %1242 = vmatmul.mubr.bf16.gmra.mxu0 %v874
        %v1243 = vpop.f32.mrf.mxu0
        %v1244 = vadd.f32 %v927, %v1243
        %v1245 = vpop.f32.mrf.mxu0
        %v1246 = vadd.f32 %v931, %v1245
        %v1247 = vpop.f32.mrf.mxu0
        %v1248 = vadd.f32 %v927, %v1247
        %v1249 = vpop.f32.mrf.mxu0
        %v1250 = vadd.f32 %v931, %v1249
        %1251 = vmatprep.mubr.bf16.mxu0 0
        %1252 = vmatmul.mubr.bf16.gmra.mxu0 %v875
        %v1253 = vpop.f32.mrf.mxu0
        %v1254 = vadd.f32 %v927, %v1253
        %v1255 = vpop.f32.mrf.mxu0
        %v1256 = vadd.f32 %v931, %v1255
        %v1257 = vpop.f32.mrf.mxu0
        %v1258 = vadd.f32 %v927, %v1257
        %v1259 = vpop.f32.mrf.mxu0
        %v1260 = vadd.f32 %v931, %v1259
        %1261 = vmatprep.mubr.bf16.mxu0 0
        %1262 = vmatmul.mubr.bf16.gmra.mxu0 %v876
        %v1263 = vpop.f32.mrf.mxu0
        %v1264 = vadd.f32 %v927, %v1263
        %v1265 = vpop.f32.mrf.mxu0
        %v1266 = vadd.f32 %v931, %v1265
        %v1267 = vpop.f32.mrf.mxu0
        %v1268 = vadd.f32 %v927, %v1267
        %v1269 = vpop.f32.mrf.mxu0
        %v1270 = vadd.f32 %v931, %v1269
        %1271 = vmatprep.mubr.bf16.mxu0 0
        %1272 = vmatmul.mubr.bf16.gmra.mxu0 %v877
        %v1273 = vpop.f32.mrf.mxu0
        %v1274 = vadd.f32 %v927, %v1273
        %v1275 = vpop.f32.mrf.mxu0
        %v1276 = vadd.f32 %v931, %v1275
        %v1277 = vpop.f32.mrf.mxu0
        %v1278 = vadd.f32 %v927, %v1277
        %v1279 = vpop.f32.mrf.mxu0
        %v1280 = vadd.f32 %v931, %v1279
        %1281 = vmatprep.mubr.bf16.mxu0 0
        %1282 = vmatmul.mubr.bf16.gmra.mxu0 %v878
        %v1283 = vpop.f32.mrf.mxu0
        %v1284 = vadd.f32 %v927, %v1283
        %v1285 = vpop.f32.mrf.mxu0
        %v1286 = vadd.f32 %v931, %v1285
        %v1287 = vpop.f32.mrf.mxu0
        %v1288 = vadd.f32 %v927, %v1287
        %v1289 = vpop.f32.mrf.mxu0
        %v1290 = vadd.f32 %v931, %v1289
        %1291 = vmatprep.mubr.bf16.mxu0 0
        %1292 = vmatmul.mubr.bf16.gmra.mxu0 %v879
        %v1293 = vpop.f32.mrf.mxu0
        %v1294 = vadd.f32 %v927, %v1293
        %v1295 = vpop.f32.mrf.mxu0
        %v1296 = vadd.f32 %v931, %v1295
        %v1297 = vpop.f32.mrf.mxu0
        %v1298 = vadd.f32 %v927, %v1297
        %v1299 = vpop.f32.mrf.mxu0
        %v1300 = vadd.f32 %v931, %v1299
        %1301 = vmatprep.mubr.bf16.mxu0 0
        %1302 = vmatmul.mubr.bf16.gmra.mxu0 %v880
        %v1303 = vpop.f32.mrf.mxu0
        %v1304 = vadd.f32 %v927, %v1303
        %v1305 = vpop.f32.mrf.mxu0
        %v1306 = vadd.f32 %v931, %v1305
        %v1307 = vpop.f32.mrf.mxu0
        %v1308 = vadd.f32 %v927, %v1307
        %v1309 = vpop.f32.mrf.mxu0
        %v1310 = vadd.f32 %v931, %v1309
        %1311 = vmatprep.mubr.bf16.mxu0 0
        %1312 = vmatmul.mubr.bf16.gmra.mxu0 %v881
        %v1313 = vpop.f32.mrf.mxu0
        %v1314 = vadd.f32 %v927, %v1313
        %v1315 = vpop.f32.mrf.mxu0
        %v1316 = vadd.f32 %v931, %v1315
        %v1317 = vpop.f32.mrf.mxu0
        %v1318 = vadd.f32 %v927, %v1317
        %v1319 = vpop.f32.mrf.mxu0
        %v1320 = vadd.f32 %v931, %v1319
        %1321 = vdwg.mxu0
        %v1322 = vmul.f32 %v1131, 0.5
        %v1323 = vmul.f32 %v1133, 0.5
        %v1324 = vmul.f32 %v1244, 0.5
        %v1325 = vmul.f32 %v1246, 0.5
        %v1326 = vmul.f32 %v1135, 0.5
        %v1327 = vmul.f32 %v1137, 0.5
        %v1328 = vmul.f32 %v1248, 0.5
        %v1329 = vmul.f32 %v1250, 0.5
        %v1330 = vmul.f32 %v1141, 0.5
        %v1331 = vmul.f32 %v1143, 0.5
        %v1332 = vmul.f32 %v1254, 0.5
        %v1333 = vmul.f32 %v1256, 0.5
        %v1334 = vmul.f32 %v1145, 0.5
        %v1335 = vmul.f32 %v1147, 0.5
        %v1336 = vmul.f32 %v1258, 0.5
        %v1337 = vmul.f32 %v1260, 0.5
        %v1338 = vmul.f32 %v1151, 0.5
        %v1339 = vmul.f32 %v1153, 0.5
        %v1340 = vmul.f32 %v1264, 0.5
        %v1341 = vmul.f32 %v1266, 0.5
        %v1342 = vmul.f32 %v1155, 0.5
        %v1343 = vmul.f32 %v1157, 0.5
        %v1344 = vmul.f32 %v1268, 0.5
        %v1345 = vmul.f32 %v1270, 0.5
        %v1346 = vmul.f32 %v1161, 0.5
        %v1347 = vmul.f32 %v1163, 0.5
        %v1348 = vmul.f32 %v1274, 0.5
        %v1349 = vmul.f32 %v1276, 0.5
        %v1350 = vmul.f32 %v1165, 0.5
        %v1351 = vmul.f32 %v1167, 0.5
        %v1352 = vmul.f32 %v1278, 0.5
        %v1353 = vmul.f32 %v1280, 0.5
        %v1354 = vmul.f32 %v1171, 0.5
        %v1355 = vmul.f32 %v1173, 0.5
        %v1356 = vmul.f32 %v1284, 0.5
        %v1357 = vmul.f32 %v1286, 0.5
        %v1358 = vmul.f32 %v1175, 0.5
        %v1359 = vmul.f32 %v1177, 0.5
        %v1360 = vmul.f32 %v1288, 0.5
        %v1361 = vmul.f32 %v1290, 0.5
        %v1362 = vmul.f32 %v1181, 0.5
        %v1363 = vmul.f32 %v1183, 0.5
        %v1364 = vmul.f32 %v1294, 0.5
        %v1365 = vmul.f32 %v1296, 0.5
        %v1366 = vmul.f32 %v1185, 0.5
        %v1367 = vmul.f32 %v1187, 0.5
        %v1368 = vmul.f32 %v1298, 0.5
        %v1369 = vmul.f32 %v1300, 0.5
        %v1370 = vmul.f32 %v1191, 0.5
        %v1371 = vmul.f32 %v1193, 0.5
        %v1372 = vmul.f32 %v1304, 0.5
        %v1373 = vmul.f32 %v1306, 0.5
        %v1374 = vmul.f32 %v1195, 0.5
        %v1375 = vmul.f32 %v1197, 0.5
        %v1376 = vmul.f32 %v1308, 0.5
        %v1377 = vmul.f32 %v1310, 0.5
        %v1378 = vmul.f32 %v1201, 0.5
        %v1379 = vmul.f32 %v1203, 0.5
        %v1380 = vmul.f32 %v1314, 0.5
        %v1381 = vmul.f32 %v1316, 0.5
        %v1382 = vmul.f32 %v1205, 0.5
        %v1383 = vmul.f32 %v1207, 0.5
        %v1384 = vmul.f32 %v1318, 0.5
        %v1385 = vmul.f32 %v1320, 0.5
        %v1386 = vmul.f32 %v1131, 0.044715
        %v1387 = vmul.f32 %v1133, 0.044715
        %v1388 = vmul.f32 %v1244, 0.044715
        %v1389 = vmul.f32 %v1246, 0.044715
        %v1390 = vmul.f32 %v1135, 0.044715
        %v1391 = vmul.f32 %v1137, 0.044715
        %v1392 = vmul.f32 %v1248, 0.044715
        %v1393 = vmul.f32 %v1250, 0.044715
        %v1394 = vmul.f32 %v1141, 0.044715
        %v1395 = vmul.f32 %v1143, 0.044715
        %v1396 = vmul.f32 %v1254, 0.044715
        %v1397 = vmul.f32 %v1256, 0.044715
        %v1398 = vmul.f32 %v1145, 0.044715
        %v1399 = vmul.f32 %v1147, 0.044715
        %v1400 = vmul.f32 %v1258, 0.044715
        %v1401 = vmul.f32 %v1260, 0.044715
        %v1402 = vmul.f32 %v1151, 0.044715
        %v1403 = vmul.f32 %v1153, 0.044715
        %v1404 = vmul.f32 %v1264, 0.044715
        %v1405 = vmul.f32 %v1266, 0.044715
        %v1406 = vmul.f32 %v1155, 0.044715
        %v1407 = vmul.f32 %v1157, 0.044715
        %v1408 = vmul.f32 %v1268, 0.044715
        %v1409 = vmul.f32 %v1270, 0.044715
        %v1410 = vmul.f32 %v1161, 0.044715
        %v1411 = vmul.f32 %v1163, 0.044715
        %v1412 = vmul.f32 %v1274, 0.044715
        %v1413 = vmul.f32 %v1276, 0.044715
        %v1414 = vmul.f32 %v1165, 0.044715
        %v1415 = vmul.f32 %v1167, 0.044715
        %v1416 = vmul.f32 %v1278, 0.044715
        %v1417 = vmul.f32 %v1280, 0.044715
        %v1418 = vmul.f32 %v1171, 0.044715
        %v1419 = vmul.f32 %v1173, 0.044715
        %v1420 = vmul.f32 %v1284, 0.044715
        %v1421 = vmul.f32 %v1286, 0.044715
        %v1422 = vmul.f32 %v1175, 0.044715
        %v1423 = vmul.f32 %v1177, 0.044715
        %v1424 = vmul.f32 %v1288, 0.044715
        %v1425 = vmul.f32 %v1290, 0.044715
        %v1426 = vmul.f32 %v1181, 0.044715
        %v1427 = vmul.f32 %v1183, 0.044715
        %v1428 = vmul.f32 %v1294, 0.044715
        %v1429 = vmul.f32 %v1296, 0.044715
        %v1430 = vmul.f32 %v1185, 0.044715
        %v1431 = vmul.f32 %v1187, 0.044715
        %v1432 = vmul.f32 %v1298, 0.044715
        %v1433 = vmul.f32 %v1300, 0.044715
        %v1434 = vmul.f32 %v1191, 0.044715
        %v1435 = vmul.f32 %v1193, 0.044715
        %v1436 = vmul.f32 %v1304, 0.044715
        %v1437 = vmul.f32 %v1306, 0.044715
        %v1438 = vmul.f32 %v1195, 0.044715
        %v1439 = vmul.f32 %v1197, 0.044715
        %v1440 = vmul.f32 %v1308, 0.044715
        %v1441 = vmul.f32 %v1310, 0.044715
        %v1442 = vmul.f32 %v1201, 0.044715
        %v1443 = vmul.f32 %v1203, 0.044715
        %v1444 = vmul.f32 %v1314, 0.044715
        %v1445 = vmul.f32 %v1316, 0.044715
        %v1446 = vmul.f32 %v1205, 0.044715
        %v1447 = vmul.f32 %v1207, 0.044715
        %v1448 = vmul.f32 %v1318, 0.044715
        %v1449 = vmul.f32 %v1320, 0.044715
        %v1450 = vmul.f32 %v1386, %v1131
        %v1451 = vmul.f32 %v1387, %v1133
        %v1452 = vmul.f32 %v1388, %v1244
        %v1453 = vmul.f32 %v1389, %v1246
        %v1454 = vmul.f32 %v1390, %v1135
        %v1455 = vmul.f32 %v1391, %v1137
        %v1456 = vmul.f32 %v1392, %v1248
        %v1457 = vmul.f32 %v1393, %v1250
        %v1458 = vmul.f32 %v1394, %v1141
        %v1459 = vmul.f32 %v1395, %v1143
        %v1460 = vmul.f32 %v1396, %v1254
        %v1461 = vmul.f32 %v1397, %v1256
        %v1462 = vmul.f32 %v1398, %v1145
        %v1463 = vmul.f32 %v1399, %v1147
        %v1464 = vmul.f32 %v1400, %v1258
        %v1465 = vmul.f32 %v1401, %v1260
        %v1466 = vmul.f32 %v1402, %v1151
        %v1467 = vmul.f32 %v1403, %v1153
        %v1468 = vmul.f32 %v1404, %v1264
        %v1469 = vmul.f32 %v1405, %v1266
        %v1470 = vmul.f32 %v1406, %v1155
        %v1471 = vmul.f32 %v1407, %v1157
        %v1472 = vmul.f32 %v1408, %v1268
        %v1473 = vmul.f32 %v1409, %v1270
        %v1474 = vmul.f32 %v1410, %v1161
        %v1475 = vmul.f32 %v1411, %v1163
        %v1476 = vmul.f32 %v1412, %v1274
        %v1477 = vmul.f32 %v1413, %v1276
        %v1478 = vmul.f32 %v1414, %v1165
        %v1479 = vmul.f32 %v1415, %v1167
        %v1480 = vmul.f32 %v1416, %v1278
        %v1481 = vmul.f32 %v1417, %v1280
        %v1482 = vmul.f32 %v1418, %v1171
        %v1483 = vmul.f32 %v1419, %v1173
        %v1484 = vmul.f32 %v1420, %v1284
        %v1485 = vmul.f32 %v1421, %v1286
        %v1486 = vmul.f32 %v1422, %v1175
        %v1487 = vmul.f32 %v1423, %v1177
        %v1488 = vmul.f32 %v1424, %v1288
        %v1489 = vmul.f32 %v1425, %v1290
        %v1490 = vmul.f32 %v1426, %v1181
        %v1491 = vmul.f32 %v1427, %v1183
        %v1492 = vmul.f32 %v1428, %v1294
        %v1493 = vmul.f32 %v1429, %v1296
        %v1494 = vmul.f32 %v1430, %v1185
        %v1495 = vmul.f32 %v1431, %v1187
        %v1496 = vmul.f32 %v1432, %v1298
        %v1497 = vmul.f32 %v1433, %v1300
        %v1498 = vmul.f32 %v1434, %v1191
        %v1499 = vmul.f32 %v1435, %v1193
        %v1500 = vmul.f32 %v1436, %v1304
        %v1501 = vmul.f32 %v1437, %v1306
        %v1502 = vmul.f32 %v1438, %v1195
        %v1503 = vmul.f32 %v1439, %v1197
        %v1504 = vmul.f32 %v1440, %v1308
        %v1505 = vmul.f32 %v1441, %v1310
        %v1506 = vmul.f32 %v1442, %v1201
        %v1507 = vmul.f32 %v1443, %v1203
        %v1508 = vmul.f32 %v1444, %v1314
        %v1509 = vmul.f32 %v1445, %v1316
        %v1510 = vmul.f32 %v1446, %v1205
        %v1511 = vmul.f32 %v1447, %v1207
        %v1512 = vmul.f32 %v1448, %v1318
        %v1513 = vmul.f32 %v1449, %v1320
        %v1514 = vmul.f32 %v1450, %v1131
        %v1515 = vmul.f32 %v1451, %v1133
        %v1516 = vmul.f32 %v1452, %v1244
        %v1517 = vmul.f32 %v1453, %v1246
        %v1518 = vmul.f32 %v1454, %v1135
        %v1519 = vmul.f32 %v1455, %v1137
        %v1520 = vmul.f32 %v1456, %v1248
        %v1521 = vmul.f32 %v1457, %v1250
        %v1522 = vmul.f32 %v1458, %v1141
        %v1523 = vmul.f32 %v1459, %v1143
        %v1524 = vmul.f32 %v1460, %v1254
        %v1525 = vmul.f32 %v1461, %v1256
        %v1526 = vmul.f32 %v1462, %v1145
        %v1527 = vmul.f32 %v1463, %v1147
        %v1528 = vmul.f32 %v1464, %v1258
        %v1529 = vmul.f32 %v1465, %v1260
        %v1530 = vmul.f32 %v1466, %v1151
        %v1531 = vmul.f32 %v1467, %v1153
        %v1532 = vmul.f32 %v1468, %v1264
        %v1533 = vmul.f32 %v1469, %v1266
        %v1534 = vmul.f32 %v1470, %v1155
        %v1535 = vmul.f32 %v1471, %v1157
        %v1536 = vmul.f32 %v1472, %v1268
        %v1537 = vmul.f32 %v1473, %v1270
        %v1538 = vmul.f32 %v1474, %v1161
        %v1539 = vmul.f32 %v1475, %v1163
        %v1540 = vmul.f32 %v1476, %v1274
        %v1541 = vmul.f32 %v1477, %v1276
        %v1542 = vmul.f32 %v1478, %v1165
        %v1543 = vmul.f32 %v1479, %v1167
        %v1544 = vmul.f32 %v1480, %v1278
        %v1545 = vmul.f32 %v1481, %v1280
        %v1546 = vmul.f32 %v1482, %v1171
        %v1547 = vmul.f32 %v1483, %v1173
        %v1548 = vmul.f32 %v1484, %v1284
        %v1549 = vmul.f32 %v1485, %v1286
        %v1550 = vmul.f32 %v1486, %v1175
        %v1551 = vmul.f32 %v1487, %v1177
        %v1552 = vmul.f32 %v1488, %v1288
        %v1553 = vmul.f32 %v1489, %v1290
        %v1554 = vmul.f32 %v1490, %v1181
        %v1555 = vmul.f32 %v1491, %v1183
        %v1556 = vmul.f32 %v1492, %v1294
        %v1557 = vmul.f32 %v1493, %v1296
        %v1558 = vmul.f32 %v1494, %v1185
        %v1559 = vmul.f32 %v1495, %v1187
        %v1560 = vmul.f32 %v1496, %v1298
        %v1561 = vmul.f32 %v1497, %v1300
        %v1562 = vmul.f32 %v1498, %v1191
        %v1563 = vmul.f32 %v1499, %v1193
        %v1564 = vmul.f32 %v1500, %v1304
        %v1565 = vmul.f32 %v1501, %v1306
        %v1566 = vmul.f32 %v1502, %v1195
        %v1567 = vmul.f32 %v1503, %v1197
        %v1568 = vmul.f32 %v1504, %v1308
        %v1569 = vmul.f32 %v1505, %v1310
        %v1570 = vmul.f32 %v1506, %v1201
        %v1571 = vmul.f32 %v1507, %v1203
        %v1572 = vmul.f32 %v1508, %v1314
        %v1573 = vmul.f32 %v1509, %v1316
        %v1574 = vmul.f32 %v1510, %v1205
        %v1575 = vmul.f32 %v1511, %v1207
        %v1576 = vmul.f32 %v1512, %v1318
        %v1577 = vmul.f32 %v1513, %v1320
        %v1578 = vadd.f32 %v1131, %v1514
        %v1579 = vadd.f32 %v1133, %v1515
        %v1580 = vadd.f32 %v1244, %v1516
        %v1581 = vadd.f32 %v1246, %v1517
        %v1582 = vadd.f32 %v1135, %v1518
        %v1583 = vadd.f32 %v1137, %v1519
        %v1584 = vadd.f32 %v1248, %v1520
        %v1585 = vadd.f32 %v1250, %v1521
        %v1586 = vadd.f32 %v1141, %v1522
        %v1587 = vadd.f32 %v1143, %v1523
        %v1588 = vadd.f32 %v1254, %v1524
        %v1589 = vadd.f32 %v1256, %v1525
        %v1590 = vadd.f32 %v1145, %v1526
        %v1591 = vadd.f32 %v1147, %v1527
        %v1592 = vadd.f32 %v1258, %v1528
        %v1593 = vadd.f32 %v1260, %v1529
        %v1594 = vadd.f32 %v1151, %v1530
        %v1595 = vadd.f32 %v1153, %v1531
        %v1596 = vadd.f32 %v1264, %v1532
        %v1597 = vadd.f32 %v1266, %v1533
        %v1598 = vadd.f32 %v1155, %v1534
        %v1599 = vadd.f32 %v1157, %v1535
        %v1600 = vadd.f32 %v1268, %v1536
        %v1601 = vadd.f32 %v1270, %v1537
        %v1602 = vadd.f32 %v1161, %v1538
        %v1603 = vadd.f32 %v1163, %v1539
        %v1604 = vadd.f32 %v1274, %v1540
        %v1605 = vadd.f32 %v1276, %v1541
        %v1606 = vadd.f32 %v1165, %v1542
        %v1607 = vadd.f32 %v1167, %v1543
        %v1608 = vadd.f32 %v1278, %v1544
        %v1609 = vadd.f32 %v1280, %v1545
        %v1610 = vadd.f32 %v1171, %v1546
        %v1611 = vadd.f32 %v1173, %v1547
        %v1612 = vadd.f32 %v1284, %v1548
        %v1613 = vadd.f32 %v1286, %v1549
        %v1614 = vadd.f32 %v1175, %v1550
        %v1615 = vadd.f32 %v1177, %v1551
        %v1616 = vadd.f32 %v1288, %v1552
        %v1617 = vadd.f32 %v1290, %v1553
        %v1618 = vadd.f32 %v1181, %v1554
        %v1619 = vadd.f32 %v1183, %v1555
        %v1620 = vadd.f32 %v1294, %v1556
        %v1621 = vadd.f32 %v1296, %v1557
        %v1622 = vadd.f32 %v1185, %v1558
        %v1623 = vadd.f32 %v1187, %v1559
        %v1624 = vadd.f32 %v1298, %v1560
        %v1625 = vadd.f32 %v1300, %v1561
        %v1626 = vadd.f32 %v1191, %v1562
        %v1627 = vadd.f32 %v1193, %v1563
        %v1628 = vadd.f32 %v1304, %v1564
        %v1629 = vadd.f32 %v1306, %v1565
        %v1630 = vadd.f32 %v1195, %v1566
        %v1631 = vadd.f32 %v1197, %v1567
        %v1632 = vadd.f32 %v1308, %v1568
        %v1633 = vadd.f32 %v1310, %v1569
        %v1634 = vadd.f32 %v1201, %v1570
        %v1635 = vadd.f32 %v1203, %v1571
        %v1636 = vadd.f32 %v1314, %v1572
        %v1637 = vadd.f32 %v1316, %v1573
        %v1638 = vadd.f32 %v1205, %v1574
        %v1639 = vadd.f32 %v1207, %v1575
        %v1640 = vadd.f32 %v1318, %v1576
        %v1641 = vadd.f32 %v1320, %v1577
        %v1642 = vmul.f32 %v1578, 0.7978846
        %v1643 = vmul.f32 %v1579, 0.7978846
        %v1644 = vmul.f32 %v1580, 0.7978846
        %v1645 = vmul.f32 %v1581, 0.7978846
        %v1646 = vmul.f32 %v1582, 0.7978846
        %v1647 = vmul.f32 %v1583, 0.7978846
        %v1648 = vmul.f32 %v1584, 0.7978846
        %v1649 = vmul.f32 %v1585, 0.7978846
        %v1650 = vmul.f32 %v1586, 0.7978846
        %v1651 = vmul.f32 %v1587, 0.7978846
        %v1652 = vmul.f32 %v1588, 0.7978846
        %v1653 = vmul.f32 %v1589, 0.7978846
        %v1654 = vmul.f32 %v1590, 0.7978846
        %v1655 = vmul.f32 %v1591, 0.7978846
        %v1656 = vmul.f32 %v1592, 0.7978846
        %v1657 = vmul.f32 %v1593, 0.7978846
        %v1658 = vmul.f32 %v1594, 0.7978846
        %v1659 = vmul.f32 %v1595, 0.7978846
        %v1660 = vmul.f32 %v1596, 0.7978846
        %v1661 = vmul.f32 %v1597, 0.7978846
        %v1662 = vmul.f32 %v1598, 0.7978846
        %v1663 = vmul.f32 %v1599, 0.7978846
        %v1664 = vmul.f32 %v1600, 0.7978846
        %v1665 = vmul.f32 %v1601, 0.7978846
        %v1666 = vmul.f32 %v1602, 0.7978846
        %v1667 = vmul.f32 %v1603, 0.7978846
        %v1668 = vmul.f32 %v1604, 0.7978846
        %v1669 = vmul.f32 %v1605, 0.7978846
        %v1670 = vmul.f32 %v1606, 0.7978846
        %v1671 = vmul.f32 %v1607, 0.7978846
        %v1672 = vmul.f32 %v1608, 0.7978846
        %v1673 = vmul.f32 %v1609, 0.7978846
        %v1674 = vmul.f32 %v1610, 0.7978846
        %v1675 = vmul.f32 %v1611, 0.7978846
        %v1676 = vmul.f32 %v1612, 0.7978846
        %v1677 = vmul.f32 %v1613, 0.7978846
        %v1678 = vmul.f32 %v1614, 0.7978846
        %v1679 = vmul.f32 %v1615, 0.7978846
        %v1680 = vmul.f32 %v1616, 0.7978846
        %v1681 = vmul.f32 %v1617, 0.7978846
        %v1682 = vmul.f32 %v1618, 0.7978846
        %v1683 = vmul.f32 %v1619, 0.7978846
        %v1684 = vmul.f32 %v1620, 0.7978846
        %v1685 = vmul.f32 %v1621, 0.7978846
        %v1686 = vmul.f32 %v1622, 0.7978846
        %v1687 = vmul.f32 %v1623, 0.7978846
        %v1688 = vmul.f32 %v1624, 0.7978846
        %v1689 = vmul.f32 %v1625, 0.7978846
        %v1690 = vmul.f32 %v1626, 0.7978846
        %v1691 = vmul.f32 %v1627, 0.7978846
        %v1692 = vmul.f32 %v1628, 0.7978846
        %v1693 = vmul.f32 %v1629, 0.7978846
        %v1694 = vmul.f32 %v1630, 0.7978846
        %v1695 = vmul.f32 %v1631, 0.7978846
        %v1696 = vmul.f32 %v1632, 0.7978846
        %v1697 = vmul.f32 %v1633, 0.7978846
        %v1698 = vmul.f32 %v1634, 0.7978846
        %v1699 = vmul.f32 %v1635, 0.7978846
        %v1700 = vmul.f32 %v1636, 0.7978846
        %v1701 = vmul.f32 %v1637, 0.7978846
        %v1702 = vmul.f32 %v1638, 0.7978846
        %v1703 = vmul.f32 %v1639, 0.7978846
        %v1704 = vmul.f32 %v1640, 0.7978846
        %v1705 = vmul.f32 %v1641, 0.7978846
        %v1706 = vtanh.pop %v1642
        %v1707 = vtanh.pop %v1643
        %v1708 = vtanh.pop %v1644
        %v1709 = vtanh.pop %v1645
        %v1710 = vtanh.pop %v1646
        %v1711 = vtanh.pop %v1647
        %v1712 = vtanh.pop %v1648
        %v1713 = vtanh.pop %v1649
        %v1714 = vtanh.pop %v1650
        %v1715 = vtanh.pop %v1651
        %v1716 = vtanh.pop %v1652
        %v1717 = vtanh.pop %v1653
        %v1718 = vtanh.pop %v1654
        %v1719 = vtanh.pop %v1655
        %v1720 = vtanh.pop %v1656
        %v1721 = vtanh.pop %v1657
        %v1722 = vtanh.pop %v1658
        %v1723 = vtanh.pop %v1659
        %v1724 = vtanh.pop %v1660
        %v1725 = vtanh.pop %v1661
        %v1726 = vtanh.pop %v1662
        %v1727 = vtanh.pop %v1663
        %v1728 = vtanh.pop %v1664
        %v1729 = vtanh.pop %v1665
        %v1730 = vtanh.pop %v1666
        %v1731 = vtanh.pop %v1667
        %v1732 = vtanh.pop %v1668
        %v1733 = vtanh.pop %v1669
        %v1734 = vtanh.pop %v1670
        %v1735 = vtanh.pop %v1671
        %v1736 = vtanh.pop %v1672
        %v1737 = vtanh.pop %v1673
        %v1738 = vtanh.pop %v1674
        %v1739 = vtanh.pop %v1675
        %v1740 = vtanh.pop %v1676
        %v1741 = vtanh.pop %v1677
        %v1742 = vtanh.pop %v1678
        %v1743 = vtanh.pop %v1679
        %v1744 = vtanh.pop %v1680
        %v1745 = vtanh.pop %v1681
        %v1746 = vtanh.pop %v1682
        %v1747 = vtanh.pop %v1683
        %v1748 = vtanh.pop %v1684
        %v1749 = vtanh.pop %v1685
        %v1750 = vtanh.pop %v1686
        %v1751 = vtanh.pop %v1687
        %v1752 = vtanh.pop %v1688
        %v1753 = vtanh.pop %v1689
        %v1754 = vtanh.pop %v1690
        %v1755 = vtanh.pop %v1691
        %v1756 = vtanh.pop %v1692
        %v1757 = vtanh.pop %v1693
        %v1758 = vtanh.pop %v1694
        %v1759 = vtanh.pop %v1695
        %v1760 = vtanh.pop %v1696
        %v1761 = vtanh.pop %v1697
        %v1762 = vtanh.pop %v1698
        %v1763 = vtanh.pop %v1699
        %v1764 = vtanh.pop %v1700
        %v1765 = vtanh.pop %v1701
        %v1766 = vtanh.pop %v1702
        %v1767 = vtanh.pop %v1703
        %v1768 = vtanh.pop %v1704
        %v1769 = vtanh.pop %v1705
        %v1770 = vadd.f32 %v1706, 1.0
        %v1771 = vadd.f32 %v1707, 1.0
        %v1772 = vadd.f32 %v1708, 1.0
        %v1773 = vadd.f32 %v1709, 1.0
        %v1774 = vadd.f32 %v1710, 1.0
        %v1775 = vadd.f32 %v1711, 1.0
        %v1776 = vadd.f32 %v1712, 1.0
        %v1777 = vadd.f32 %v1713, 1.0
        %v1778 = vadd.f32 %v1714, 1.0
        %v1779 = vadd.f32 %v1715, 1.0
        %v1780 = vadd.f32 %v1716, 1.0
        %v1781 = vadd.f32 %v1717, 1.0
        %v1782 = vadd.f32 %v1718, 1.0
        %v1783 = vadd.f32 %v1719, 1.0
        %v1784 = vadd.f32 %v1720, 1.0
        %v1785 = vadd.f32 %v1721, 1.0
        %v1786 = vadd.f32 %v1722, 1.0
        %v1787 = vadd.f32 %v1723, 1.0
        %v1788 = vadd.f32 %v1724, 1.0
        %v1789 = vadd.f32 %v1725, 1.0
        %v1790 = vadd.f32 %v1726, 1.0
        %v1791 = vadd.f32 %v1727, 1.0
        %v1792 = vadd.f32 %v1728, 1.0
        %v1793 = vadd.f32 %v1729, 1.0
        %v1794 = vadd.f32 %v1730, 1.0
        %v1795 = vadd.f32 %v1731, 1.0
        %v1796 = vadd.f32 %v1732, 1.0
        %v1797 = vadd.f32 %v1733, 1.0
        %v1798 = vadd.f32 %v1734, 1.0
        %v1799 = vadd.f32 %v1735, 1.0
        %v1800 = vadd.f32 %v1736, 1.0
        %v1801 = vadd.f32 %v1737, 1.0
        %v1802 = vadd.f32 %v1738, 1.0
        %v1803 = vadd.f32 %v1739, 1.0
        %v1804 = vadd.f32 %v1740, 1.0
        %v1805 = vadd.f32 %v1741, 1.0
        %v1806 = vadd.f32 %v1742, 1.0
        %v1807 = vadd.f32 %v1743, 1.0
        %v1808 = vadd.f32 %v1744, 1.0
        %v1809 = vadd.f32 %v1745, 1.0
        %v1810 = vadd.f32 %v1746, 1.0
        %v1811 = vadd.f32 %v1747, 1.0
        %v1812 = vadd.f32 %v1748, 1.0
        %v1813 = vadd.f32 %v1749, 1.0
        %v1814 = vadd.f32 %v1750, 1.0
        %v1815 = vadd.f32 %v1751, 1.0
        %v1816 = vadd.f32 %v1752, 1.0
        %v1817 = vadd.f32 %v1753, 1.0
        %v1818 = vadd.f32 %v1754, 1.0
        %v1819 = vadd.f32 %v1755, 1.0
        %v1820 = vadd.f32 %v1756, 1.0
        %v1821 = vadd.f32 %v1757, 1.0
        %v1822 = vadd.f32 %v1758, 1.0
        %v1823 = vadd.f32 %v1759, 1.0
        %v1824 = vadd.f32 %v1760, 1.0
        %v1825 = vadd.f32 %v1761, 1.0
        %v1826 = vadd.f32 %v1762, 1.0
        %v1827 = vadd.f32 %v1763, 1.0
        %v1828 = vadd.f32 %v1764, 1.0
        %v1829 = vadd.f32 %v1765, 1.0
        %v1830 = vadd.f32 %v1766, 1.0
        %v1831 = vadd.f32 %v1767, 1.0
        %v1832 = vadd.f32 %v1768, 1.0
        %v1833 = vadd.f32 %v1769, 1.0
        %v1834 = vmul.f32 %v1322, %v1770
        %v1835 = vmul.f32 %v1323, %v1771
        %v1836 = vmul.f32 %v1324, %v1772
        %v1837 = vmul.f32 %v1325, %v1773
        %v1838 = vmul.f32 %v1326, %v1774
        %v1839 = vmul.f32 %v1327, %v1775
        %v1840 = vmul.f32 %v1328, %v1776
        %v1841 = vmul.f32 %v1329, %v1777
        %v1842 = vmul.f32 %v1330, %v1778
        %v1843 = vmul.f32 %v1331, %v1779
        %v1844 = vmul.f32 %v1332, %v1780
        %v1845 = vmul.f32 %v1333, %v1781
        %v1846 = vmul.f32 %v1334, %v1782
        %v1847 = vmul.f32 %v1335, %v1783
        %v1848 = vmul.f32 %v1336, %v1784
        %v1849 = vmul.f32 %v1337, %v1785
        %v1850 = vmul.f32 %v1338, %v1786
        %v1851 = vmul.f32 %v1339, %v1787
        %v1852 = vmul.f32 %v1340, %v1788
        %v1853 = vmul.f32 %v1341, %v1789
        %v1854 = vmul.f32 %v1342, %v1790
        %v1855 = vmul.f32 %v1343, %v1791
        %v1856 = vmul.f32 %v1344, %v1792
        %v1857 = vmul.f32 %v1345, %v1793
        %v1858 = vmul.f32 %v1346, %v1794
        %v1859 = vmul.f32 %v1347, %v1795
        %v1860 = vmul.f32 %v1348, %v1796
        %v1861 = vmul.f32 %v1349, %v1797
        %v1862 = vmul.f32 %v1350, %v1798
        %v1863 = vmul.f32 %v1351, %v1799
        %v1864 = vmul.f32 %v1352, %v1800
        %v1865 = vmul.f32 %v1353, %v1801
        %v1866 = vmul.f32 %v1354, %v1802
        %v1867 = vmul.f32 %v1355, %v1803
        %v1868 = vmul.f32 %v1356, %v1804
        %v1869 = vmul.f32 %v1357, %v1805
        %v1870 = vmul.f32 %v1358, %v1806
        %v1871 = vmul.f32 %v1359, %v1807
        %v1872 = vmul.f32 %v1360, %v1808
        %v1873 = vmul.f32 %v1361, %v1809
        %v1874 = vmul.f32 %v1362, %v1810
        %v1875 = vmul.f32 %v1363, %v1811
        %v1876 = vmul.f32 %v1364, %v1812
        %v1877 = vmul.f32 %v1365, %v1813
        %v1878 = vmul.f32 %v1366, %v1814
        %v1879 = vmul.f32 %v1367, %v1815
        %v1880 = vmul.f32 %v1368, %v1816
        %v1881 = vmul.f32 %v1369, %v1817
        %v1882 = vmul.f32 %v1370, %v1818
        %v1883 = vmul.f32 %v1371, %v1819
        %v1884 = vmul.f32 %v1372, %v1820
        %v1885 = vmul.f32 %v1373, %v1821
        %v1886 = vmul.f32 %v1374, %v1822
        %v1887 = vmul.f32 %v1375, %v1823
        %v1888 = vmul.f32 %v1376, %v1824
        %v1889 = vmul.f32 %v1377, %v1825
        %v1890 = vmul.f32 %v1378, %v1826
        %v1891 = vmul.f32 %v1379, %v1827
        %v1892 = vmul.f32 %v1380, %v1828
        %v1893 = vmul.f32 %v1381, %v1829
        %v1894 = vmul.f32 %v1382, %v1830
        %v1895 = vmul.f32 %v1383, %v1831
        %v1896 = vmul.f32 %v1384, %v1832
        %v1897 = vmul.f32 %v1385, %v1833
        %v1898 = vpack.c.bf16 %v1838, %v1834
        %v1899 = vpack.c.bf16 %v1839, %v1835
        %v1900 = vpack.c.bf16 %v1840, %v1836
        %v1901 = vpack.c.bf16 %v1841, %v1837
        %v1902 = vpack.c.bf16 %v1846, %v1842
        %v1903 = vpack.c.bf16 %v1847, %v1843
        %v1904 = vpack.c.bf16 %v1848, %v1844
        %v1905 = vpack.c.bf16 %v1849, %v1845
        %v1906 = vpack.c.bf16 %v1854, %v1850
        %v1907 = vpack.c.bf16 %v1855, %v1851
        %v1908 = vpack.c.bf16 %v1856, %v1852
        %v1909 = vpack.c.bf16 %v1857, %v1853
        %v1910 = vpack.c.bf16 %v1862, %v1858
        %v1911 = vpack.c.bf16 %v1863, %v1859
        %v1912 = vpack.c.bf16 %v1864, %v1860
        %v1913 = vpack.c.bf16 %v1865, %v1861
        %v1914 = vpack.c.bf16 %v1870, %v1866
        %v1915 = vpack.c.bf16 %v1871, %v1867
        %v1916 = vpack.c.bf16 %v1872, %v1868
        %v1917 = vpack.c.bf16 %v1873, %v1869
        %v1918 = vpack.c.bf16 %v1878, %v1874
        %v1919 = vpack.c.bf16 %v1879, %v1875
        %v1920 = vpack.c.bf16 %v1880, %v1876
        %v1921 = vpack.c.bf16 %v1881, %v1877
        %v1922 = vpack.c.bf16 %v1886, %v1882
        %v1923 = vpack.c.bf16 %v1887, %v1883
        %v1924 = vpack.c.bf16 %v1888, %v1884
        %v1925 = vpack.c.bf16 %v1889, %v1885
        %v1926 = vpack.c.bf16 %v1894, %v1890
        %v1927 = vpack.c.bf16 %v1895, %v1891
        %v1928 = vpack.c.bf16 %v1896, %v1892
        %v1929 = vpack.c.bf16 %v1897, %v1893
        %v1930 = vld [vmem:[#allocation10] sm:$0xf]
        %v1931 = vld [vmem:[#allocation10 + $0x4] sm:$0xf]
        %v1932 = vld [vmem:[#allocation10 + $0x8] sm:$0xf]
        %v1933 = vld [vmem:[#allocation10 + $0xc] sm:$0xf]
        %v1934 = vld [vmem:[#allocation10 + $0x10] sm:$0xf]
        %v1935 = vld [vmem:[#allocation10 + $0x14] sm:$0xf]
        %v1936 = vld [vmem:[#allocation10 + $0x18] sm:$0xf]
        %v1937 = vld [vmem:[#allocation10 + $0x1c] sm:$0xf]
        %v1938 = vld [vmem:[#allocation10 + $0x20] sm:$0xf]
        %v1939 = vld [vmem:[#allocation10 + $0x24] sm:$0xf]
        %v1940 = vld [vmem:[#allocation10 + $0x28] sm:$0xf]
        %v1941 = vld [vmem:[#allocation10 + $0x2c] sm:$0xf]
        %v1942 = vld [vmem:[#allocation10 + $0x30] sm:$0xf]
        %v1943 = vld [vmem:[#allocation10 + $0x34] sm:$0xf]
        %v1944 = vld [vmem:[#allocation10 + $0x38] sm:$0xf]
        %v1945 = vld [vmem:[#allocation10 + $0x3c] sm:$0xf]
        %v1946 = vld [vmem:[#allocation10 + $0x40] sm:$0xf]
        %v1947 = vld [vmem:[#allocation10 + $0x44] sm:$0xf]
        %v1948 = vld [vmem:[#allocation10 + $0x48] sm:$0xf]
        %v1949 = vld [vmem:[#allocation10 + $0x4c] sm:$0xf]
        %v1950 = vld [vmem:[#allocation10 + $0x50] sm:$0xf]
        %v1951 = vld [vmem:[#allocation10 + $0x54] sm:$0xf]
        %v1952 = vld [vmem:[#allocation10 + $0x58] sm:$0xf]
        %v1953 = vld [vmem:[#allocation10 + $0x5c] sm:$0xf]
        %v1954 = vld [vmem:[#allocation10 + $0x60] sm:$0xf]
        %v1955 = vld [vmem:[#allocation10 + $0x64] sm:$0xf]
        %v1956 = vld [vmem:[#allocation10 + $0x68] sm:$0xf]
        %v1957 = vld [vmem:[#allocation10 + $0x6c] sm:$0xf]
        %v1958 = vld [vmem:[#allocation10 + $0x70] sm:$0xf]
        %v1959 = vld [vmem:[#allocation10 + $0x74] sm:$0xf]
        %v1960 = vld [vmem:[#allocation10 + $0x78] sm:$0xf]
        %v1961 = vld [vmem:[#allocation10 + $0x7c] sm:$0xf]
        %v1962 = vld [vmem:[#allocation10 + $0x80] sm:$0xf]
        %v1963 = vld [vmem:[#allocation10 + $0x84] sm:$0xf]
        %v1964 = vld [vmem:[#allocation10 + $0x88] sm:$0xf]
        %v1965 = vld [vmem:[#allocation10 + $0x8c] sm:$0xf]
        %v1966 = vld [vmem:[#allocation10 + $0x90] sm:$0xf]
        %v1967 = vld [vmem:[#allocation10 + $0x94] sm:$0xf]
        %v1968 = vld [vmem:[#allocation10 + $0x98] sm:$0xf]
        %v1969 = vld [vmem:[#allocation10 + $0x9c] sm:$0xf]
        %v1970 = vld [vmem:[#allocation10 + $0xa0] sm:$0xf]
        %v1971 = vld [vmem:[#allocation10 + $0xa4] sm:$0xf]
        %v1972 = vld [vmem:[#allocation10 + $0xa8] sm:$0xf]
        %v1973 = vld [vmem:[#allocation10 + $0xac] sm:$0xf]
        %v1974 = vld [vmem:[#allocation10 + $0xb0] sm:$0xf]
        %v1975 = vld [vmem:[#allocation10 + $0xb4] sm:$0xf]
        %v1976 = vld [vmem:[#allocation10 + $0xb8] sm:$0xf]
        %v1977 = vld [vmem:[#allocation10 + $0xbc] sm:$0xf]
        %v1978 = vld [vmem:[#allocation10 + $0xc0] sm:$0xf]
        %v1979 = vld [vmem:[#allocation10 + $0xc4] sm:$0xf]
        %v1980 = vld [vmem:[#allocation10 + $0xc8] sm:$0xf]
        %v1981 = vld [vmem:[#allocation10 + $0xcc] sm:$0xf]
        %v1982 = vld [vmem:[#allocation10 + $0xd0] sm:$0xf]
        %v1983 = vld [vmem:[#allocation10 + $0xd4] sm:$0xf]
        %v1984 = vld [vmem:[#allocation10 + $0xd8] sm:$0xf]
        %v1985 = vld [vmem:[#allocation10 + $0xdc] sm:$0xf]
        %v1986 = vld [vmem:[#allocation10 + $0xe0] sm:$0xf]
        %v1987 = vld [vmem:[#allocation10 + $0xe4] sm:$0xf]
        %v1988 = vld [vmem:[#allocation10 + $0xe8] sm:$0xf]
        %v1989 = vld [vmem:[#allocation10 + $0xec] sm:$0xf]
        %v1990 = vld [vmem:[#allocation10 + $0xf0] sm:$0xf]
        %v1991 = vld [vmem:[#allocation10 + $0xf4] sm:$0xf]
        %v1992 = vld [vmem:[#allocation10 + $0xf8] sm:$0xf]
        %v1993 = vld [vmem:[#allocation10 + $0xfc] sm:$0xf]
        %v1994 = vlaneseq
        %v1995 = vshrl.u32 %v1994, 7
        %v1996 = vsub.s32 0, %v1995
        %v1997 = vrot.slane %v419, %v1996
        %v2062 = vunpack.c.l.b16 %v1930
        %v2063 = vunpack.c.l.b16 %v1931
        %v2064 = vunpack.c.l.b16 %v1932
        %v2065 = vunpack.c.l.b16 %v1933
        %v2066 = vunpack.c.l.b16 %v1934
        %v2067 = vunpack.c.l.b16 %v1935
        %v2068 = vunpack.c.l.b16 %v1936
        %v2069 = vunpack.c.l.b16 %v1937
        %v2070 = vunpack.c.l.b16 %v1938
        %v2071 = vunpack.c.l.b16 %v1939
        %v2072 = vunpack.c.l.b16 %v1940
        %v2073 = vunpack.c.l.b16 %v1941
        %v2074 = vunpack.c.l.b16 %v1942
        %v2075 = vunpack.c.l.b16 %v1943
        %v2076 = vunpack.c.l.b16 %v1944
        %v2077 = vunpack.c.l.b16 %v1945
        %v2078 = vunpack.c.l.b16 %v1946
        %v2079 = vunpack.c.l.b16 %v1947
        %v2080 = vunpack.c.l.b16 %v1948
        %v2081 = vunpack.c.l.b16 %v1949
        %v2082 = vunpack.c.l.b16 %v1950
        %v2083 = vunpack.c.l.b16 %v1951
        %v2084 = vunpack.c.l.b16 %v1952
        %v2085 = vunpack.c.l.b16 %v1953
        %v2086 = vunpack.c.l.b16 %v1954
        %v2087 = vunpack.c.l.b16 %v1955
        %v2088 = vunpack.c.l.b16 %v1956
        %v2089 = vunpack.c.l.b16 %v1957
        %v2090 = vunpack.c.l.b16 %v1958
        %v2091 = vunpack.c.l.b16 %v1959
        %v2092 = vunpack.c.l.b16 %v1960
        %v2093 = vunpack.c.l.b16 %v1961
        %v2094 = vunpack.c.l.b16 %v1962
        %v2095 = vunpack.c.l.b16 %v1963
        %v2096 = vunpack.c.l.b16 %v1964
        %v2097 = vunpack.c.l.b16 %v1965
        %v2098 = vunpack.c.l.b16 %v1966
        %v2099 = vunpack.c.l.b16 %v1967
        %v2100 = vunpack.c.l.b16 %v1968
        %v2101 = vunpack.c.l.b16 %v1969
        %v2102 = vunpack.c.l.b16 %v1970
        %v2103 = vunpack.c.l.b16 %v1971
        %v2104 = vunpack.c.l.b16 %v1972
        %v2105 = vunpack.c.l.b16 %v1973
        %v2106 = vunpack.c.l.b16 %v1974
        %v2107 = vunpack.c.l.b16 %v1975
        %v2108 = vunpack.c.l.b16 %v1976
        %v2109 = vunpack.c.l.b16 %v1977
        %v2110 = vunpack.c.l.b16 %v1978
        %v2111 = vunpack.c.l.b16 %v1979
        %v2112 = vunpack.c.l.b16 %v1980
        %v2113 = vunpack.c.l.b16 %v1981
        %v2114 = vunpack.c.l.b16 %v1982
        %v2115 = vunpack.c.l.b16 %v1983
        %v2116 = vunpack.c.l.b16 %v1984
        %v2117 = vunpack.c.l.b16 %v1985
        %v2118 = vunpack.c.l.b16 %v1986
        %v2119 = vunpack.c.l.b16 %v1987
        %v2120 = vunpack.c.l.b16 %v1988
        %v2121 = vunpack.c.l.b16 %v1989
        %v2122 = vunpack.c.l.b16 %v1990
        %v2123 = vunpack.c.l.b16 %v1991
        %v2124 = vunpack.c.l.b16 %v1992
        %v2125 = vunpack.c.l.b16 %v1993
        %v2126 = vpack.c.b16 %v2063, %v2062
        %v2127 = vpack.c.b16 %v2065, %v2064
        %v2128 = vpack.c.b16 %v2067, %v2066
        %v2129 = vpack.c.b16 %v2069, %v2068
        %v2130 = vpack.c.b16 %v2071, %v2070
        %v2131 = vpack.c.b16 %v2073, %v2072
        %v2132 = vpack.c.b16 %v2075, %v2074
        %v2133 = vpack.c.b16 %v2077, %v2076
        %v2134 = vpack.c.b16 %v2079, %v2078
        %v2135 = vpack.c.b16 %v2081, %v2080
        %v2136 = vpack.c.b16 %v2083, %v2082
        %v2137 = vpack.c.b16 %v2085, %v2084
        %v2138 = vpack.c.b16 %v2087, %v2086
        %v2139 = vpack.c.b16 %v2089, %v2088
        %v2140 = vpack.c.b16 %v2091, %v2090
        %v2141 = vpack.c.b16 %v2093, %v2092
        %v2142 = vpack.c.b16 %v2095, %v2094
        %v2143 = vpack.c.b16 %v2097, %v2096
        %v2144 = vpack.c.b16 %v2099, %v2098
        %v2145 = vpack.c.b16 %v2101, %v2100
        %v2146 = vpack.c.b16 %v2103, %v2102
        %v2147 = vpack.c.b16 %v2105, %v2104
        %v2148 = vpack.c.b16 %v2107, %v2106
        %v2149 = vpack.c.b16 %v2109, %v2108
        %v2150 = vpack.c.b16 %v2111, %v2110
        %v2151 = vpack.c.b16 %v2113, %v2112
        %v2152 = vpack.c.b16 %v2115, %v2114
        %v2153 = vpack.c.b16 %v2117, %v2116
        %v2154 = vpack.c.b16 %v2119, %v2118
        %v2155 = vpack.c.b16 %v2121, %v2120
        %v2156 = vpack.c.b16 %v2123, %v2122
        %v2157 = vpack.c.b16 %v2125, %v2124
        %2190 = vmatprep.subr.bf16.mxu0 0
        %2191 = vmatpush1.bf16.msra.mxu0 %v2133
        %2192 = vmatprep.subr.bf16.mxu0 0
        %2193 = vmatpush1.bf16.msra.mxu0 %v2132
        %2194 = vmatprep.subr.bf16.mxu0 0
        %2195 = vmatpush1.bf16.msra.mxu0 %v2131
        %2196 = vmatprep.subr.bf16.mxu0 0
        %2197 = vmatpush1.bf16.msra.mxu0 %v2130
        %2198 = vmatprep.subr.bf16.mxu0 0
        %2199 = vmatpush1.bf16.msra.mxu0 %v2129
        %2200 = vmatprep.subr.bf16.mxu0 0
        %2201 = vmatpush1.bf16.msra.mxu0 %v2128
        %2202 = vmatprep.subr.bf16.mxu0 0
        %2203 = vmatpush1.bf16.msra.mxu0 %v2127
        %2204 = vmatprep.subr.bf16.mxu0 0
        %2205 = vmatpush1.bf16.msra.mxu0 %v2126
        %2206 = vmatprep.subr.bf16.mxu0 0
        %2207 = vmatpush2.bf16.msra.mxu0 %v2141
        %2208 = vmatprep.subr.bf16.mxu0 0
        %2209 = vmatpush2.bf16.msra.mxu0 %v2140
        %2210 = vmatprep.subr.bf16.mxu0 0
        %2211 = vmatpush2.bf16.msra.mxu0 %v2139
        %2212 = vmatprep.subr.bf16.mxu0 0
        %2213 = vmatpush2.bf16.msra.mxu0 %v2138
        %2214 = vmatprep.subr.bf16.mxu0 0
        %2215 = vmatpush2.bf16.msra.mxu0 %v2137
        %2216 = vmatprep.subr.bf16.mxu0 0
        %2217 = vmatpush2.bf16.msra.mxu0 %v2136
        %2218 = vmatprep.subr.bf16.mxu0 0
        %2219 = vmatpush2.bf16.msra.mxu0 %v2135
        %2220 = vmatprep.subr.bf16.mxu0 0
        %2221 = vmatpush2.bf16.msra.mxu0 %v2134
        %2222 = vmatprep.mubr.bf16.mxu0 %v1899
        %2223 = vmatmul.mubr.bf16.gmra.mxu0 %v1898
        %v2224 = vpop.f32.mrf.mxu0
        %v2225 = vadd.f32 %v1997, %v2224
        %v2226 = vpop.f32.mrf.mxu0
        %v2227 = vpop.f32.mrf.mxu0
        %v2228 = vadd.f32 %v1997, %v2227
        %v2229 = vpop.f32.mrf.mxu0
        %2230 = vmatprep.mubr.bf16.mxu0 %v1903
        %2231 = vmatmul.mubr.bf16.gmra.mxu0 %v1902
        %v2232 = vpop.f32.mrf.mxu0
        %v2233 = vadd.f32 %v1997, %v2232
        %v2234 = vpop.f32.mrf.mxu0
        %v2235 = vpop.f32.mrf.mxu0
        %v2236 = vadd.f32 %v1997, %v2235
        %v2237 = vpop.f32.mrf.mxu0
        %2238 = vmatprep.mubr.bf16.mxu0 %v1907
        %2239 = vmatmul.mubr.bf16.gmra.mxu0 %v1906
        %v2240 = vpop.f32.mrf.mxu0
        %v2241 = vadd.f32 %v1997, %v2240
        %v2242 = vpop.f32.mrf.mxu0
        %v2243 = vpop.f32.mrf.mxu0
        %v2244 = vadd.f32 %v1997, %v2243
        %v2245 = vpop.f32.mrf.mxu0
        %2246 = vmatprep.mubr.bf16.mxu0 %v1911
        %2247 = vmatmul.mubr.bf16.gmra.mxu0 %v1910
        %v2248 = vpop.f32.mrf.mxu0
        %v2249 = vadd.f32 %v1997, %v2248
        %v2250 = vpop.f32.mrf.mxu0
        %v2251 = vpop.f32.mrf.mxu0
        %v2252 = vadd.f32 %v1997, %v2251
        %v2253 = vpop.f32.mrf.mxu0
        %2254 = vmatprep.mubr.bf16.mxu0 %v1915
        %2255 = vmatmul.mubr.bf16.gmra.mxu0 %v1914
        %v2256 = vpop.f32.mrf.mxu0
        %v2257 = vadd.f32 %v1997, %v2256
        %v2258 = vpop.f32.mrf.mxu0
        %v2259 = vpop.f32.mrf.mxu0
        %v2260 = vadd.f32 %v1997, %v2259
        %v2261 = vpop.f32.mrf.mxu0
        %2262 = vmatprep.mubr.bf16.mxu0 %v1919
        %2263 = vmatmul.mubr.bf16.gmra.mxu0 %v1918
        %v2264 = vpop.f32.mrf.mxu0
        %v2265 = vadd.f32 %v1997, %v2264
        %v2266 = vpop.f32.mrf.mxu0
        %v2267 = vpop.f32.mrf.mxu0
        %v2268 = vadd.f32 %v1997, %v2267
        %v2269 = vpop.f32.mrf.mxu0
        %2270 = vmatprep.mubr.bf16.mxu0 %v1923
        %2271 = vmatmul.mubr.bf16.gmra.mxu0 %v1922
        %v2272 = vpop.f32.mrf.mxu0
        %v2273 = vadd.f32 %v1997, %v2272
        %v2274 = vpop.f32.mrf.mxu0
        %v2275 = vpop.f32.mrf.mxu0
        %v2276 = vadd.f32 %v1997, %v2275
        %v2277 = vpop.f32.mrf.mxu0
        %2278 = vmatprep.mubr.bf16.mxu0 %v1927
        %2279 = vmatmul.mubr.bf16.gmra.mxu0 %v1926
        %v2280 = vpop.f32.mrf.mxu0
        %v2281 = vadd.f32 %v1997, %v2280
        %v2282 = vpop.f32.mrf.mxu0
        %v2283 = vpop.f32.mrf.mxu0
        %v2284 = vadd.f32 %v1997, %v2283
        %v2285 = vpop.f32.mrf.mxu0
        %2286 = vdwg.mxu0
        %2287 = vmatprep.subr.bf16.mxu0 0
        %2288 = vmatpush1.bf16.msra.mxu0 %v2149
        %2289 = vmatprep.subr.bf16.mxu0 0
        %2290 = vmatpush1.bf16.msra.mxu0 %v2148
        %2291 = vmatprep.subr.bf16.mxu0 0
        %2292 = vmatpush1.bf16.msra.mxu0 %v2147
        %2293 = vmatprep.subr.bf16.mxu0 0
        %2294 = vmatpush1.bf16.msra.mxu0 %v2146
        %2295 = vmatprep.subr.bf16.mxu0 0
        %2296 = vmatpush1.bf16.msra.mxu0 %v2145
        %2297 = vmatprep.subr.bf16.mxu0 0
        %2298 = vmatpush1.bf16.msra.mxu0 %v2144
        %2299 = vmatprep.subr.bf16.mxu0 0
        %2300 = vmatpush1.bf16.msra.mxu0 %v2143
        %2301 = vmatprep.subr.bf16.mxu0 0
        %2302 = vmatpush1.bf16.msra.mxu0 %v2142
        %2303 = vmatprep.subr.bf16.mxu0 0
        %2304 = vmatpush2.bf16.msra.mxu0 %v2157
        %2305 = vmatprep.subr.bf16.mxu0 0
        %2306 = vmatpush2.bf16.msra.mxu0 %v2156
        %2307 = vmatprep.subr.bf16.mxu0 0
        %2308 = vmatpush2.bf16.msra.mxu0 %v2155
        %2309 = vmatprep.subr.bf16.mxu0 0
        %2310 = vmatpush2.bf16.msra.mxu0 %v2154
        %2311 = vmatprep.subr.bf16.mxu0 0
        %2312 = vmatpush2.bf16.msra.mxu0 %v2153
        %2313 = vmatprep.subr.bf16.mxu0 0
        %2314 = vmatpush2.bf16.msra.mxu0 %v2152
        %2315 = vmatprep.subr.bf16.mxu0 0
        %2316 = vmatpush2.bf16.msra.mxu0 %v2151
        %2317 = vmatprep.subr.bf16.mxu0 0
        %2318 = vmatpush2.bf16.msra.mxu0 %v2150
        %2319 = vmatprep.mubr.bf16.mxu0 %v1901
        %2320 = vmatmul.mubr.bf16.gmra.mxu0 %v1900
        %v2321 = vpop.f32.mrf.mxu0
        %v2322 = vadd.f32 %v2225, %v2321
        %v2323 = vpop.f32.mrf.mxu0
        %v2324 = vpop.f32.mrf.mxu0
        %v2325 = vadd.f32 %v2228, %v2324
        %v2326 = vpop.f32.mrf.mxu0
        %2327 = vmatprep.mubr.bf16.mxu0 %v1905
        %2328 = vmatmul.mubr.bf16.gmra.mxu0 %v1904
        %v2329 = vpop.f32.mrf.mxu0
        %v2330 = vadd.f32 %v2233, %v2329
        %v2331 = vpop.f32.mrf.mxu0
        %v2332 = vpop.f32.mrf.mxu0
        %v2333 = vadd.f32 %v2236, %v2332
        %v2334 = vpop.f32.mrf.mxu0
        %2335 = vmatprep.mubr.bf16.mxu0 %v1909
        %2336 = vmatmul.mubr.bf16.gmra.mxu0 %v1908
        %v2337 = vpop.f32.mrf.mxu0
        %v2338 = vadd.f32 %v2241, %v2337
        %v2339 = vpop.f32.mrf.mxu0
        %v2340 = vpop.f32.mrf.mxu0
        %v2341 = vadd.f32 %v2244, %v2340
        %v2342 = vpop.f32.mrf.mxu0
        %2343 = vmatprep.mubr.bf16.mxu0 %v1913
        %2344 = vmatmul.mubr.bf16.gmra.mxu0 %v1912
        %v2345 = vpop.f32.mrf.mxu0
        %v2346 = vadd.f32 %v2249, %v2345
        %v2347 = vpop.f32.mrf.mxu0
        %v2348 = vpop.f32.mrf.mxu0
        %v2349 = vadd.f32 %v2252, %v2348
        %v2350 = vpop.f32.mrf.mxu0
        %2351 = vmatprep.mubr.bf16.mxu0 %v1917
        %2352 = vmatmul.mubr.bf16.gmra.mxu0 %v1916
        %v2353 = vpop.f32.mrf.mxu0
        %v2354 = vadd.f32 %v2257, %v2353
        %v2355 = vpop.f32.mrf.mxu0
        %v2356 = vpop.f32.mrf.mxu0
        %v2357 = vadd.f32 %v2260, %v2356
        %v2358 = vpop.f32.mrf.mxu0
        %2359 = vmatprep.mubr.bf16.mxu0 %v1921
        %2360 = vmatmul.mubr.bf16.gmra.mxu0 %v1920
        %v2361 = vpop.f32.mrf.mxu0
        %v2362 = vadd.f32 %v2265, %v2361
        %v2363 = vpop.f32.mrf.mxu0
        %v2364 = vpop.f32.mrf.mxu0
        %v2365 = vadd.f32 %v2268, %v2364
        %v2366 = vpop.f32.mrf.mxu0
        %2367 = vmatprep.mubr.bf16.mxu0 %v1925
        %2368 = vmatmul.mubr.bf16.gmra.mxu0 %v1924
        %v2369 = vpop.f32.mrf.mxu0
        %v2370 = vadd.f32 %v2273, %v2369
        %v2371 = vpop.f32.mrf.mxu0
        %v2372 = vpop.f32.mrf.mxu0
        %v2373 = vadd.f32 %v2276, %v2372
        %v2374 = vpop.f32.mrf.mxu0
        %2375 = vmatprep.mubr.bf16.mxu0 %v1929
        %2376 = vmatmul.mubr.bf16.gmra.mxu0 %v1928
        %v2377 = vpop.f32.mrf.mxu0
        %v2378 = vadd.f32 %v2281, %v2377
        %v2379 = vpop.f32.mrf.mxu0
        %v2380 = vpop.f32.mrf.mxu0
        %v2381 = vadd.f32 %v2284, %v2380
        %v2382 = vpop.f32.mrf.mxu0
        %2383 = vdwg.mxu0
        %v2384 = vadd.f32 %v609, %v2322
        %v2385 = vadd.f32 %v610, %v2325
        %v2386 = vadd.f32 %v611, %v2330
        %v2387 = vadd.f32 %v612, %v2333
        %v2388 = vadd.f32 %v613, %v2338
        %v2389 = vadd.f32 %v614, %v2341
        %v2390 = vadd.f32 %v615, %v2346
        %v2391 = vadd.f32 %v616, %v2349
        %v2392 = vadd.f32 %v617, %v2354
        %v2393 = vadd.f32 %v618, %v2357
        %v2394 = vadd.f32 %v619, %v2362
        %v2395 = vadd.f32 %v620, %v2365
        %v2396 = vadd.f32 %v621, %v2370
        %v2397 = vadd.f32 %v622, %v2373
        %v2398 = vadd.f32 %v623, %v2378
        %v2399 = vadd.f32 %v624, %v2381
        %2400 = vst [vmem:[%s379] sm:$0xff] %v2384
        %2401 = vst [vmem:[%s379 + $0x8] sm:$0xff] %v2385
        %2402 = vst [vmem:[%s379 + $0x10] sm:$0xff] %v2386
        %2403 = vst [vmem:[%s379 + $0x18] sm:$0xff] %v2387
        %2404 = vst [vmem:[%s379 + $0x20] sm:$0xff] %v2388
        %2405 = vst [vmem:[%s379 + $0x28] sm:$0xff] %v2389
        %2406 = vst [vmem:[%s379 + $0x30] sm:$0xff] %v2390
        %2407 = vst [vmem:[%s379 + $0x38] sm:$0xff] %v2391
        %2408 = vst [vmem:[%s379 + $0x40] sm:$0xff] %v2392
        %2409 = vst [vmem:[%s379 + $0x48] sm:$0xff] %v2393
        %2410 = vst [vmem:[%s379 + $0x50] sm:$0xff] %v2394
        %2411 = vst [vmem:[%s379 + $0x58] sm:$0xff] %v2395
        %2412 = vst [vmem:[%s379 + $0x60] sm:$0xff] %v2396
        %2413 = vst [vmem:[%s379 + $0x68] sm:$0xff] %v2397
        %2414 = vst [vmem:[%s379 + $0x70] sm:$0xff] %v2398
        %2415 = vst [vmem:[%s379 + $0x78] sm:$0xff] %v2399
        %s2416 = sand.u32 %s193, 1
        %s2417 = scalar_lea.sflag [#allocation4], %s2416
        %s2418 = sand.u32 %s193, 1
        %s2419 = smul.addr %s2418, 128
        %s2420 = scalar_lea.vmem [#allocation11], %s2419
        // Predicated region
        $region69: #{tpu_custom_call.1} parent=47 // pred_check
          %p2421 = pneg %p203
        $region70: #{tpu_custom_call.1} parent=47 // pred_check_branch
          %2423 = sbr.rel (%p2421) target = $region72
        $region71: #{tpu_custom_call.1} parent=47 // pred_region
          %s2424 = smul.u32 16, %s28
          %s2426 = ssub.s32 2048, 2048
          %2427 = vsyncadd %s2417, %s2426
          %s2428 = smul.addr %s2424, 128
          %s2429 = scalar_lea.hbm %s7, %s2428
          %s2430 = sshll.u32 %s2420, 4
          %s2431 = int_to_ptr.vmem [resolvable:$true] %s2430
          %2436 = dma.vmem_to_hbm [thread:$0]  %s2431, 2048, %s2429, %s2417, 128, 128, 8
        $region72: #{tpu_custom_call.1} parent=47 // pred_fallthru
          _
      $region48: #{tpu_custom_call.1} parent=5 // pred_fallthru
        _
      %p2437 = scmp.le.s32.totalorder 2, %s23
      // Predicated region
      $region73: #{tpu_custom_call.1} parent=5 // pred_check
        %p2438 = pneg %p2437
      $region74: #{tpu_custom_call.1} parent=5 // pred_check_branch
        %2440 = sbr.rel (%p2438) target = $region76
      $region75: #{tpu_custom_call.1} parent=5 // pred_region
        %s2441 = ssub.s32 %s23, 2
        // Predicated region
        $region77: #{tpu_custom_call.1} parent=75 // pred_check
          %p2442 = pneg %p209
        $region78: #{tpu_custom_call.1} parent=75 // pred_check_branch
          %2444 = sbr.rel (%p2442) target = $region80
        $region79: #{tpu_custom_call.1} parent=75 // pred_region
          %s2445 = sand.u32 %s194, 1
          %s2446 = scalar_lea.sflag [#allocation4], %s2445
          %s2447 = sand.u32 %s194, 1
          %s2448 = smul.addr %s2447, 128
          %s2449 = scalar_lea.vmem [#allocation11], %s2448
          %2450 = dma.done %s2446, 2048
        $region80: #{tpu_custom_call.1} parent=75 // pred_fallthru
          _
      $region76: #{tpu_custom_call.1} parent=5 // pred_fallthru
        _
    $region6: #{tpu_custom_call.1} parent=1 // loop_footer
      %s27 = sadd.s32 1, %s23
    $region7: #{tpu_custom_call.1} parent=1 // loop_footer_branch
      %22 = sbr.rel target = $region3
    $region8: #{tpu_custom_call.1} parent=1 // loop_exit
      _
    %2451 = vsyncpa [#allocation3], 1
    %s2452 = scalar_lea.sflag [#allocation3], 1
    %2453 = vsyncpa %s2452, 1
    %2454 = vsyncpa [#allocation6], 1
    %s2455 = scalar_lea.sflag [#allocation6], 1
    %2456 = vsyncpa %s2455, 1
    %2457 = vsyncpa [#allocation9], 1
    %2458 = vsyncpa [#allocation4], 1
    %s2459 = scalar_lea.sflag [#allocation4], 1
    %2460 = vsyncpa %s2459, 1

// kernel: tpu_custom_call.1
$region0: #{tpu_custom_call.1}
  #allocation0 [shape = 'u32[]', space=smem, size = 0x4, offset = 0x4, fixed_abs, tag = 'smem constant byte address 0x4 - core index']
  #allocation1 [shape = 'u32[144,128]{1,0:T(1,128)}', space=vmem, size = 0x12000, scoped, tag = 'internal scratch']
  %s0 = inlined_call_operand.hbm [shape: f32[256,128], index: 0, kind: input, shape index: {}]
  %s1 = inlined_call_operand.hbm [shape: f32[256,128], index: 1, kind: input, shape index: {}]
  %s2 = inlined_call_operand.hbm [shape: bf16[128,128], index: 2, kind: input, shape index: {}]
  %s3 = inlined_call_operand.vmem [shape: f32[4,128], index: 3, kind: input, shape index: {}]
  %s4 = inlined_call_operand.hbm [shape: bf16[128,512], index: 4, kind: input, shape index: {}]
  %s5 = inlined_call_operand.vmem [shape: f32[1,512], index: 5, kind: input, shape index: {}]
  %s6 = inlined_call_operand.hbm [shape: bf16[512,128], index: 6, kind: input, shape index: {}]
  %s7 = inlined_call_operand.hbm [shape: f32[256,128], index: 7, kind: output, shape index: {}]
  %s8 = sld [smem:[#allocation0]]
  $region81: #{tpu_custom_call.1} parent=0
    _
  %s10 = ssub.s32 1, %s8
  %s11 = scalar_select 0, %s10, %s8
  $region1: #{tpu_custom_call.1} parent=0
    #allocation2 [shape = 'u8[131072]{0}', space=vmem, size = 0x20000, scoped, tag = 'input window, operand 0']
    #allocation3 [shape = 's32[2]{0}', space=sflag, size = 0x8, scoped, tag = 'scoped memory for tpu_custom_call.1']
    #allocation4 [shape = 's32[2]{0}', space=sflag, size = 0x8, scoped, tag = 'scoped memory for tpu_custom_call.1']
    #allocation5 [shape = 'u8[131072]{0}', space=vmem, size = 0x20000, scoped, tag = 'input window, operand 1']
    #allocation6 [shape = 's32[2]{0}', space=sflag, size = 0x8, scoped, tag = 'scoped memory for tpu_custom_call.1']
    #allocation7 [shape = 'u8[32768]{0}', space=vmem, size = 0x8000, scoped, tag = 'input window, operand 2, single buffered']
    #allocation8 [shape = 'u8[131072]{0}', space=vmem, size = 0x20000, scoped, tag = 'input window, operand 4, single buffered']
    #allocation9 [shape = 's32[1]{0}', space=sflag, size = 0x4, scoped, tag = 'scoped memory for tpu_custom_call.1']
    #allocation10 [shape = 'u8[131072]{0}', space=vmem, size = 0x20000, scoped, tag = 'input window, operand 6, single buffered']
    #allocation11 [shape = 'u8[131072]{0}', space=vmem, size = 0x20000, scoped, tag = 'output window, operand 0']
    %12 = vsyncpa [#allocation3], 0
    %s13 = scalar_lea.sflag [#allocation3], 1
    %14 = vsyncpa %s13, 0
    %15 = vsyncpa [#allocation6], 0
    %s16 = scalar_lea.sflag [#allocation6], 1
    %17 = vsyncpa %s16, 0
    %18 = vsyncpa [#allocation9], 0
    %19 = vsyncpa [#allocation4], 0
    %s20 = scalar_lea.sflag [#allocation4], 1
    %21 = vsyncpa %s20, 0
    loop: start=0, step=1, limit=4
    $region2: #{tpu_custom_call.1} parent=1 // loop_pre_header
      _
    $region3: #{tpu_custom_call.1} parent=1 // loop_header
      %s23 = sphi 0, %s27
      %p24 = scmp.ge.s32.totalorder %s23, 4
      %s33 = sphi 0, %s35
      %s36 = sphi 0, %s33
      %s37 = sphi 0, %s36
      %s53 = sphi 0, %s37
      %s59 = sphi 0, %s61
      %s62 = sphi 0, %s59
      %s63 = sphi 0, %s62
      %s79 = sphi 0, %s63
      %s83 = sphi 0, %s83
      %s85 = sphi 0, %s83
      %s86 = sphi 0, %s85
      %s100 = sphi 0, %s86
      %s104 = sphi 0, %s104
      %s106 = sphi 0, %s104
      %s107 = sphi 0, %s106
      %s121 = sphi 0, %s107
      %s125 = sphi 0, %s125
      %s127 = sphi 0, %s125
      %s128 = sphi 0, %s127
      %s142 = sphi 0, %s128
      %s146 = sphi 0, %s146
      %s148 = sphi 0, %s146
      %s149 = sphi 0, %s148
      %s163 = sphi 0, %s149
      %s167 = sphi 0, %s167
      %s169 = sphi 0, %s167
      %s170 = sphi 0, %s169
      %s184 = sphi 0, %s170
      %s190 = sphi 0, %s192
      %s193 = sphi 0, %s190
      %s194 = sphi 0, %s193
      %s210 = sphi 0, %s194
    $region4: #{tpu_custom_call.1} parent=1 // loop_header_branch
      %26 = sbr.rel (%p24) target = $region8
    $region5: #{tpu_custom_call.1} parent=1 // loop_body
      %s28 = ssub.s32 %s23, 1
      %s29 = ssub.s32 %s23, 2
      %s30 = sadd.s32 %s23, 1
      %s31 = ssub.s32 %s23, %s30
      %p32 = scmp.eq.s32.totalorder %s31, 0
      %s34 = sadd.s32 %s33, 1
      %s35 = scalar_select %p32, %s33, %s34
      %p38 = pneg %p32
      %p39 = scmp.eq.s32.totalorder %s23, 1
      %p40 = por %p38, %p39
      %p41 = scmp.ne.s32.totalorder %s33, %s36
      %p42 = scmp.eq.s32.totalorder %s23, 0
      %p43 = por %p41, %p42
      %p44 = scmp.ne.s32.totalorder %s33, %s36
      %p45 = scmp.eq.s32.totalorder %s28, 1
      %p46 = por %p44, %p45
      %p47 = scmp.ne.s32.totalorder %s36, %s37
      %p48 = scmp.eq.s32.totalorder %s28, 0
      %p49 = por %p47, %p48
      %p50 = scmp.ne.s32.totalorder %s36, %s37
      %p51 = scmp.eq.s32.totalorder %s29, 1
      %p52 = por %p50, %p51
      %p54 = scmp.ne.s32.totalorder %s37, %s53
      %p55 = scmp.eq.s32.totalorder %s29, 0
      %p56 = por %p54, %p55
      %s57 = ssub.s32 %s23, %s30
      %p58 = scmp.eq.s32.totalorder %s57, 0
      %s60 = sadd.s32 %s59, 1
      %s61 = scalar_select %p58, %s59, %s60
      %p64 = pneg %p58
      %p65 = scmp.eq.s32.totalorder %s23, 1
      %p66 = por %p64, %p65
      %p67 = scmp.ne.s32.totalorder %s59, %s62
      %p68 = scmp.eq.s32.totalorder %s23, 0
      %p69 = por %p67, %p68
      %p70 = scmp.ne.s32.totalorder %s59, %s62
      %p71 = scmp.eq.s32.totalorder %s28, 1
      %p72 = por %p70, %p71
      %p73 = scmp.ne.s32.totalorder %s62, %s63
      %p74 = scmp.eq.s32.totalorder %s28, 0
      %p75 = por %p73, %p74
      %p76 = scmp.ne.s32.totalorder %s62, %s63
      %p77 = scmp.eq.s32.totalorder %s29, 1
      %p78 = por %p76, %p77
      %p80 = scmp.ne.s32.totalorder %s63, %s79
      %p81 = scmp.eq.s32.totalorder %s29, 0
      %p82 = por %p80, %p81
      %s84 = sadd.s32 %s83, 1
      %p87 = scmp.eq.s32.totalorder %s23, 1
      %p88 = scmp.ne.s32.totalorder %s83, %s85
      %p89 = scmp.eq.s32.totalorder %s23, 0
      %p90 = por %p88, %p89
      %p91 = scmp.ne.s32.totalorder %s83, %s85
      %p92 = scmp.eq.s32.totalorder %s28, 1
      %p93 = por %p91, %p92
      %p94 = scmp.ne.s32.totalorder %s85, %s86
      %p95 = scmp.eq.s32.totalorder %s28, 0
      %p96 = por %p94, %p95
      %p97 = scmp.ne.s32.totalorder %s85, %s86
      %p98 = scmp.eq.s32.totalorder %s29, 1
      %p99 = por %p97, %p98
      %p101 = scmp.ne.s32.totalorder %s86, %s100
      %p102 = scmp.eq.s32.totalorder %s29, 0
      %p103 = por %p101, %p102
      %s105 = sadd.s32 %s104, 1
      %p108 = scmp.eq.s32.totalorder %s23, 1
      %p109 = scmp.ne.s32.totalorder %s104, %s106
      %p110 = scmp.eq.s32.totalorder %s23, 0
      %p111 = por %p109, %p110
      %p112 = scmp.ne.s32.totalorder %s104, %s106
      %p113 = scmp.eq.s32.totalorder %s28, 1
      %p114 = por %p112, %p113
      %p115 = scmp.ne.s32.totalorder %s106, %s107
      %p116 = scmp.eq.s32.totalorder %s28, 0
      %p117 = por %p115, %p116
      %p118 = scmp.ne.s32.totalorder %s106, %s107
      %p119 = scmp.eq.s32.totalorder %s29, 1
      %p120 = por %p118, %p119
      %p122 = scmp.ne.s32.totalorder %s107, %s121
      %p123 = scmp.eq.s32.totalorder %s29, 0
      %p124 = por %p122, %p123
      %s126 = sadd.s32 %s125, 1
      %p129 = scmp.eq.s32.totalorder %s23, 1
      %p130 = scmp.ne.s32.totalorder %s125, %s127
      %p131 = scmp.eq.s32.totalorder %s23, 0
      %p132 = por %p130, %p131
      %p133 = scmp.ne.s32.totalorder %s125, %s127
      %p134 = scmp.eq.s32.totalorder %s28, 1
      %p135 = por %p133, %p134
      %p136 = scmp.ne.s32.totalorder %s127, %s128
      %p137 = scmp.eq.s32.totalorder %s28, 0
      %p138 = por %p136, %p137
      %p139 = scmp.ne.s32.totalorder %s127, %s128
      %p140 = scmp.eq.s32.totalorder %s29, 1
      %p141 = por %p139, %p140
      %p143 = scmp.ne.s32.totalorder %s128, %s142
      %p144 = scmp.eq.s32.totalorder %s29, 0
      %p145 = por %p143, %p144
      %s147 = sadd.s32 %s146, 1
      %p150 = scmp.eq.s32.totalorder %s23, 1
      %p151 = scmp.ne.s32.totalorder %s146, %s148
      %p152 = scmp.eq.s32.totalorder %s23, 0
      %p153 = por %p151, %p152
      %p154 = scmp.ne.s32.totalorder %s146, %s148
      %p155 = scmp.eq.s32.totalorder %s28, 1
      %p156 = por %p154, %p155
      %p157 = scmp.ne.s32.totalorder %s148, %s149
      %p158 = scmp.eq.s32.totalorder %s28, 0
      %p159 = por %p157, %p158
      %p160 = scmp.ne.s32.totalorder %s148, %s149
      %p161 = scmp.eq.s32.totalorder %s29, 1
      %p162 = por %p160, %p161
      %p164 = scmp.ne.s32.totalorder %s149, %s163
      %p165 = scmp.eq.s32.totalorder %s29, 0
      %p166 = por %p164, %p165
      %s168 = sadd.s32 %s167, 1
      %p171 = scmp.eq.s32.totalorder %s23, 1
      %p172 = scmp.ne.s32.totalorder %s167, %s169
      %p173 = scmp.eq.s32.totalorder %s23, 0
      %p174 = por %p172, %p173
      %p175 = scmp.ne.s32.totalorder %s167, %s169
      %p176 = scmp.eq.s32.totalorder %s28, 1
      %p177 = por %p175, %p176
      %p178 = scmp.ne.s32.totalorder %s169, %s170
      %p179 = scmp.eq.s32.totalorder %s28, 0
      %p180 = por %p178, %p179
      %p181 = scmp.ne.s32.totalorder %s169, %s170
      %p182 = scmp.eq.s32.totalorder %s29, 1
      %p183 = por %p181, %p182
      %p185 = scmp.ne.s32.totalorder %s170, %s184
      %p186 = scmp.eq.s32.totalorder %s29, 0
      %p187 = por %p185, %p186
      %s188 = ssub.s32 %s23, %s30
      %p189 = scmp.eq.s32.totalorder %s188, 0
      %s191 = sadd.s32 %s190, 1
      %s192 = scalar_select %p189, %s190, %s191
      %p195 = pneg %p189
      %p196 = scmp.eq.s32.totalorder %s23, 1
      %p197 = por %p195, %p196
      %p198 = scmp.ne.s32.totalorder %s190, %s193
      %p199 = scmp.eq.s32.totalorder %s23, 0
      %p200 = por %p198, %p199
      %p201 = scmp.ne.s32.totalorder %s190, %s193
      %p202 = scmp.eq.s32.totalorder %s28, 1
      %p203 = por %p201, %p202
      %p204 = scmp.ne.s32.totalorder %s193, %s194
      %p205 = scmp.eq.s32.totalorder %s28, 0
      %p206 = por %p204, %p205
      %p207 = scmp.ne.s32.totalorder %s193, %s194
      %p208 = scmp.eq.s32.totalorder %s29, 1
      %p209 = por %p207, %p208
      %p211 = scmp.ne.s32.totalorder %s194, %s210
      %p212 = scmp.eq.s32.totalorder %s29, 0
      %p213 = por %p211, %p212
      %p214 = scmp.le.s32.totalorder 1, %s23
      %p215 = scmp.lt.s32.totalorder %s23, 3
      %p216 = pnand %p214, %p215
      %p217 = pneg %p216
      // Predicated region
      $region9: #{tpu_custom_call.1} parent=5 // pred_check
        _
      $region10: #{tpu_custom_call.1} parent=5 // pred_check_branch
        %219 = sbr.rel (%p216) target = $region12
      $region11: #{tpu_custom_call.1} parent=5 // pred_region
        %s220 = ssub.s32 %s23, 1
        // Predicated region
        $region13: #{tpu_custom_call.1} parent=11 // pred_check
          %p221 = pneg %p96
        $region14: #{tpu_custom_call.1} parent=11 // pred_check_branch
          %223 = sbr.rel (%p221) target = $region16
        $region15: #{tpu_custom_call.1} parent=11 // pred_region
          %s225 = ssub.s32 1024, 1024
          %226 = vsyncadd [#allocation6], %s225
          %s227 = sshll.u32 [#allocation7], 4
          %s228 = int_to_ptr.vmem [resolvable:$true] %s227
          %233 = dma.hbm_to_vmem [thread:$0]  %s2, 1024, %s228, [#allocation6], 64, 64, 4
        $region16: #{tpu_custom_call.1} parent=11 // pred_fallthru
          _
        // Predicated region
        $region17: #{tpu_custom_call.1} parent=11 // pred_check
          %p234 = pneg %p117
        $region18: #{tpu_custom_call.1} parent=11 // pred_check_branch
          %236 = sbr.rel (%p234) target = $region20
        $region19: #{tpu_custom_call.1} parent=11 // pred_region
          _
        $region20: #{tpu_custom_call.1} parent=11 // pred_fallthru
          _
        // Predicated region
        $region21: #{tpu_custom_call.1} parent=11 // pred_check
          %p237 = pneg %p138
        $region22: #{tpu_custom_call.1} parent=11 // pred_check_branch
          %239 = sbr.rel (%p237) target = $region24
        $region23: #{tpu_custom_call.1} parent=11 // pred_region
          %s241 = ssub.s32 4096, 4096
          %242 = vsyncadd [#allocation9], %s241
          %s243 = sshll.u32 [#allocation8], 4
          %s244 = int_to_ptr.vmem [resolvable:$true] %s243
          %249 = dma.hbm_to_vmem [thread:$0]  %s4, 4096, %s244, [#allocation9], 256, 256, 16
        $region24: #{tpu_custom_call.1} parent=11 // pred_fallthru
          _
        // Predicated region
        $region25: #{tpu_custom_call.1} parent=11 // pred_check
          %p250 = pneg %p159
        $region26: #{tpu_custom_call.1} parent=11 // pred_check_branch
          %252 = sbr.rel (%p250) target = $region28
        $region27: #{tpu_custom_call.1} parent=11 // pred_region
          _
        $region28: #{tpu_custom_call.1} parent=11 // pred_fallthru
          _
        // Predicated region
        $region29: #{tpu_custom_call.1} parent=11 // pred_check
          %p253 = pneg %p180
        $region30: #{tpu_custom_call.1} parent=11 // pred_check_branch
          %255 = sbr.rel (%p253) target = $region32
        $region31: #{tpu_custom_call.1} parent=11 // pred_region
          %s257 = ssub.s32 4096, 4096
          %258 = vsyncadd [#allocation9], %s257
          %s259 = sshll.u32 [#allocation10], 4
          %s260 = int_to_ptr.vmem [resolvable:$true] %s259
          %265 = dma.hbm_to_vmem [thread:$0]  %s6, 4096, %s260, [#allocation9], 64, 64, 4
        $region32: #{tpu_custom_call.1} parent=11 // pred_fallthru
          _
      $region12: #{tpu_custom_call.1} parent=5 // pred_fallthru
        _
      %p266 = scmp.lt.s32.totalorder %s23, 2
      // Predicated region
      $region33: #{tpu_custom_call.1} parent=5 // pred_check
        %p267 = pneg %p266
      $region34: #{tpu_custom_call.1} parent=5 // pred_check_branch
        %269 = sbr.rel (%p267) target = $region36
      $region35: #{tpu_custom_call.1} parent=5 // pred_region
        // Predicated region
        $region37: #{tpu_custom_call.1} parent=35 // pred_check
          %p270 = pneg %p43
        $region38: #{tpu_custom_call.1} parent=35 // pred_check_branch
          %272 = sbr.rel (%p270) target = $region40
        $region39: #{tpu_custom_call.1} parent=35 // pred_region
          %s273 = sand.u32 %s33, 1
          %s274 = scalar_lea.sflag [#allocation3], %s273
          %s275 = sand.u32 %s33, 1
          %s276 = smul.addr %s275, 128
          %s277 = scalar_lea.vmem [#allocation2], %s276
          %s278 = smul.u32 16, %s23
          %s280 = ssub.s32 2048, 2048
          %281 = vsyncadd %s274, %s280
          %s282 = smul.addr %s278, 128
          %s283 = scalar_lea.hbm %s0, %s282
          %s284 = sshll.u32 %s277, 4
          %s285 = int_to_ptr.vmem [resolvable:$true] %s284
          %290 = dma.hbm_to_vmem [thread:$0]  %s283, 2048, %s285, %s274, 128, 128, 8
        $region40: #{tpu_custom_call.1} parent=35 // pred_fallthru
          _
        // Predicated region
        $region41: #{tpu_custom_call.1} parent=35 // pred_check
          %p291 = pneg %p69
        $region42: #{tpu_custom_call.1} parent=35 // pred_check_branch
          %293 = sbr.rel (%p291) target = $region44
        $region43: #{tpu_custom_call.1} parent=35 // pred_region
          %s294 = sand.u32 %s23, 1
          %s295 = scalar_lea.sflag [#allocation6], %s294
          %s296 = sand.u32 %s59, 1
          %s297 = smul.addr %s296, 128
          %s298 = scalar_lea.vmem [#allocation5], %s297
          %s299 = smul.u32 16, %s23
          %s301 = ssub.s32 2048, 2048
          %302 = vsyncadd %s295, %s301
          %s303 = smul.addr %s299, 128
          %s304 = scalar_lea.hbm %s1, %s303
          %s305 = sshll.u32 %s298, 4
          %s306 = int_to_ptr.vmem [resolvable:$true] %s305
          %311 = dma.hbm_to_vmem [thread:$0]  %s304, 2048, %s306, %s295, 128, 128, 8
        $region44: #{tpu_custom_call.1} parent=35 // pred_fallthru
          _
      $region36: #{tpu_custom_call.1} parent=5 // pred_fallthru
        _
      %p312 = scmp.le.s32.totalorder 1, %s23
      %p313 = scmp.lt.s32.totalorder %s23, 3
      %p314 = pnand %p312, %p313
      %p315 = pneg %p314
      // Predicated region
      $region45: #{tpu_custom_call.1} parent=5 // pred_check
        _
      $region46: #{tpu_custom_call.1} parent=5 // pred_check_branch
        %317 = sbr.rel (%p314) target = $region48
      $region47: #{tpu_custom_call.1} parent=5 // pred_region
        %s318 = ssub.s32 %s23, 1
        %s319 = sand.u32 %s36, 1
        %s320 = scalar_lea.sflag [#allocation3], %s319
        %s321 = sand.u32 %s36, 1
        %s322 = smul.addr %s321, 128
        %s323 = scalar_lea.vmem [#allocation2], %s322
        // Predicated region
        $region49: #{tpu_custom_call.1} parent=47 // pred_check
          %p324 = pneg %p49
        $region50: #{tpu_custom_call.1} parent=47 // pred_check_branch
          %326 = sbr.rel (%p324) target = $region52
        $region51: #{tpu_custom_call.1} parent=47 // pred_region
          %327 = dma.done %s320, 2048
        $region52: #{tpu_custom_call.1} parent=47 // pred_fallthru
          _
        %s328 = sand.u32 %s28, 1
        %s329 = scalar_lea.sflag [#allocation6], %s328
        %s330 = sand.u32 %s62, 1
        %s331 = smul.addr %s330, 128
        %s332 = scalar_lea.vmem [#allocation5], %s331
        // Predicated region
        $region53: #{tpu_custom_call.1} parent=47 // pred_check
          %p333 = pneg %p75
        $region54: #{tpu_custom_call.1} parent=47 // pred_check_branch
          %335 = sbr.rel (%p333) target = $region56
        $region55: #{tpu_custom_call.1} parent=47 // pred_region
          %336 = dma.done %s329, 2048
        $region56: #{tpu_custom_call.1} parent=47 // pred_fallthru
          _
        // Predicated region
        $region57: #{tpu_custom_call.1} parent=47 // pred_check
          %p337 = pneg %p96
        $region58: #{tpu_custom_call.1} parent=47 // pred_check_branch
          %339 = sbr.rel (%p337) target = $region60
        $region59: #{tpu_custom_call.1} parent=47 // pred_region
          %340 = dma.done [#allocation6], 1024
        $region60: #{tpu_custom_call.1} parent=47 // pred_fallthru
          _
        // Predicated region
        $region61: #{tpu_custom_call.1} parent=47 // pred_check
          %p341 = pneg %p138
        $region62: #{tpu_custom_call.1} parent=47 // pred_check_branch
          %343 = sbr.rel (%p341) target = $region64
        $region63: #{tpu_custom_call.1} parent=47 // pred_region
          %344 = dma.done [#allocation9], 4096
        $region64: #{tpu_custom_call.1} parent=47 // pred_fallthru
          _
        // Predicated region
        $region65: #{tpu_custom_call.1} parent=47 // pred_check
          %p345 = pneg %p180
        $region66: #{tpu_custom_call.1} parent=47 // pred_check_branch
          %347 = sbr.rel (%p345) target = $region68
        $region67: #{tpu_custom_call.1} parent=47 // pred_region
          %348 = dma.done [#allocation9], 4096
        $region68: #{tpu_custom_call.1} parent=47 // pred_fallthru
          _
        %s349 = sand.u32 %s36, 1
        %s350 = scalar_lea.sflag [#allocation3], %s349
        %s351 = sand.u32 %s36, 1
        %s352 = smul.addr %s351, 128
        %s353 = scalar_lea.vmem [#allocation2], %s352
        %p354 = pneg %p49
        %p355 = pneg %p46
        %s356 = sand.u32 %s28, 1
        %s357 = scalar_lea.sflag [#allocation6], %s356
        %s358 = sand.u32 %s62, 1
        %s359 = smul.addr %s358, 128
        %s360 = scalar_lea.vmem [#allocation5], %s359
        %p361 = pneg %p75
        %p362 = pneg %p72
        %p363 = pneg %p96
        %p364 = pneg %p93
        %p365 = pneg %p117
        %p366 = pneg %p114
        %p367 = pneg %p138
        %p368 = pneg %p135
        %p369 = pneg %p159
        %p370 = pneg %p156
        %p371 = pneg %p180
        %p372 = pneg %p177
        %p373 = pneg %p206
        %p374 = pneg %p203
        %s375 = sand.u32 %s193, 1
        %s376 = scalar_lea.sflag [#allocation4], %s375
        %s377 = sand.u32 %s193, 1
        %s378 = smul.addr %s377, 128
        %s379 = scalar_lea.vmem [#allocation11], %s378
        %s380 = smul.u32 16, %s28
        %s381 = smul.u32 16, %s28
        %s382 = smul.u32 16, %s28
        %v384 = vld [vmem:[%s323] sm:$0xff]
        %v385 = vld [vmem:[%s323 + $0x8] sm:$0xff]
        %v386 = vld [vmem:[%s323 + $0x10] sm:$0xff]
        %v387 = vld [vmem:[%s323 + $0x18] sm:$0xff]
        %v388 = vld [vmem:[%s323 + $0x20] sm:$0xff]
        %v389 = vld [vmem:[%s323 + $0x28] sm:$0xff]
        %v390 = vld [vmem:[%s323 + $0x30] sm:$0xff]
        %v391 = vld [vmem:[%s323 + $0x38] sm:$0xff]
        %v392 = vld [vmem:[%s323 + $0x40] sm:$0xff]
        %v393 = vld [vmem:[%s323 + $0x48] sm:$0xff]
        %v394 = vld [vmem:[%s323 + $0x50] sm:$0xff]
        %v395 = vld [vmem:[%s323 + $0x58] sm:$0xff]
        %v396 = vld [vmem:[%s323 + $0x60] sm:$0xff]
        %v397 = vld [vmem:[%s323 + $0x68] sm:$0xff]
        %v398 = vld [vmem:[%s323 + $0x70] sm:$0xff]
        %v399 = vld [vmem:[%s323 + $0x78] sm:$0xff]
        %v400 = vld [vmem:[%s332] sm:$0xff]
        %v401 = vld [vmem:[%s332 + $0x8] sm:$0xff]
        %v402 = vld [vmem:[%s332 + $0x10] sm:$0xff]
        %v403 = vld [vmem:[%s332 + $0x18] sm:$0xff]
        %v404 = vld [vmem:[%s332 + $0x20] sm:$0xff]
        %v405 = vld [vmem:[%s332 + $0x28] sm:$0xff]
        %v406 = vld [vmem:[%s332 + $0x30] sm:$0xff]
        %v407 = vld [vmem:[%s332 + $0x38] sm:$0xff]
        %v408 = vld [vmem:[%s332 + $0x40] sm:$0xff]
        %v409 = vld [vmem:[%s332 + $0x48] sm:$0xff]
        %v410 = vld [vmem:[%s332 + $0x50] sm:$0xff]
        %v411 = vld [vmem:[%s332 + $0x58] sm:$0xff]
        %v412 = vld [vmem:[%s332 + $0x60] sm:$0xff]
        %v413 = vld [vmem:[%s332 + $0x68] sm:$0xff]
        %v414 = vld [vmem:[%s332 + $0x70] sm:$0xff]
        %v415 = vld [vmem:[%s332 + $0x78] sm:$0xff]
        %v416 = vld [vmem:[%s3] sm:$0x1]
        %v417 = vld [vmem:[%s3 + $0x1] sm:$0x1]
        %v418 = vld [vmem:[%s3 + $0x2] sm:$0x1]
        %v419 = vld [vmem:[%s3 + $0x3] sm:$0x1]
        %v420 = vpack.c.bf16 %v401, %v400
        %v421 = vpack.c.bf16 %v403, %v402
        %v422 = vpack.c.bf16 %v405, %v404
        %v423 = vpack.c.bf16 %v407, %v406
        %v424 = vpack.c.bf16 %v409, %v408
        %v425 = vpack.c.bf16 %v411, %v410
        %v426 = vpack.c.bf16 %v413, %v412
        %v427 = vpack.c.bf16 %v415, %v414
        %v428 = vld [vmem:[#allocation7] sm:$0xf]
        %v429 = vld [vmem:[#allocation7 + $0x4] sm:$0xf]
        %v430 = vld [vmem:[#allocation7 + $0x8] sm:$0xf]
        %v431 = vld [vmem:[#allocation7 + $0xc] sm:$0xf]
        %v432 = vld [vmem:[#allocation7 + $0x10] sm:$0xf]
        %v433 = vld [vmem:[#allocation7 + $0x14] sm:$0xf]
        %v434 = vld [vmem:[#allocation7 + $0x18] sm:$0xf]
        %v435 = vld [vmem:[#allocation7 + $0x1c] sm:$0xf]
        %v436 = vld [vmem:[#allocation7 + $0x20] sm:$0xf]
        %v437 = vld [vmem:[#allocation7 + $0x24] sm:$0xf]
        %v438 = vld [vmem:[#allocation7 + $0x28] sm:$0xf]
        %v439 = vld [vmem:[#allocation7 + $0x2c] sm:$0xf]
        %v440 = vld [vmem:[#allocation7 + $0x30] sm:$0xf]
        %v441 = vld [vmem:[#allocation7 + $0x34] sm:$0xf]
        %v442 = vld [vmem:[#allocation7 + $0x38] sm:$0xf]
        %v443 = vld [vmem:[#allocation7 + $0x3c] sm:$0xf]
        %v460 = vunpack.c.l.b16 %v428
        %v461 = vunpack.c.l.b16 %v429
        %v462 = vunpack.c.l.b16 %v430
        %v463 = vunpack.c.l.b16 %v431
        %v464 = vunpack.c.l.b16 %v432
        %v465 = vunpack.c.l.b16 %v433
        %v466 = vunpack.c.l.b16 %v434
        %v467 = vunpack.c.l.b16 %v435
        %v468 = vunpack.c.l.b16 %v436
        %v469 = vunpack.c.l.b16 %v437
        %v470 = vunpack.c.l.b16 %v438
        %v471 = vunpack.c.l.b16 %v439
        %v472 = vunpack.c.l.b16 %v440
        %v473 = vunpack.c.l.b16 %v441
        %v474 = vunpack.c.l.b16 %v442
        %v475 = vunpack.c.l.b16 %v443
        %v476 = vpack.c.b16 %v461, %v460
        %v477 = vpack.c.b16 %v463, %v462
        %v478 = vpack.c.b16 %v465, %v464
        %v479 = vpack.c.b16 %v467, %v466
        %v480 = vpack.c.b16 %v469, %v468
        %v481 = vpack.c.b16 %v471, %v470
        %v482 = vpack.c.b16 %v473, %v472
        %v483 = vpack.c.b16 %v475, %v474
        %492 = vmatprep.subr.bf16.mxu0 0
        %493 = vmatpush1.bf16.msra.mxu0 %v483
        %494 = vmatprep.subr.bf16.mxu0 0
        %495 = vmatpush1.bf16.msra.mxu0 %v482
        %496 = vmatprep.subr.bf16.mxu0 0
        %497 = vmatpush1.bf16.msra.mxu0 %v481
        %498 = vmatprep.subr.bf16.mxu0 0
        %499 = vmatpush1.bf16.msra.mxu0 %v480
        %500 = vmatprep.subr.bf16.mxu0 0
        %501 = vmatpush1.bf16.msra.mxu0 %v479
        %502 = vmatprep.subr.bf16.mxu0 0
        %503 = vmatpush1.bf16.msra.mxu0 %v478
        %504 = vmatprep.subr.bf16.mxu0 0
        %505 = vmatpush1.bf16.msra.mxu0 %v477
        %506 = vmatprep.subr.bf16.mxu0 0
        %507 = vmatpush1.bf16.msra.mxu0 %v476
        %508 = vmatprep.subr.bf16.mxu0 0
        %509 = vmatpush2.bf16.msra.mxu0 0
        %510 = vmatprep.subr.bf16.mxu0 0
        %511 = vmatpush2.bf16.msra.mxu0 0
        %512 = vmatprep.subr.bf16.mxu0 0
        %513 = vmatpush2.bf16.msra.mxu0 0
        %514 = vmatprep.subr.bf16.mxu0 0
        %515 = vmatpush2.bf16.msra.mxu0 0
        %516 = vmatprep.subr.bf16.mxu0 0
        %517 = vmatpush2.bf16.msra.mxu0 0
        %518 = vmatprep.subr.bf16.mxu0 0
        %519 = vmatpush2.bf16.msra.mxu0 0
        %520 = vmatprep.subr.bf16.mxu0 0
        %521 = vmatpush2.bf16.msra.mxu0 0
        %522 = vmatprep.subr.bf16.mxu0 0
        %523 = vmatpush2.bf16.msra.mxu0 0
        %524 = vmatprep.mubr.bf16.mxu0 0
        %525 = vmatmul.mubr.bf16.gmra.mxu0 %v420
        %v526 = vpop.f32.mrf.mxu0
        %v527 = vadd.f32 0.0, %v526
        %v528 = vpop.f32.mrf.mxu0
        %v529 = vpop.f32.mrf.mxu0
        %v530 = vadd.f32 0.0, %v529
        %v531 = vpop.f32.mrf.mxu0
        %532 = vmatprep.mubr.bf16.mxu0 0
        %533 = vmatmul.mubr.bf16.gmra.mxu0 %v421
        %v534 = vpop.f32.mrf.mxu0
        %v535 = vadd.f32 0.0, %v534
        %v536 = vpop.f32.mrf.mxu0
        %v537 = vpop.f32.mrf.mxu0
        %v538 = vadd.f32 0.0, %v537
        %v539 = vpop.f32.mrf.mxu0
        %540 = vmatprep.mubr.bf16.mxu0 0
        %541 = vmatmul.mubr.bf16.gmra.mxu0 %v422
        %v542 = vpop.f32.mrf.mxu0
        %v543 = vadd.f32 0.0, %v542
        %v544 = vpop.f32.mrf.mxu0
        %v545 = vpop.f32.mrf.mxu0
        %v546 = vadd.f32 0.0, %v545
        %v547 = vpop.f32.mrf.mxu0
        %548 = vmatprep.mubr.bf16.mxu0 0
        %549 = vmatmul.mubr.bf16.gmra.mxu0 %v423
        %v550 = vpop.f32.mrf.mxu0
        %v551 = vadd.f32 0.0, %v550
        %v552 = vpop.f32.mrf.mxu0
        %v553 = vpop.f32.mrf.mxu0
        %v554 = vadd.f32 0.0, %v553
        %v555 = vpop.f32.mrf.mxu0
        %556 = vmatprep.mubr.bf16.mxu0 0
        %557 = vmatmul.mubr.bf16.gmra.mxu0 %v424
        %v558 = vpop.f32.mrf.mxu0
        %v559 = vadd.f32 0.0, %v558
        %v560 = vpop.f32.mrf.mxu0
        %v561 = vpop.f32.mrf.mxu0
        %v562 = vadd.f32 0.0, %v561
        %v563 = vpop.f32.mrf.mxu0
        %564 = vmatprep.mubr.bf16.mxu0 0
        %565 = vmatmul.mubr.bf16.gmra.mxu0 %v425
        %v566 = vpop.f32.mrf.mxu0
        %v567 = vadd.f32 0.0, %v566
        %v568 = vpop.f32.mrf.mxu0
        %v569 = vpop.f32.mrf.mxu0
        %v570 = vadd.f32 0.0, %v569
        %v571 = vpop.f32.mrf.mxu0
        %572 = vmatprep.mubr.bf16.mxu0 0
        %573 = vmatmul.mubr.bf16.gmra.mxu0 %v426
        %v574 = vpop.f32.mrf.mxu0
        %v575 = vadd.f32 0.0, %v574
        %v576 = vpop.f32.mrf.mxu0
        %v577 = vpop.f32.mrf.mxu0
        %v578 = vadd.f32 0.0, %v577
        %v579 = vpop.f32.mrf.mxu0
        %580 = vmatprep.mubr.bf16.mxu0 0
        %581 = vmatmul.mubr.bf16.gmra.mxu0 %v427
        %v582 = vpop.f32.mrf.mxu0
        %v583 = vadd.f32 0.0, %v582
        %v584 = vpop.f32.mrf.mxu0
        %v585 = vpop.f32.mrf.mxu0
        %v586 = vadd.f32 0.0, %v585
        %v587 = vpop.f32.mrf.mxu0
        %588 = vdwg.mxu0
        %v589 = vadd.f32 %v384, %v527
        %v590 = vadd.f32 %v385, %v530
        %v591 = vadd.f32 %v386, %v535
        %v592 = vadd.f32 %v387, %v538
        %v593 = vadd.f32 %v388, %v543
        %v594 = vadd.f32 %v389, %v546
        %v595 = vadd.f32 %v390, %v551
        %v596 = vadd.f32 %v391, %v554
        %v597 = vadd.f32 %v392, %v559
        %v598 = vadd.f32 %v393, %v562
        %v599 = vadd.f32 %v394, %v567
        %v600 = vadd.f32 %v395, %v570
        %v601 = vadd.f32 %v396, %v575
        %v602 = vadd.f32 %v397, %v578
        %v603 = vadd.f32 %v398, %v583
        %v604 = vadd.f32 %v399, %v586
        %v605 = vlaneseq
        %v606 = vshrl.u32 %v605, 7
        %v607 = vsub.s32 0, %v606
        %v608 = vrot.slane %v416, %v607
        %v609 = vadd.f32 %v589, %v608
        %v610 = vadd.f32 %v590, %v608
        %v611 = vadd.f32 %v591, %v608
        %v612 = vadd.f32 %v592, %v608
        %v613 = vadd.f32 %v593, %v608
        %v614 = vadd.f32 %v594, %v608
        %v615 = vadd.f32 %v595, %v608
        %v616 = vadd.f32 %v596, %v608
        %v617 = vadd.f32 %v597, %v608
        %v618 = vadd.f32 %v598, %v608
        %v619 = vadd.f32 %v599, %v608
        %v620 = vadd.f32 %v600, %v608
        %v621 = vadd.f32 %v601, %v608
        %v622 = vadd.f32 %v602, %v608
        %v623 = vadd.f32 %v603, %v608
        %v624 = vadd.f32 %v604, %v608
        %625 = vadd.xlane.f32.xlu0 %v609
        %v626 = vpop.xlane.xlu0 %625
        %627 = vadd.xlane.f32.xlu0 %v610
        %v628 = vpop.xlane.xlu0 %627
        %629 = vadd.xlane.f32.xlu0 %v611
        %v630 = vpop.xlane.xlu0 %629
        %631 = vadd.xlane.f32.xlu0 %v612
        %v632 = vpop.xlane.xlu0 %631
        %633 = vadd.xlane.f32.xlu0 %v613
        %v634 = vpop.xlane.xlu0 %633
        %635 = vadd.xlane.f32.xlu0 %v614
        %v636 = vpop.xlane.xlu0 %635
        %637 = vadd.xlane.f32.xlu0 %v615
        %v638 = vpop.xlane.xlu0 %637
        %639 = vadd.xlane.f32.xlu0 %v616
        %v640 = vpop.xlane.xlu0 %639
        %641 = vadd.xlane.f32.xlu0 %v617
        %v642 = vpop.xlane.xlu0 %641
        %643 = vadd.xlane.f32.xlu0 %v618
        %v644 = vpop.xlane.xlu0 %643
        %645 = vadd.xlane.f32.xlu0 %v619
        %v646 = vpop.xlane.xlu0 %645
        %647 = vadd.xlane.f32.xlu0 %v620
        %v648 = vpop.xlane.xlu0 %647
        %649 = vadd.xlane.f32.xlu0 %v621
        %v650 = vpop.xlane.xlu0 %649
        %651 = vadd.xlane.f32.xlu0 %v622
        %v652 = vpop.xlane.xlu0 %651
        %653 = vadd.xlane.f32.xlu0 %v623
        %v654 = vpop.xlane.xlu0 %653
        %655 = vadd.xlane.f32.xlu0 %v624
        %v656 = vpop.xlane.xlu0 %655
        %v657 = vrcp.pop 128.0
        %v658 = vmul.f32 %v626, %v657
        %v659 = vmul.f32 %v628, %v657
        %v660 = vmul.f32 %v630, %v657
        %v661 = vmul.f32 %v632, %v657
        %v662 = vmul.f32 %v634, %v657
        %v663 = vmul.f32 %v636, %v657
        %v664 = vmul.f32 %v638, %v657
        %v665 = vmul.f32 %v640, %v657
        %v666 = vmul.f32 %v642, %v657
        %v667 = vmul.f32 %v644, %v657
        %v668 = vmul.f32 %v646, %v657
        %v669 = vmul.f32 %v648, %v657
        %v670 = vmul.f32 %v650, %v657
        %v671 = vmul.f32 %v652, %v657
        %v672 = vmul.f32 %v654, %v657
        %v673 = vmul.f32 %v656, %v657
        %v674 = vmul.f32 %v609, %v609
        %v675 = vmul.f32 %v610, %v610
        %v676 = vmul.f32 %v611, %v611
        %v677 = vmul.f32 %v612, %v612
        %v678 = vmul.f32 %v613, %v613
        %v679 = vmul.f32 %v614, %v614
        %v680 = vmul.f32 %v615, %v615
        %v681 = vmul.f32 %v616, %v616
        %v682 = vmul.f32 %v617, %v617
        %v683 = vmul.f32 %v618, %v618
        %v684 = vmul.f32 %v619, %v619
        %v685 = vmul.f32 %v620, %v620
        %v686 = vmul.f32 %v621, %v621
        %v687 = vmul.f32 %v622, %v622
        %v688 = vmul.f32 %v623, %v623
        %v689 = vmul.f32 %v624, %v624
        %690 = vadd.xlane.f32.xlu0 %v674
        %v691 = vpop.xlane.xlu0 %690
        %692 = vadd.xlane.f32.xlu0 %v675
        %v693 = vpop.xlane.xlu0 %692
        %694 = vadd.xlane.f32.xlu0 %v676
        %v695 = vpop.xlane.xlu0 %694
        %696 = vadd.xlane.f32.xlu0 %v677
        %v697 = vpop.xlane.xlu0 %696
        %698 = vadd.xlane.f32.xlu0 %v678
        %v699 = vpop.xlane.xlu0 %698
        %700 = vadd.xlane.f32.xlu0 %v679
        %v701 = vpop.xlane.xlu0 %700
        %702 = vadd.xlane.f32.xlu0 %v680
        %v703 = vpop.xlane.xlu0 %702
        %704 = vadd.xlane.f32.xlu0 %v681
        %v705 = vpop.xlane.xlu0 %704
        %706 = vadd.xlane.f32.xlu0 %v682
        %v707 = vpop.xlane.xlu0 %706
        %708 = vadd.xlane.f32.xlu0 %v683
        %v709 = vpop.xlane.xlu0 %708
        %710 = vadd.xlane.f32.xlu0 %v684
        %v711 = vpop.xlane.xlu0 %710
        %712 = vadd.xlane.f32.xlu0 %v685
        %v713 = vpop.xlane.xlu0 %712
        %714 = vadd.xlane.f32.xlu0 %v686
        %v715 = vpop.xlane.xlu0 %714
        %716 = vadd.xlane.f32.xlu0 %v687
        %v717 = vpop.xlane.xlu0 %716
        %718 = vadd.xlane.f32.xlu0 %v688
        %v719 = vpop.xlane.xlu0 %718
        %720 = vadd.xlane.f32.xlu0 %v689
        %v721 = vpop.xlane.xlu0 %720
        %v722 = vmul.f32 %v691, %v657
        %v723 = vmul.f32 %v693, %v657
        %v724 = vmul.f32 %v695, %v657
        %v725 = vmul.f32 %v697, %v657
        %v726 = vmul.f32 %v699, %v657
        %v727 = vmul.f32 %v701, %v657
        %v728 = vmul.f32 %v703, %v657
        %v729 = vmul.f32 %v705, %v657
        %v730 = vmul.f32 %v707, %v657
        %v731 = vmul.f32 %v709, %v657
        %v732 = vmul.f32 %v711, %v657
        %v733 = vmul.f32 %v713, %v657
        %v734 = vmul.f32 %v715, %v657
        %v735 = vmul.f32 %v717, %v657
        %v736 = vmul.f32 %v719, %v657
        %v737 = vmul.f32 %v721, %v657
        %v738 = vmul.f32 %v658, %v658
        %v739 = vmul.f32 %v659, %v659
        %v740 = vmul.f32 %v660, %v660
        %v741 = vmul.f32 %v661, %v661
        %v742 = vmul.f32 %v662, %v662
        %v743 = vmul.f32 %v663, %v663
        %v744 = vmul.f32 %v664, %v664
        %v745 = vmul.f32 %v665, %v665
        %v746 = vmul.f32 %v666, %v666
        %v747 = vmul.f32 %v667, %v667
        %v748 = vmul.f32 %v668, %v668
        %v749 = vmul.f32 %v669, %v669
        %v750 = vmul.f32 %v670, %v670
        %v751 = vmul.f32 %v671, %v671
        %v752 = vmul.f32 %v672, %v672
        %v753 = vmul.f32 %v673, %v673
        %v754 = vsub.f32 %v722, %v738
        %v755 = vsub.f32 %v723, %v739
        %v756 = vsub.f32 %v724, %v740
        %v757 = vsub.f32 %v725, %v741
        %v758 = vsub.f32 %v726, %v742
        %v759 = vsub.f32 %v727, %v743
        %v760 = vsub.f32 %v728, %v744
        %v761 = vsub.f32 %v729, %v745
        %v762 = vsub.f32 %v730, %v746
        %v763 = vsub.f32 %v731, %v747
        %v764 = vsub.f32 %v732, %v748
        %v765 = vsub.f32 %v733, %v749
        %v766 = vsub.f32 %v734, %v750
        %v767 = vsub.f32 %v735, %v751
        %v768 = vsub.f32 %v736, %v752
        %v769 = vsub.f32 %v737, %v753
        %v770 = vadd.f32 %v754, 1e-05
        %v771 = vadd.f32 %v755, 1e-05
        %v772 = vadd.f32 %v756, 1e-05
        %v773 = vadd.f32 %v757, 1e-05
        %v774 = vadd.f32 %v758, 1e-05
        %v775 = vadd.f32 %v759, 1e-05
        %v776 = vadd.f32 %v760, 1e-05
        %v777 = vadd.f32 %v761, 1e-05
        %v778 = vadd.f32 %v762, 1e-05
        %v779 = vadd.f32 %v763, 1e-05
        %v780 = vadd.f32 %v764, 1e-05
        %v781 = vadd.f32 %v765, 1e-05
        %v782 = vadd.f32 %v766, 1e-05
        %v783 = vadd.f32 %v767, 1e-05
        %v784 = vadd.f32 %v768, 1e-05
        %v785 = vadd.f32 %v769, 1e-05
        %v786 = vrsqrt.pop %v770
        %v787 = vrsqrt.pop %v771
        %v788 = vrsqrt.pop %v772
        %v789 = vrsqrt.pop %v773
        %v790 = vrsqrt.pop %v774
        %v791 = vrsqrt.pop %v775
        %v792 = vrsqrt.pop %v776
        %v793 = vrsqrt.pop %v777
        %v794 = vrsqrt.pop %v778
        %v795 = vrsqrt.pop %v779
        %v796 = vrsqrt.pop %v780
        %v797 = vrsqrt.pop %v781
        %v798 = vrsqrt.pop %v782
        %v799 = vrsqrt.pop %v783
        %v800 = vrsqrt.pop %v784
        %v801 = vrsqrt.pop %v785
        %v802 = vlaneseq
        %v803 = vshrl.u32 %v802, 7
        %v804 = vsub.s32 0, %v803
        %v805 = vrot.slane %v417, %v804
        %v806 = vmul.f32 %v786, %v805
        %v807 = vmul.f32 %v787, %v805
        %v808 = vmul.f32 %v788, %v805
        %v809 = vmul.f32 %v789, %v805
        %v810 = vmul.f32 %v790, %v805
        %v811 = vmul.f32 %v791, %v805
        %v812 = vmul.f32 %v792, %v805
        %v813 = vmul.f32 %v793, %v805
        %v814 = vmul.f32 %v794, %v805
        %v815 = vmul.f32 %v795, %v805
        %v816 = vmul.f32 %v796, %v805
        %v817 = vmul.f32 %v797, %v805
        %v818 = vmul.f32 %v798, %v805
        %v819 = vmul.f32 %v799, %v805
        %v820 = vmul.f32 %v800, %v805
        %v821 = vmul.f32 %v801, %v805
        %v822 = vsub.f32 %v609, %v658
        %v823 = vsub.f32 %v610, %v659
        %v824 = vsub.f32 %v611, %v660
        %v825 = vsub.f32 %v612, %v661
        %v826 = vsub.f32 %v613, %v662
        %v827 = vsub.f32 %v614, %v663
        %v828 = vsub.f32 %v615, %v664
        %v829 = vsub.f32 %v616, %v665
        %v830 = vsub.f32 %v617, %v666
        %v831 = vsub.f32 %v618, %v667
        %v832 = vsub.f32 %v619, %v668
        %v833 = vsub.f32 %v620, %v669
        %v834 = vsub.f32 %v621, %v670
        %v835 = vsub.f32 %v622, %v671
        %v836 = vsub.f32 %v623, %v672
        %v837 = vsub.f32 %v624, %v673
        %v838 = vmul.f32 %v822, %v806
        %v839 = vmul.f32 %v823, %v807
        %v840 = vmul.f32 %v824, %v808
        %v841 = vmul.f32 %v825, %v809
        %v842 = vmul.f32 %v826, %v810
        %v843 = vmul.f32 %v827, %v811
        %v844 = vmul.f32 %v828, %v812
        %v845 = vmul.f32 %v829, %v813
        %v846 = vmul.f32 %v830, %v814
        %v847 = vmul.f32 %v831, %v815
        %v848 = vmul.f32 %v832, %v816
        %v849 = vmul.f32 %v833, %v817
        %v850 = vmul.f32 %v834, %v818
        %v851 = vmul.f32 %v835, %v819
        %v852 = vmul.f32 %v836, %v820
        %v853 = vmul.f32 %v837, %v821
        %v854 = vlaneseq
        %v855 = vshrl.u32 %v854, 7
        %v856 = vsub.s32 0, %v855
        %v857 = vrot.slane %v418, %v856
        %v858 = vadd.f32 %v838, %v857
        %v859 = vadd.f32 %v839, %v857
        %v860 = vadd.f32 %v840, %v857
        %v861 = vadd.f32 %v841, %v857
        %v862 = vadd.f32 %v842, %v857
        %v863 = vadd.f32 %v843, %v857
        %v864 = vadd.f32 %v844, %v857
        %v865 = vadd.f32 %v845, %v857
        %v866 = vadd.f32 %v846, %v857
        %v867 = vadd.f32 %v847, %v857
        %v868 = vadd.f32 %v848, %v857
        %v869 = vadd.f32 %v849, %v857
        %v870 = vadd.f32 %v850, %v857
        %v871 = vadd.f32 %v851, %v857
        %v872 = vadd.f32 %v852, %v857
        %v873 = vadd.f32 %v853, %v857
        %v874 = vpack.c.bf16 %v859, %v858
        %v875 = vpack.c.bf16 %v861, %v860
        %v876 = vpack.c.bf16 %v863, %v862
        %v877 = vpack.c.bf16 %v865, %v864
        %v878 = vpack.c.bf16 %v867, %v866
        %v879 = vpack.c.bf16 %v869, %v868
        %v880 = vpack.c.bf16 %v871, %v870
        %v881 = vpack.c.bf16 %v873, %v872
        %v882 = vld [vmem:[#allocation8] sm:$0xff]
        %v883 = vld [vmem:[#allocation8 + $0x8] sm:$0xff]
        %v884 = vld [vmem:[#allocation8 + $0x10] sm:$0xff]
        %v885 = vld [vmem:[#allocation8 + $0x18] sm:$0xff]
        %v886 = vld [vmem:[#allocation8 + $0x20] sm:$0xff]
        %v887 = vld [vmem:[#allocation8 + $0x28] sm:$0xff]
        %v888 = vld [vmem:[#allocation8 + $0x30] sm:$0xff]
        %v889 = vld [vmem:[#allocation8 + $0x38] sm:$0xff]
        %v890 = vld [vmem:[#allocation8 + $0x40] sm:$0xff]
        %v891 = vld [vmem:[#allocation8 + $0x48] sm:$0xff]
        %v892 = vld [vmem:[#allocation8 + $0x50] sm:$0xff]
        %v893 = vld [vmem:[#allocation8 + $0x58] sm:$0xff]
        %v894 = vld [vmem:[#allocation8 + $0x60] sm:$0xff]
        %v895 = vld [vmem:[#allocation8 + $0x68] sm:$0xff]
        %v896 = vld [vmem:[#allocation8 + $0x70] sm:$0xff]
        %v897 = vld [vmem:[#allocation8 + $0x78] sm:$0xff]
        %v898 = vld [vmem:[#allocation8 + $0x80] sm:$0xff]
        %v899 = vld [vmem:[#allocation8 + $0x88] sm:$0xff]
        %v900 = vld [vmem:[#allocation8 + $0x90] sm:$0xff]
        %v901 = vld [vmem:[#allocation8 + $0x98] sm:$0xff]
        %v902 = vld [vmem:[#allocation8 + $0xa0] sm:$0xff]
        %v903 = vld [vmem:[#allocation8 + $0xa8] sm:$0xff]
        %v904 = vld [vmem:[#allocation8 + $0xb0] sm:$0xff]
        %v905 = vld [vmem:[#allocation8 + $0xb8] sm:$0xff]
        %v906 = vld [vmem:[#allocation8 + $0xc0] sm:$0xff]
        %v907 = vld [vmem:[#allocation8 + $0xc8] sm:$0xff]
        %v908 = vld [vmem:[#allocation8 + $0xd0] sm:$0xff]
        %v909 = vld [vmem:[#allocation8 + $0xd8] sm:$0xff]
        %v910 = vld [vmem:[#allocation8 + $0xe0] sm:$0xff]
        %v911 = vld [vmem:[#allocation8 + $0xe8] sm:$0xff]
        %v912 = vld [vmem:[#allocation8 + $0xf0] sm:$0xff]
        %v913 = vld [vmem:[#allocation8 + $0xf8] sm:$0xff]
        %v914 = vld [vmem:[%s5] sm:$0xf]
        %v916 = vlaneseq
        %v917 = vshrl.u32 %v916, 7
        %v918 = vsub.s32 0, %v917
        %v919 = vrot.slane %v914, %v918
        %v920 = vlaneseq
        %v921 = vshrl.u32 %v920, 7
        %v922 = vsub.s32 1, %v921
        %v923 = vrot.slane %v914, %v922
        %v924 = vlaneseq
        %v925 = vshrl.u32 %v924, 7
        %v926 = vsub.s32 2, %v925
        %v927 = vrot.slane %v914, %v926
        %v928 = vlaneseq
        %v929 = vshrl.u32 %v928, 7
        %v930 = vsub.s32 3, %v929
        %v931 = vrot.slane %v914, %v930
        %v968 = vunpack.c.l.b16 %v882
        %v969 = vunpack.c.h.b16 %v882
        %v970 = vunpack.c.l.b16 %v883
        %v971 = vunpack.c.h.b16 %v883
        %v972 = vunpack.c.l.b16 %v884
        %v973 = vunpack.c.h.b16 %v884
        %v974 = vunpack.c.l.b16 %v885
        %v975 = vunpack.c.h.b16 %v885
        %v976 = vunpack.c.l.b16 %v886
        %v977 = vunpack.c.h.b16 %v886
        %v978 = vunpack.c.l.b16 %v887
        %v979 = vunpack.c.h.b16 %v887
        %v980 = vunpack.c.l.b16 %v888
        %v981 = vunpack.c.h.b16 %v888
        %v982 = vunpack.c.l.b16 %v889
        %v983 = vunpack.c.h.b16 %v889
        %v984 = vunpack.c.l.b16 %v890
        %v985 = vunpack.c.h.b16 %v890
        %v986 = vunpack.c.l.b16 %v891
        %v987 = vunpack.c.h.b16 %v891
        %v988 = vunpack.c.l.b16 %v892
        %v989 = vunpack.c.h.b16 %v892
        %v990 = vunpack.c.l.b16 %v893
        %v991 = vunpack.c.h.b16 %v893
        %v992 = vunpack.c.l.b16 %v894
        %v993 = vunpack.c.h.b16 %v894
        %v994 = vunpack.c.l.b16 %v895
        %v995 = vunpack.c.h.b16 %v895
        %v996 = vunpack.c.l.b16 %v896
        %v997 = vunpack.c.h.b16 %v896
        %v998 = vunpack.c.l.b16 %v897
        %v999 = vunpack.c.h.b16 %v897
        %v1000 = vunpack.c.l.b16 %v898
        %v1001 = vunpack.c.h.b16 %v898
        %v1002 = vunpack.c.l.b16 %v899
        %v1003 = vunpack.c.h.b16 %v899
        %v1004 = vunpack.c.l.b16 %v900
        %v1005 = vunpack.c.h.b16 %v900
        %v1006 = vunpack.c.l.b16 %v901
        %v1007 = vunpack.c.h.b16 %v901
        %v1008 = vunpack.c.l.b16 %v902
        %v1009 = vunpack.c.h.b16 %v902
        %v1010 = vunpack.c.l.b16 %v903
        %v1011 = vunpack.c.h.b16 %v903
        %v1012 = vunpack.c.l.b16 %v904
        %v1013 = vunpack.c.h.b16 %v904
        %v1014 = vunpack.c.l.b16 %v905
        %v1015 = vunpack.c.h.b16 %v905
        %v1016 = vunpack.c.l.b16 %v906
        %v1017 = vunpack.c.h.b16 %v906
        %v1018 = vunpack.c.l.b16 %v907
        %v1019 = vunpack.c.h.b16 %v907
        %v1020 = vunpack.c.l.b16 %v908
        %v1021 = vunpack.c.h.b16 %v908
        %v1022 = vunpack.c.l.b16 %v909
        %v1023 = vunpack.c.h.b16 %v909
        %v1024 = vunpack.c.l.b16 %v910
        %v1025 = vunpack.c.h.b16 %v910
        %v1026 = vunpack.c.l.b16 %v911
        %v1027 = vunpack.c.h.b16 %v911
        %v1028 = vunpack.c.l.b16 %v912
        %v1029 = vunpack.c.h.b16 %v912
        %v1030 = vunpack.c.l.b16 %v913
        %v1031 = vunpack.c.h.b16 %v913
        %v1032 = vpack.c.b16 %v972, %v968
        %v1033 = vpack.c.b16 %v973, %v969
        %v1034 = vpack.c.b16 %v974, %v970
        %v1035 = vpack.c.b16 %v975, %v971
        %v1036 = vpack.c.b16 %v980, %v976
        %v1037 = vpack.c.b16 %v981, %v977
        %v1038 = vpack.c.b16 %v982, %v978
        %v1039 = vpack.c.b16 %v983, %v979
        %v1040 = vpack.c.b16 %v988, %v984
        %v1041 = vpack.c.b16 %v989, %v985
        %v1042 = vpack.c.b16 %v990, %v986
        %v1043 = vpack.c.b16 %v991, %v987
        %v1044 = vpack.c.b16 %v996, %v992
        %v1045 = vpack.c.b16 %v997, %v993
        %v1046 = vpack.c.b16 %v998, %v994
        %v1047 = vpack.c.b16 %v999, %v995
        %v1048 = vpack.c.b16 %v1004, %v1000
        %v1049 = vpack.c.b16 %v1005, %v1001
        %v1050 = vpack.c.b16 %v1006, %v1002
        %v1051 = vpack.c.b16 %v1007, %v1003
        %v1052 = vpack.c.b16 %v1012, %v1008
        %v1053 = vpack.c.b16 %v1013, %v1009
        %v1054 = vpack.c.b16 %v1014, %v1010
        %v1055 = vpack.c.b16 %v1015, %v1011
        %v1056 = vpack.c.b16 %v1020, %v1016
        %v1057 = vpack.c.b16 %v1021, %v1017
        %v1058 = vpack.c.b16 %v1022, %v1018
        %v1059 = vpack.c.b16 %v1023, %v1019
        %v1060 = vpack.c.b16 %v1028, %v1024
        %v1061 = vpack.c.b16 %v1029, %v1025
        %v1062 = vpack.c.b16 %v1030, %v1026
        %v1063 = vpack.c.b16 %v1031, %v1027
        %1096 = vmatprep.subr.bf16.mxu0 %v1061
        %1097 = vmatpush1.bf16.msra.mxu0 %v1060
        %1098 = vmatprep.subr.bf16.mxu0 %v1057
        %1099 = vmatpush1.bf16.msra.mxu0 %v1056
        %1100 = vmatprep.subr.bf16.mxu0 %v1053
        %1101 = vmatpush1.bf16.msra.mxu0 %v1052
        %1102 = vmatprep.subr.bf16.mxu0 %v1049
        %1103 = vmatpush1.bf16.msra.mxu0 %v1048
        %1104 = vmatprep.subr.bf16.mxu0 %v1045
        %1105 = vmatpush1.bf16.msra.mxu0 %v1044
        %1106 = vmatprep.subr.bf16.mxu0 %v1041
        %1107 = vmatpush1.bf16.msra.mxu0 %v1040
        %1108 = vmatprep.subr.bf16.mxu0 %v1037
        %1109 = vmatpush1.bf16.msra.mxu0 %v1036
        %1110 = vmatprep.subr.bf16.mxu0 %v1033
        %1111 = vmatpush1.bf16.msra.mxu0 %v1032
        %1112 = vmatprep.subr.bf16.mxu0 0
        %1113 = vmatpush2.bf16.msra.mxu0 0
        %1114 = vmatprep.subr.bf16.mxu0 0
        %1115 = vmatpush2.bf16.msra.mxu0 0
        %1116 = vmatprep.subr.bf16.mxu0 0
        %1117 = vmatpush2.bf16.msra.mxu0 0
        %1118 = vmatprep.subr.bf16.mxu0 0
        %1119 = vmatpush2.bf16.msra.mxu0 0
        %1120 = vmatprep.subr.bf16.mxu0 0
        %1121 = vmatpush2.bf16.msra.mxu0 0
        %1122 = vmatprep.subr.bf16.mxu0 0
        %1123 = vmatpush2.bf16.msra.mxu0 0
        %1124 = vmatprep.subr.bf16.mxu0 0
        %1125 = vmatpush2.bf16.msra.mxu0 0
        %1126 = vmatprep.subr.bf16.mxu0 0
        %1127 = vmatpush2.bf16.msra.mxu0 0
        %1128 = vmatprep.mubr.bf16.mxu0 0
        %1129 = vmatmul.mubr.bf16.gmra.mxu0 %v874
        %v1130 = vpop.f32.mrf.mxu0
        %v1131 = vadd.f32 %v919, %v1130
        %v1132 = vpop.f32.mrf.mxu0
        %v1133 = vadd.f32 %v923, %v1132
        %v1134 = vpop.f32.mrf.mxu0
        %v1135 = vadd.f32 %v919, %v1134
        %v1136 = vpop.f32.mrf.mxu0
        %v1137 = vadd.f32 %v923, %v1136
        %1138 = vmatprep.mubr.bf16.mxu0 0
        %1139 = vmatmul.mubr.bf16.gmra.mxu0 %v875
        %v1140 = vpop.f32.mrf.mxu0
        %v1141 = vadd.f32 %v919, %v1140
        %v1142 = vpop.f32.mrf.mxu0
        %v1143 = vadd.f32 %v923, %v1142
        %v1144 = vpop.f32.mrf.mxu0
        %v1145 = vadd.f32 %v919, %v1144
        %v1146 = vpop.f32.mrf.mxu0
        %v1147 = vadd.f32 %v923, %v1146
        %1148 = vmatprep.mubr.bf16.mxu0 0
        %1149 = vmatmul.mubr.bf16.gmra.mxu0 %v876
        %v1150 = vpop.f32.mrf.mxu0
        %v1151 = vadd.f32 %v919, %v1150
        %v1152 = vpop.f32.mrf.mxu0
        %v1153 = vadd.f32 %v923, %v1152
        %v1154 = vpop.f32.mrf.mxu0
        %v1155 = vadd.f32 %v919, %v1154
        %v1156 = vpop.f32.mrf.mxu0
        %v1157 = vadd.f32 %v923, %v1156
        %1158 = vmatprep.mubr.bf16.mxu0 0
        %1159 = vmatmul.mubr.bf16.gmra.mxu0 %v877
        %v1160 = vpop.f32.mrf.mxu0
        %v1161 = vadd.f32 %v919, %v1160
        %v1162 = vpop.f32.mrf.mxu0
        %v1163 = vadd.f32 %v923, %v1162
        %v1164 = vpop.f32.mrf.mxu0
        %v1165 = vadd.f32 %v919, %v1164
        %v1166 = vpop.f32.mrf.mxu0
        %v1167 = vadd.f32 %v923, %v1166
        %1168 = vmatprep.mubr.bf16.mxu0 0
        %1169 = vmatmul.mubr.bf16.gmra.mxu0 %v878
        %v1170 = vpop.f32.mrf.mxu0
        %v1171 = vadd.f32 %v919, %v1170
        %v1172 = vpop.f32.mrf.mxu0
        %v1173 = vadd.f32 %v923, %v1172
        %v1174 = vpop.f32.mrf.mxu0
        %v1175 = vadd.f32 %v919, %v1174
        %v1176 = vpop.f32.mrf.mxu0
        %v1177 = vadd.f32 %v923, %v1176
        %1178 = vmatprep.mubr.bf16.mxu0 0
        %1179 = vmatmul.mubr.bf16.gmra.mxu0 %v879
        %v1180 = vpop.f32.mrf.mxu0
        %v1181 = vadd.f32 %v919, %v1180
        %v1182 = vpop.f32.mrf.mxu0
        %v1183 = vadd.f32 %v923, %v1182
        %v1184 = vpop.f32.mrf.mxu0
        %v1185 = vadd.f32 %v919, %v1184
        %v1186 = vpop.f32.mrf.mxu0
        %v1187 = vadd.f32 %v923, %v1186
        %1188 = vmatprep.mubr.bf16.mxu0 0
        %1189 = vmatmul.mubr.bf16.gmra.mxu0 %v880
        %v1190 = vpop.f32.mrf.mxu0
        %v1191 = vadd.f32 %v919, %v1190
        %v1192 = vpop.f32.mrf.mxu0
        %v1193 = vadd.f32 %v923, %v1192
        %v1194 = vpop.f32.mrf.mxu0
        %v1195 = vadd.f32 %v919, %v1194
        %v1196 = vpop.f32.mrf.mxu0
        %v1197 = vadd.f32 %v923, %v1196
        %1198 = vmatprep.mubr.bf16.mxu0 0
        %1199 = vmatmul.mubr.bf16.gmra.mxu0 %v881
        %v1200 = vpop.f32.mrf.mxu0
        %v1201 = vadd.f32 %v919, %v1200
        %v1202 = vpop.f32.mrf.mxu0
        %v1203 = vadd.f32 %v923, %v1202
        %v1204 = vpop.f32.mrf.mxu0
        %v1205 = vadd.f32 %v919, %v1204
        %v1206 = vpop.f32.mrf.mxu0
        %v1207 = vadd.f32 %v923, %v1206
        %1208 = vdwg.mxu0
        %1209 = vmatprep.subr.bf16.mxu0 %v1063
        %1210 = vmatpush1.bf16.msra.mxu0 %v1062
        %1211 = vmatprep.subr.bf16.mxu0 %v1059
        %1212 = vmatpush1.bf16.msra.mxu0 %v1058
        %1213 = vmatprep.subr.bf16.mxu0 %v1055
        %1214 = vmatpush1.bf16.msra.mxu0 %v1054
        %1215 = vmatprep.subr.bf16.mxu0 %v1051
        %1216 = vmatpush1.bf16.msra.mxu0 %v1050
        %1217 = vmatprep.subr.bf16.mxu0 %v1047
        %1218 = vmatpush1.bf16.msra.mxu0 %v1046
        %1219 = vmatprep.subr.bf16.mxu0 %v1043
        %1220 = vmatpush1.bf16.msra.mxu0 %v1042
        %1221 = vmatprep.subr.bf16.mxu0 %v1039
        %1222 = vmatpush1.bf16.msra.mxu0 %v1038
        %1223 = vmatprep.subr.bf16.mxu0 %v1035
        %1224 = vmatpush1.bf16.msra.mxu0 %v1034
        %1225 = vmatprep.subr.bf16.mxu0 0
        %1226 = vmatpush2.bf16.msra.mxu0 0
        %1227 = vmatprep.subr.bf16.mxu0 0
        %1228 = vmatpush2.bf16.msra.mxu0 0
        %1229 = vmatprep.subr.bf16.mxu0 0
        %1230 = vmatpush2.bf16.msra.mxu0 0
        %1231 = vmatprep.subr.bf16.mxu0 0
        %1232 = vmatpush2.bf16.msra.mxu0 0
        %1233 = vmatprep.subr.bf16.mxu0 0
        %1234 = vmatpush2.bf16.msra.mxu0 0
        %1235 = vmatprep.subr.bf16.mxu0 0
        %1236 = vmatpush2.bf16.msra.mxu0 0
        %1237 = vmatprep.subr.bf16.mxu0 0
        %1238 = vmatpush2.bf16.msra.mxu0 0
        %1239 = vmatprep.subr.bf16.mxu0 0
        %1240 = vmatpush2.bf16.msra.mxu0 0
        %1241 = vmatprep.mubr.bf16.mxu0 0
        %1242 = vmatmul.mubr.bf16.gmra.mxu0 %v874
        %v1243 = vpop.f32.mrf.mxu0
        %v1244 = vadd.f32 %v927, %v1243
        %v1245 = vpop.f32.mrf.mxu0
        %v1246 = vadd.f32 %v931, %v1245
        %v1247 = vpop.f32.mrf.mxu0
        %v1248 = vadd.f32 %v927, %v1247
        %v1249 = vpop.f32.mrf.mxu0
        %v1250 = vadd.f32 %v931, %v1249
        %1251 = vmatprep.mubr.bf16.mxu0 0
        %1252 = vmatmul.mubr.bf16.gmra.mxu0 %v875
        %v1253 = vpop.f32.mrf.mxu0
        %v1254 = vadd.f32 %v927, %v1253
        %v1255 = vpop.f32.mrf.mxu0
        %v1256 = vadd.f32 %v931, %v1255
        %v1257 = vpop.f32.mrf.mxu0
        %v1258 = vadd.f32 %v927, %v1257
        %v1259 = vpop.f32.mrf.mxu0
        %v1260 = vadd.f32 %v931, %v1259
        %1261 = vmatprep.mubr.bf16.mxu0 0
        %1262 = vmatmul.mubr.bf16.gmra.mxu0 %v876
        %v1263 = vpop.f32.mrf.mxu0
        %v1264 = vadd.f32 %v927, %v1263
        %v1265 = vpop.f32.mrf.mxu0
        %v1266 = vadd.f32 %v931, %v1265
        %v1267 = vpop.f32.mrf.mxu0
        %v1268 = vadd.f32 %v927, %v1267
        %v1269 = vpop.f32.mrf.mxu0
        %v1270 = vadd.f32 %v931, %v1269
        %1271 = vmatprep.mubr.bf16.mxu0 0
        %1272 = vmatmul.mubr.bf16.gmra.mxu0 %v877
        %v1273 = vpop.f32.mrf.mxu0
        %v1274 = vadd.f32 %v927, %v1273
        %v1275 = vpop.f32.mrf.mxu0
        %v1276 = vadd.f32 %v931, %v1275
        %v1277 = vpop.f32.mrf.mxu0
        %v1278 = vadd.f32 %v927, %v1277
        %v1279 = vpop.f32.mrf.mxu0
        %v1280 = vadd.f32 %v931, %v1279
        %1281 = vmatprep.mubr.bf16.mxu0 0
        %1282 = vmatmul.mubr.bf16.gmra.mxu0 %v878
        %v1283 = vpop.f32.mrf.mxu0
        %v1284 = vadd.f32 %v927, %v1283
        %v1285 = vpop.f32.mrf.mxu0
        %v1286 = vadd.f32 %v931, %v1285
        %v1287 = vpop.f32.mrf.mxu0
        %v1288 = vadd.f32 %v927, %v1287
        %v1289 = vpop.f32.mrf.mxu0
        %v1290 = vadd.f32 %v931, %v1289
        %1291 = vmatprep.mubr.bf16.mxu0 0
        %1292 = vmatmul.mubr.bf16.gmra.mxu0 %v879
        %v1293 = vpop.f32.mrf.mxu0
        %v1294 = vadd.f32 %v927, %v1293
        %v1295 = vpop.f32.mrf.mxu0
        %v1296 = vadd.f32 %v931, %v1295
        %v1297 = vpop.f32.mrf.mxu0
        %v1298 = vadd.f32 %v927, %v1297
        %v1299 = vpop.f32.mrf.mxu0
        %v1300 = vadd.f32 %v931, %v1299
        %1301 = vmatprep.mubr.bf16.mxu0 0
        %1302 = vmatmul.mubr.bf16.gmra.mxu0 %v880
        %v1303 = vpop.f32.mrf.mxu0
        %v1304 = vadd.f32 %v927, %v1303
        %v1305 = vpop.f32.mrf.mxu0
        %v1306 = vadd.f32 %v931, %v1305
        %v1307 = vpop.f32.mrf.mxu0
        %v1308 = vadd.f32 %v927, %v1307
        %v1309 = vpop.f32.mrf.mxu0
        %v1310 = vadd.f32 %v931, %v1309
        %1311 = vmatprep.mubr.bf16.mxu0 0
        %1312 = vmatmul.mubr.bf16.gmra.mxu0 %v881
        %v1313 = vpop.f32.mrf.mxu0
        %v1314 = vadd.f32 %v927, %v1313
        %v1315 = vpop.f32.mrf.mxu0
        %v1316 = vadd.f32 %v931, %v1315
        %v1317 = vpop.f32.mrf.mxu0
        %v1318 = vadd.f32 %v927, %v1317
        %v1319 = vpop.f32.mrf.mxu0
        %v1320 = vadd.f32 %v931, %v1319
        %1321 = vdwg.mxu0
        %v1322 = vmul.f32 %v1131, 0.5
        %v1323 = vmul.f32 %v1133, 0.5
        %v1324 = vmul.f32 %v1244, 0.5
        %v1325 = vmul.f32 %v1246, 0.5
        %v1326 = vmul.f32 %v1135, 0.5
        %v1327 = vmul.f32 %v1137, 0.5
        %v1328 = vmul.f32 %v1248, 0.5
        %v1329 = vmul.f32 %v1250, 0.5
        %v1330 = vmul.f32 %v1141, 0.5
        %v1331 = vmul.f32 %v1143, 0.5
        %v1332 = vmul.f32 %v1254, 0.5
        %v1333 = vmul.f32 %v1256, 0.5
        %v1334 = vmul.f32 %v1145, 0.5
        %v1335 = vmul.f32 %v1147, 0.5
        %v1336 = vmul.f32 %v1258, 0.5
        %v1337 = vmul.f32 %v1260, 0.5
        %v1338 = vmul.f32 %v1151, 0.5
        %v1339 = vmul.f32 %v1153, 0.5
        %v1340 = vmul.f32 %v1264, 0.5
        %v1341 = vmul.f32 %v1266, 0.5
        %v1342 = vmul.f32 %v1155, 0.5
        %v1343 = vmul.f32 %v1157, 0.5
        %v1344 = vmul.f32 %v1268, 0.5
        %v1345 = vmul.f32 %v1270, 0.5
        %v1346 = vmul.f32 %v1161, 0.5
        %v1347 = vmul.f32 %v1163, 0.5
        %v1348 = vmul.f32 %v1274, 0.5
        %v1349 = vmul.f32 %v1276, 0.5
        %v1350 = vmul.f32 %v1165, 0.5
        %v1351 = vmul.f32 %v1167, 0.5
        %v1352 = vmul.f32 %v1278, 0.5
        %v1353 = vmul.f32 %v1280, 0.5
        %v1354 = vmul.f32 %v1171, 0.5
        %v1355 = vmul.f32 %v1173, 0.5
        %v1356 = vmul.f32 %v1284, 0.5
        %v1357 = vmul.f32 %v1286, 0.5
        %v1358 = vmul.f32 %v1175, 0.5
        %v1359 = vmul.f32 %v1177, 0.5
        %v1360 = vmul.f32 %v1288, 0.5
        %v1361 = vmul.f32 %v1290, 0.5
        %v1362 = vmul.f32 %v1181, 0.5
        %v1363 = vmul.f32 %v1183, 0.5
        %v1364 = vmul.f32 %v1294, 0.5
        %v1365 = vmul.f32 %v1296, 0.5
        %v1366 = vmul.f32 %v1185, 0.5
        %v1367 = vmul.f32 %v1187, 0.5
        %v1368 = vmul.f32 %v1298, 0.5
        %v1369 = vmul.f32 %v1300, 0.5
        %v1370 = vmul.f32 %v1191, 0.5
        %v1371 = vmul.f32 %v1193, 0.5
        %v1372 = vmul.f32 %v1304, 0.5
        %v1373 = vmul.f32 %v1306, 0.5
        %v1374 = vmul.f32 %v1195, 0.5
        %v1375 = vmul.f32 %v1197, 0.5
        %v1376 = vmul.f32 %v1308, 0.5
        %v1377 = vmul.f32 %v1310, 0.5
        %v1378 = vmul.f32 %v1201, 0.5
        %v1379 = vmul.f32 %v1203, 0.5
        %v1380 = vmul.f32 %v1314, 0.5
        %v1381 = vmul.f32 %v1316, 0.5
        %v1382 = vmul.f32 %v1205, 0.5
        %v1383 = vmul.f32 %v1207, 0.5
        %v1384 = vmul.f32 %v1318, 0.5
        %v1385 = vmul.f32 %v1320, 0.5
        %v1386 = vmul.f32 %v1131, 0.044715
        %v1387 = vmul.f32 %v1133, 0.044715
        %v1388 = vmul.f32 %v1244, 0.044715
        %v1389 = vmul.f32 %v1246, 0.044715
        %v1390 = vmul.f32 %v1135, 0.044715
        %v1391 = vmul.f32 %v1137, 0.044715
        %v1392 = vmul.f32 %v1248, 0.044715
        %v1393 = vmul.f32 %v1250, 0.044715
        %v1394 = vmul.f32 %v1141, 0.044715
        %v1395 = vmul.f32 %v1143, 0.044715
        %v1396 = vmul.f32 %v1254, 0.044715
        %v1397 = vmul.f32 %v1256, 0.044715
        %v1398 = vmul.f32 %v1145, 0.044715
        %v1399 = vmul.f32 %v1147, 0.044715
        %v1400 = vmul.f32 %v1258, 0.044715
        %v1401 = vmul.f32 %v1260, 0.044715
        %v1402 = vmul.f32 %v1151, 0.044715
        %v1403 = vmul.f32 %v1153, 0.044715
        %v1404 = vmul.f32 %v1264, 0.044715
        %v1405 = vmul.f32 %v1266, 0.044715
        %v1406 = vmul.f32 %v1155, 0.044715
        %v1407 = vmul.f32 %v1157, 0.044715
        %v1408 = vmul.f32 %v1268, 0.044715
        %v1409 = vmul.f32 %v1270, 0.044715
        %v1410 = vmul.f32 %v1161, 0.044715
        %v1411 = vmul.f32 %v1163, 0.044715
        %v1412 = vmul.f32 %v1274, 0.044715
        %v1413 = vmul.f32 %v1276, 0.044715
        %v1414 = vmul.f32 %v1165, 0.044715
        %v1415 = vmul.f32 %v1167, 0.044715
        %v1416 = vmul.f32 %v1278, 0.044715
        %v1417 = vmul.f32 %v1280, 0.044715
        %v1418 = vmul.f32 %v1171, 0.044715
        %v1419 = vmul.f32 %v1173, 0.044715
        %v1420 = vmul.f32 %v1284, 0.044715
        %v1421 = vmul.f32 %v1286, 0.044715
        %v1422 = vmul.f32 %v1175, 0.044715
        %v1423 = vmul.f32 %v1177, 0.044715
        %v1424 = vmul.f32 %v1288, 0.044715
        %v1425 = vmul.f32 %v1290, 0.044715
        %v1426 = vmul.f32 %v1181, 0.044715
        %v1427 = vmul.f32 %v1183, 0.044715
        %v1428 = vmul.f32 %v1294, 0.044715
        %v1429 = vmul.f32 %v1296, 0.044715
        %v1430 = vmul.f32 %v1185, 0.044715
        %v1431 = vmul.f32 %v1187, 0.044715
        %v1432 = vmul.f32 %v1298, 0.044715
        %v1433 = vmul.f32 %v1300, 0.044715
        %v1434 = vmul.f32 %v1191, 0.044715
        %v1435 = vmul.f32 %v1193, 0.044715
        %v1436 = vmul.f32 %v1304, 0.044715
        %v1437 = vmul.f32 %v1306, 0.044715
        %v1438 = vmul.f32 %v1195, 0.044715
        %v1439 = vmul.f32 %v1197, 0.044715
        %v1440 = vmul.f32 %v1308, 0.044715
        %v1441 = vmul.f32 %v1310, 0.044715
        %v1442 = vmul.f32 %v1201, 0.044715
        %v1443 = vmul.f32 %v1203, 0.044715
        %v1444 = vmul.f32 %v1314, 0.044715
        %v1445 = vmul.f32 %v1316, 0.044715
        %v1446 = vmul.f32 %v1205, 0.044715
        %v1447 = vmul.f32 %v1207, 0.044715
        %v1448 = vmul.f32 %v1318, 0.044715
        %v1449 = vmul.f32 %v1320, 0.044715
        %v1450 = vmul.f32 %v1386, %v1131
        %v1451 = vmul.f32 %v1387, %v1133
        %v1452 = vmul.f32 %v1388, %v1244
        %v1453 = vmul.f32 %v1389, %v1246
        %v1454 = vmul.f32 %v1390, %v1135
        %v1455 = vmul.f32 %v1391, %v1137
        %v1456 = vmul.f32 %v1392, %v1248
        %v1457 = vmul.f32 %v1393, %v1250
        %v1458 = vmul.f32 %v1394, %v1141
        %v1459 = vmul.f32 %v1395, %v1143
        %v1460 = vmul.f32 %v1396, %v1254
        %v1461 = vmul.f32 %v1397, %v1256
        %v1462 = vmul.f32 %v1398, %v1145
        %v1463 = vmul.f32 %v1399, %v1147
        %v1464 = vmul.f32 %v1400, %v1258
        %v1465 = vmul.f32 %v1401, %v1260
        %v1466 = vmul.f32 %v1402, %v1151
        %v1467 = vmul.f32 %v1403, %v1153
        %v1468 = vmul.f32 %v1404, %v1264
        %v1469 = vmul.f32 %v1405, %v1266
        %v1470 = vmul.f32 %v1406, %v1155
        %v1471 = vmul.f32 %v1407, %v1157
        %v1472 = vmul.f32 %v1408, %v1268
        %v1473 = vmul.f32 %v1409, %v1270
        %v1474 = vmul.f32 %v1410, %v1161
        %v1475 = vmul.f32 %v1411, %v1163
        %v1476 = vmul.f32 %v1412, %v1274
        %v1477 = vmul.f32 %v1413, %v1276
        %v1478 = vmul.f32 %v1414, %v1165
        %v1479 = vmul.f32 %v1415, %v1167
        %v1480 = vmul.f32 %v1416, %v1278
        %v1481 = vmul.f32 %v1417, %v1280
        %v1482 = vmul.f32 %v1418, %v1171
        %v1483 = vmul.f32 %v1419, %v1173
        %v1484 = vmul.f32 %v1420, %v1284
        %v1485 = vmul.f32 %v1421, %v1286
        %v1486 = vmul.f32 %v1422, %v1175
        %v1487 = vmul.f32 %v1423, %v1177
        %v1488 = vmul.f32 %v1424, %v1288
        %v1489 = vmul.f32 %v1425, %v1290
        %v1490 = vmul.f32 %v1426, %v1181
        %v1491 = vmul.f32 %v1427, %v1183
        %v1492 = vmul.f32 %v1428, %v1294
        %v1493 = vmul.f32 %v1429, %v1296
        %v1494 = vmul.f32 %v1430, %v1185
        %v1495 = vmul.f32 %v1431, %v1187
        %v1496 = vmul.f32 %v1432, %v1298
        %v1497 = vmul.f32 %v1433, %v1300
        %v1498 = vmul.f32 %v1434, %v1191
        %v1499 = vmul.f32 %v1435, %v1193
        %v1500 = vmul.f32 %v1436, %v1304
        %v1501 = vmul.f32 %v1437, %v1306
        %v1502 = vmul.f32 %v1438, %v1195
        %v1503 = vmul.f32 %v1439, %v1197
        %v1504 = vmul.f32 %v1440, %v1308
        %v1505 = vmul.f32 %v1441, %v1310
        %v1506 = vmul.f32 %v1442, %v1201
        %v1507 = vmul.f32 %v1443, %v1203
        %v1508 = vmul.f32 %v1444, %v1314
        %v1509 = vmul.f32 %v1445, %v1316
        %v1510 = vmul.f32 %v1446, %v1205
        %v1511 = vmul.f32 %v1447, %v1207
        %v1512 = vmul.f32 %v1448, %v1318
        %v1513 = vmul.f32 %v1449, %v1320
        %v1514 = vmul.f32 %v1450, %v1131
        %v1515 = vmul.f32 %v1451, %v1133
        %v1516 = vmul.f32 %v1452, %v1244
        %v1517 = vmul.f32 %v1453, %v1246
        %v1518 = vmul.f32 %v1454, %v1135
        %v1519 = vmul.f32 %v1455, %v1137
        %v1520 = vmul.f32 %v1456, %v1248
        %v1521 = vmul.f32 %v1457, %v1250
        %v1522 = vmul.f32 %v1458, %v1141
        %v1523 = vmul.f32 %v1459, %v1143
        %v1524 = vmul.f32 %v1460, %v1254
        %v1525 = vmul.f32 %v1461, %v1256
        %v1526 = vmul.f32 %v1462, %v1145
        %v1527 = vmul.f32 %v1463, %v1147
        %v1528 = vmul.f32 %v1464, %v1258
        %v1529 = vmul.f32 %v1465, %v1260
        %v1530 = vmul.f32 %v1466, %v1151
        %v1531 = vmul.f32 %v1467, %v1153
        %v1532 = vmul.f32 %v1468, %v1264
        %v1533 = vmul.f32 %v1469, %v1266
        %v1534 = vmul.f32 %v1470, %v1155
        %v1535 = vmul.f32 %v1471, %v1157
        %v1536 = vmul.f32 %v1472, %v1268
        %v1537 = vmul.f32 %v1473, %v1270
        %v1538 = vmul.f32 %v1474, %v1161
        %v1539 = vmul.f32 %v1475, %v1163
        %v1540 = vmul.f32 %v1476, %v1274
        %v1541 = vmul.f32 %v1477, %v1276
        %v1542 = vmul.f32 %v1478, %v1165
        %v1543 = vmul.f32 %v1479, %v1167
        %v1544 = vmul.f32 %v1480, %v1278
        %v1545 = vmul.f32 %v1481, %v1280
        %v1546 = vmul.f32 %v1482, %v1171
        %v1547 = vmul.f32 %v1483, %v1173
        %v1548 = vmul.f32 %v1484, %v1284
        %v1549 = vmul.f32 %v1485, %v1286
        %v1550 = vmul.f32 %v1486, %v1175
        %v1551 = vmul.f32 %v1487, %v1177
        %v1552 = vmul.f32 %v1488, %v1288
        %v1553 = vmul.f32 %v1489, %v1290
        %v1554 = vmul.f32 %v1490, %v1181
        %v1555 = vmul.f32 %v1491, %v1183
        %v1556 = vmul.f32 %v1492, %v1294
        %v1557 = vmul.f32 %v1493, %v1296
        %v1558 = vmul.f32 %v1494, %v1185
        %v1559 = vmul.f32 %v1495, %v1187
        %v1560 = vmul.f32 %v1496, %v1298
        %v1561 = vmul.f32 %v1497, %v1300
        %v1562 = vmul.f32 %v1498, %v1191
        %v1563 = vmul.f32 %v1499, %v1193
        %v1564 = vmul.f32 %v1500, %v1304
        %v1565 = vmul.f32 %v1501, %v1306
        %v1566 = vmul.f32 %v1502, %v1195
        %v1567 = vmul.f32 %v1503, %v1197
        %v1568 = vmul.f32 %v1504, %v1308
        %v1569 = vmul.f32 %v1505, %v1310
        %v1570 = vmul.f32 %v1506, %v1201
        %v1571 = vmul.f32 %v1507, %v1203
        %v1572 = vmul.f32 %v1508, %v1314
        %v1573 = vmul.f32 %v1509, %v1316
        %v1574 = vmul.f32 %v1510, %v1205
        %v1575 = vmul.f32 %v1511, %v1207
        %v1576 = vmul.f32 %v1512, %v1318
        %v1577 = vmul.f32 %v1513, %v1320
        %v1578 = vadd.f32 %v1131, %v1514
        %v1579 = vadd.f32 %v1133, %v1515
        %v1580 = vadd.f32 %v1244, %v1516
        %v1581 = vadd.f32 %v1246, %v1517
        %v1582 = vadd.f32 %v1135, %v1518
        %v1583 = vadd.f32 %v1137, %v1519
        %v1584 = vadd.f32 %v1248, %v1520
        %v1585 = vadd.f32 %v1250, %v1521
        %v1586 = vadd.f32 %v1141, %v1522
        %v1587 = vadd.f32 %v1143, %v1523
        %v1588 = vadd.f32 %v1254, %v1524
        %v1589 = vadd.f32 %v1256, %v1525
        %v1590 = vadd.f32 %v1145, %v1526
        %v1591 = vadd.f32 %v1147, %v1527
        %v1592 = vadd.f32 %v1258, %v1528
        %v1593 = vadd.f32 %v1260, %v1529
        %v1594 = vadd.f32 %v1151, %v1530
        %v1595 = vadd.f32 %v1153, %v1531
        %v1596 = vadd.f32 %v1264, %v1532
        %v1597 = vadd.f32 %v1266, %v1533
        %v1598 = vadd.f32 %v1155, %v1534
        %v1599 = vadd.f32 %v1157, %v1535
        %v1600 = vadd.f32 %v1268, %v1536
        %v1601 = vadd.f32 %v1270, %v1537
        %v1602 = vadd.f32 %v1161, %v1538
        %v1603 = vadd.f32 %v1163, %v1539
        %v1604 = vadd.f32 %v1274, %v1540
        %v1605 = vadd.f32 %v1276, %v1541
        %v1606 = vadd.f32 %v1165, %v1542
        %v1607 = vadd.f32 %v1167, %v1543
        %v1608 = vadd.f32 %v1278, %v1544
        %v1609 = vadd.f32 %v1280, %v1545
        %v1610 = vadd.f32 %v1171, %v1546
        %v1611 = vadd.f32 %v1173, %v1547
        %v1612 = vadd.f32 %v1284, %v1548
        %v1613 = vadd.f32 %v1286, %v1549
        %v1614 = vadd.f32 %v1175, %v1550
        %v1615 = vadd.f32 %v1177, %v1551
        %v1616 = vadd.f32 %v1288, %v1552
        %v1617 = vadd.f32 %v1290, %v1553
        %v1618 = vadd.f32 %v1181, %v1554
        %v1619 = vadd.f32 %v1183, %v1555
        %v1620 = vadd.f32 %v1294, %v1556
        %v1621 = vadd.f32 %v1296, %v1557
        %v1622 = vadd.f32 %v1185, %v1558
        %v1623 = vadd.f32 %v1187, %v1559
        %v1624 = vadd.f32 %v1298, %v1560
        %v1625 = vadd.f32 %v1300, %v1561
        %v1626 = vadd.f32 %v1191, %v1562
        %v1627 = vadd.f32 %v1193, %v1563
        %v1628 = vadd.f32 %v1304, %v1564
        %v1629 = vadd.f32 %v1306, %v1565
        %v1630 = vadd.f32 %v1195, %v1566
        %v1631 = vadd.f32 %v1197, %v1567
        %v1632 = vadd.f32 %v1308, %v1568
        %v1633 = vadd.f32 %v1310, %v1569
        %v1634 = vadd.f32 %v1201, %v1570
        %v1635 = vadd.f32 %v1203, %v1571
        %v1636 = vadd.f32 %v1314, %v1572
        %v1637 = vadd.f32 %v1316, %v1573
        %v1638 = vadd.f32 %v1205, %v1574
        %v1639 = vadd.f32 %v1207, %v1575
        %v1640 = vadd.f32 %v1318, %v1576
        %v1641 = vadd.f32 %v1320, %v1577
        %v1642 = vmul.f32 %v1578, 0.7978846
        %v1643 = vmul.f32 %v1579, 0.7978846
        %v1644 = vmul.f32 %v1580, 0.7978846
        %v1645 = vmul.f32 %v1581, 0.7978846
        %v1646 = vmul.f32 %v1582, 0.7978846
        %v1647 = vmul.f32 %v1583, 0.7978846
        %v1648 = vmul.f32 %v1584, 0.7978846
        %v1649 = vmul.f32 %v1585, 0.7978846
        %v1650 = vmul.f32 %v1586, 0.7978846
        %v1651 = vmul.f32 %v1587, 0.7978846
        %v1652 = vmul.f32 %v1588, 0.7978846
        %v1653 = vmul.f32 %v1589, 0.7978846
        %v1654 = vmul.f32 %v1590, 0.7978846
        %v1655 = vmul.f32 %v1591, 0.7978846
        %v1656 = vmul.f32 %v1592, 0.7978846
        %v1657 = vmul.f32 %v1593, 0.7978846
        %v1658 = vmul.f32 %v1594, 0.7978846
        %v1659 = vmul.f32 %v1595, 0.7978846
        %v1660 = vmul.f32 %v1596, 0.7978846
        %v1661 = vmul.f32 %v1597, 0.7978846
        %v1662 = vmul.f32 %v1598, 0.7978846
        %v1663 = vmul.f32 %v1599, 0.7978846
        %v1664 = vmul.f32 %v1600, 0.7978846
        %v1665 = vmul.f32 %v1601, 0.7978846
        %v1666 = vmul.f32 %v1602, 0.7978846
        %v1667 = vmul.f32 %v1603, 0.7978846
        %v1668 = vmul.f32 %v1604, 0.7978846
        %v1669 = vmul.f32 %v1605, 0.7978846
        %v1670 = vmul.f32 %v1606, 0.7978846
        %v1671 = vmul.f32 %v1607, 0.7978846
        %v1672 = vmul.f32 %v1608, 0.7978846
        %v1673 = vmul.f32 %v1609, 0.7978846
        %v1674 = vmul.f32 %v1610, 0.7978846
        %v1675 = vmul.f32 %v1611, 0.7978846
        %v1676 = vmul.f32 %v1612, 0.7978846
        %v1677 = vmul.f32 %v1613, 0.7978846
        %v1678 = vmul.f32 %v1614, 0.7978846
        %v1679 = vmul.f32 %v1615, 0.7978846
        %v1680 = vmul.f32 %v1616, 0.7978846
        %v1681 = vmul.f32 %v1617, 0.7978846
        %v1682 = vmul.f32 %v1618, 0.7978846
        %v1683 = vmul.f32 %v1619, 0.7978846
        %v1684 = vmul.f32 %v1620, 0.7978846
        %v1685 = vmul.f32 %v1621, 0.7978846
        %v1686 = vmul.f32 %v1622, 0.7978846
        %v1687 = vmul.f32 %v1623, 0.7978846
        %v1688 = vmul.f32 %v1624, 0.7978846
        %v1689 = vmul.f32 %v1625, 0.7978846
        %v1690 = vmul.f32 %v1626, 0.7978846
        %v1691 = vmul.f32 %v1627, 0.7978846
        %v1692 = vmul.f32 %v1628, 0.7978846
        %v1693 = vmul.f32 %v1629, 0.7978846
        %v1694 = vmul.f32 %v1630, 0.7978846
        %v1695 = vmul.f32 %v1631, 0.7978846
        %v1696 = vmul.f32 %v1632, 0.7978846
        %v1697 = vmul.f32 %v1633, 0.7978846
        %v1698 = vmul.f32 %v1634, 0.7978846
        %v1699 = vmul.f32 %v1635, 0.7978846
        %v1700 = vmul.f32 %v1636, 0.7978846
        %v1701 = vmul.f32 %v1637, 0.7978846
        %v1702 = vmul.f32 %v1638, 0.7978846
        %v1703 = vmul.f32 %v1639, 0.7978846
        %v1704 = vmul.f32 %v1640, 0.7978846
        %v1705 = vmul.f32 %v1641, 0.7978846
        %v1706 = vtanh.pop %v1642
        %v1707 = vtanh.pop %v1643
        %v1708 = vtanh.pop %v1644
        %v1709 = vtanh.pop %v1645
        %v1710 = vtanh.pop %v1646
        %v1711 = vtanh.pop %v1647
        %v1712 = vtanh.pop %v1648
        %v1713 = vtanh.pop %v1649
        %v1714 = vtanh.pop %v1650
        %v1715 = vtanh.pop %v1651
        %v1716 = vtanh.pop %v1652
        %v1717 = vtanh.pop %v1653
        %v1718 = vtanh.pop %v1654
        %v1719 = vtanh.pop %v1655
        %v1720 = vtanh.pop %v1656
        %v1721 = vtanh.pop %v1657
        %v1722 = vtanh.pop %v1658
        %v1723 = vtanh.pop %v1659
        %v1724 = vtanh.pop %v1660
        %v1725 = vtanh.pop %v1661
        %v1726 = vtanh.pop %v1662
        %v1727 = vtanh.pop %v1663
        %v1728 = vtanh.pop %v1664
        %v1729 = vtanh.pop %v1665
        %v1730 = vtanh.pop %v1666
        %v1731 = vtanh.pop %v1667
        %v1732 = vtanh.pop %v1668
        %v1733 = vtanh.pop %v1669
        %v1734 = vtanh.pop %v1670
        %v1735 = vtanh.pop %v1671
        %v1736 = vtanh.pop %v1672
        %v1737 = vtanh.pop %v1673
        %v1738 = vtanh.pop %v1674
        %v1739 = vtanh.pop %v1675
        %v1740 = vtanh.pop %v1676
        %v1741 = vtanh.pop %v1677
        %v1742 = vtanh.pop %v1678
        %v1743 = vtanh.pop %v1679
        %v1744 = vtanh.pop %v1680
        %v1745 = vtanh.pop %v1681
        %v1746 = vtanh.pop %v1682
        %v1747 = vtanh.pop %v1683
        %v1748 = vtanh.pop %v1684
        %v1749 = vtanh.pop %v1685
        %v1750 = vtanh.pop %v1686
        %v1751 = vtanh.pop %v1687
        %v1752 = vtanh.pop %v1688
        %v1753 = vtanh.pop %v1689
        %v1754 = vtanh.pop %v1690
        %v1755 = vtanh.pop %v1691
        %v1756 = vtanh.pop %v1692
        %v1757 = vtanh.pop %v1693
        %v1758 = vtanh.pop %v1694
        %v1759 = vtanh.pop %v1695
        %v1760 = vtanh.pop %v1696
        %v1761 = vtanh.pop %v1697
        %v1762 = vtanh.pop %v1698
        %v1763 = vtanh.pop %v1699
        %v1764 = vtanh.pop %v1700
        %v1765 = vtanh.pop %v1701
        %v1766 = vtanh.pop %v1702
        %v1767 = vtanh.pop %v1703
        %v1768 = vtanh.pop %v1704
        %v1769 = vtanh.pop %v1705
        %v1770 = vadd.f32 %v1706, 1.0
        %v1771 = vadd.f32 %v1707, 1.0
        %v1772 = vadd.f32 %v1708, 1.0
        %v1773 = vadd.f32 %v1709, 1.0
        %v1774 = vadd.f32 %v1710, 1.0
        %v1775 = vadd.f32 %v1711, 1.0
        %v1776 = vadd.f32 %v1712, 1.0
        %v1777 = vadd.f32 %v1713, 1.0
        %v1778 = vadd.f32 %v1714, 1.0
        %v1779 = vadd.f32 %v1715, 1.0
        %v1780 = vadd.f32 %v1716, 1.0
        %v1781 = vadd.f32 %v1717, 1.0
        %v1782 = vadd.f32 %v1718, 1.0
        %v1783 = vadd.f32 %v1719, 1.0
        %v1784 = vadd.f32 %v1720, 1.0
        %v1785 = vadd.f32 %v1721, 1.0
        %v1786 = vadd.f32 %v1722, 1.0
        %v1787 = vadd.f32 %v1723, 1.0
        %v1788 = vadd.f32 %v1724, 1.0
        %v1789 = vadd.f32 %v1725, 1.0
        %v1790 = vadd.f32 %v1726, 1.0
        %v1791 = vadd.f32 %v1727, 1.0
        %v1792 = vadd.f32 %v1728, 1.0
        %v1793 = vadd.f32 %v1729, 1.0
        %v1794 = vadd.f32 %v1730, 1.0
        %v1795 = vadd.f32 %v1731, 1.0
        %v1796 = vadd.f32 %v1732, 1.0
        %v1797 = vadd.f32 %v1733, 1.0
        %v1798 = vadd.f32 %v1734, 1.0
        %v1799 = vadd.f32 %v1735, 1.0
        %v1800 = vadd.f32 %v1736, 1.0
        %v1801 = vadd.f32 %v1737, 1.0
        %v1802 = vadd.f32 %v1738, 1.0
        %v1803 = vadd.f32 %v1739, 1.0
        %v1804 = vadd.f32 %v1740, 1.0
        %v1805 = vadd.f32 %v1741, 1.0
        %v1806 = vadd.f32 %v1742, 1.0
        %v1807 = vadd.f32 %v1743, 1.0
        %v1808 = vadd.f32 %v1744, 1.0
        %v1809 = vadd.f32 %v1745, 1.0
        %v1810 = vadd.f32 %v1746, 1.0
        %v1811 = vadd.f32 %v1747, 1.0
        %v1812 = vadd.f32 %v1748, 1.0
        %v1813 = vadd.f32 %v1749, 1.0
        %v1814 = vadd.f32 %v1750, 1.0
        %v1815 = vadd.f32 %v1751, 1.0
        %v1816 = vadd.f32 %v1752, 1.0
        %v1817 = vadd.f32 %v1753, 1.0
        %v1818 = vadd.f32 %v1754, 1.0
        %v1819 = vadd.f32 %v1755, 1.0
        %v1820 = vadd.f32 %v1756, 1.0
        %v1821 = vadd.f32 %v1757, 1.0
        %v1822 = vadd.f32 %v1758, 1.0
        %v1823 = vadd.f32 %v1759, 1.0
        %v1824 = vadd.f32 %v1760, 1.0
        %v1825 = vadd.f32 %v1761, 1.0
        %v1826 = vadd.f32 %v1762, 1.0
        %v1827 = vadd.f32 %v1763, 1.0
        %v1828 = vadd.f32 %v1764, 1.0
        %v1829 = vadd.f32 %v1765, 1.0
        %v1830 = vadd.f32 %v1766, 1.0
        %v1831 = vadd.f32 %v1767, 1.0
        %v1832 = vadd.f32 %v1768, 1.0
        %v1833 = vadd.f32 %v1769, 1.0
        %v1834 = vmul.f32 %v1322, %v1770
        %v1835 = vmul.f32 %v1323, %v1771
        %v1836 = vmul.f32 %v1324, %v1772
        %v1837 = vmul.f32 %v1325, %v1773
        %v1838 = vmul.f32 %v1326, %v1774
        %v1839 = vmul.f32 %v1327, %v1775
        %v1840 = vmul.f32 %v1328, %v1776
        %v1841 = vmul.f32 %v1329, %v1777
        %v1842 = vmul.f32 %v1330, %v1778
        %v1843 = vmul.f32 %v1331, %v1779
        %v1844 = vmul.f32 %v1332, %v1780
        %v1845 = vmul.f32 %v1333, %v1781
        %v1846 = vmul.f32 %v1334, %v1782
        %v1847 = vmul.f32 %v1335, %v1783
        %v1848 = vmul.f32 %v1336, %v1784
        %v1849 = vmul.f32 %v1337, %v1785
        %v1850 = vmul.f32 %v1338, %v1786
        %v1851 = vmul.f32 %v1339, %v1787
        %v1852 = vmul.f32 %v1340, %v1788
        %v1853 = vmul.f32 %v1341, %v1789
        %v1854 = vmul.f32 %v1342, %v1790
        %v1855 = vmul.f32 %v1343, %v1791
        %v1856 = vmul.f32 %v1344, %v1792
        %v1857 = vmul.f32 %v1345, %v1793
        %v1858 = vmul.f32 %v1346, %v1794
        %v1859 = vmul.f32 %v1347, %v1795
        %v1860 = vmul.f32 %v1348, %v1796
        %v1861 = vmul.f32 %v1349, %v1797
        %v1862 = vmul.f32 %v1350, %v1798
        %v1863 = vmul.f32 %v1351, %v1799
        %v1864 = vmul.f32 %v1352, %v1800
        %v1865 = vmul.f32 %v1353, %v1801
        %v1866 = vmul.f32 %v1354, %v1802
        %v1867 = vmul.f32 %v1355, %v1803
        %v1868 = vmul.f32 %v1356, %v1804
        %v1869 = vmul.f32 %v1357, %v1805
        %v1870 = vmul.f32 %v1358, %v1806
        %v1871 = vmul.f32 %v1359, %v1807
        %v1872 = vmul.f32 %v1360, %v1808
        %v1873 = vmul.f32 %v1361, %v1809
        %v1874 = vmul.f32 %v1362, %v1810
        %v1875 = vmul.f32 %v1363, %v1811
        %v1876 = vmul.f32 %v1364, %v1812
        %v1877 = vmul.f32 %v1365, %v1813
        %v1878 = vmul.f32 %v1366, %v1814
        %v1879 = vmul.f32 %v1367, %v1815
        %v1880 = vmul.f32 %v1368, %v1816
        %v1881 = vmul.f32 %v1369, %v1817
        %v1882 = vmul.f32 %v1370, %v1818
        %v1883 = vmul.f32 %v1371, %v1819
        %v1884 = vmul.f32 %v1372, %v1820
        %v1885 = vmul.f32 %v1373, %v1821
        %v1886 = vmul.f32 %v1374, %v1822
        %v1887 = vmul.f32 %v1375, %v1823
        %v1888 = vmul.f32 %v1376, %v1824
        %v1889 = vmul.f32 %v1377, %v1825
        %v1890 = vmul.f32 %v1378, %v1826
        %v1891 = vmul.f32 %v1379, %v1827
        %v1892 = vmul.f32 %v1380, %v1828
        %v1893 = vmul.f32 %v1381, %v1829
        %v1894 = vmul.f32 %v1382, %v1830
        %v1895 = vmul.f32 %v1383, %v1831
        %v1896 = vmul.f32 %v1384, %v1832
        %v1897 = vmul.f32 %v1385, %v1833
        %v1898 = vpack.c.bf16 %v1838, %v1834
        %v1899 = vpack.c.bf16 %v1839, %v1835
        %v1900 = vpack.c.bf16 %v1840, %v1836
        %v1901 = vpack.c.bf16 %v1841, %v1837
        %v1902 = vpack.c.bf16 %v1846, %v1842
        %v1903 = vpack.c.bf16 %v1847, %v1843
        %v1904 = vpack.c.bf16 %v1848, %v1844
        %v1905 = vpack.c.bf16 %v1849, %v1845
        %v1906 = vpack.c.bf16 %v1854, %v1850
        %v1907 = vpack.c.bf16 %v1855, %v1851
        %v1908 = vpack.c.bf16 %v1856, %v1852
        %v1909 = vpack.c.bf16 %v1857, %v1853
        %v1910 = vpack.c.bf16 %v1862, %v1858
        %v1911 = vpack.c.bf16 %v1863, %v1859
        %v1912 = vpack.c.bf16 %v1864, %v1860
        %v1913 = vpack.c.bf16 %v1865, %v1861
        %v1914 = vpack.c.bf16 %v1870, %v1866
        %v1915 = vpack.c.bf16 %v1871, %v1867
        %v1916 = vpack.c.bf16 %v1872, %v1868
        %v1917 = vpack.c.bf16 %v1873, %v1869
        %v1918 = vpack.c.bf16 %v1878, %v1874
        %v1919 = vpack.c.bf16 %v1879, %v1875
        %v1920 = vpack.c.bf16 %v1880, %v1876
        %v1921 = vpack.c.bf16 %v1881, %v1877
        %v1922 = vpack.c.bf16 %v1886, %v1882
        %v1923 = vpack.c.bf16 %v1887, %v1883
        %v1924 = vpack.c.bf16 %v1888, %v1884
        %v1925 = vpack.c.bf16 %v1889, %v1885
        %v1926 = vpack.c.bf16 %v1894, %v1890
        %v1927 = vpack.c.bf16 %v1895, %v1891
        %v1928 = vpack.c.bf16 %v1896, %v1892
        %v1929 = vpack.c.bf16 %v1897, %v1893
        %v1930 = vld [vmem:[#allocation10] sm:$0xf]
        %v1931 = vld [vmem:[#allocation10 + $0x4] sm:$0xf]
        %v1932 = vld [vmem:[#allocation10 + $0x8] sm:$0xf]
        %v1933 = vld [vmem:[#allocation10 + $0xc] sm:$0xf]
        %v1934 = vld [vmem:[#allocation10 + $0x10] sm:$0xf]
        %v1935 = vld [vmem:[#allocation10 + $0x14] sm:$0xf]
        %v1936 = vld [vmem:[#allocation10 + $0x18] sm:$0xf]
        %v1937 = vld [vmem:[#allocation10 + $0x1c] sm:$0xf]
        %v1938 = vld [vmem:[#allocation10 + $0x20] sm:$0xf]
        %v1939 = vld [vmem:[#allocation10 + $0x24] sm:$0xf]
        %v1940 = vld [vmem:[#allocation10 + $0x28] sm:$0xf]
        %v1941 = vld [vmem:[#allocation10 + $0x2c] sm:$0xf]
        %v1942 = vld [vmem:[#allocation10 + $0x30] sm:$0xf]
        %v1943 = vld [vmem:[#allocation10 + $0x34] sm:$0xf]
        %v1944 = vld [vmem:[#allocation10 + $0x38] sm:$0xf]
        %v1945 = vld [vmem:[#allocation10 + $0x3c] sm:$0xf]
        %v1946 = vld [vmem:[#allocation10 + $0x40] sm:$0xf]
        %v1947 = vld [vmem:[#allocation10 + $0x44] sm:$0xf]
        %v1948 = vld [vmem:[#allocation10 + $0x48] sm:$0xf]
        %v1949 = vld [vmem:[#allocation10 + $0x4c] sm:$0xf]
        %v1950 = vld [vmem:[#allocation10 + $0x50] sm:$0xf]
        %v1951 = vld [vmem:[#allocation10 + $0x54] sm:$0xf]
        %v1952 = vld [vmem:[#allocation10 + $0x58] sm:$0xf]
        %v1953 = vld [vmem:[#allocation10 + $0x5c] sm:$0xf]
        %v1954 = vld [vmem:[#allocation10 + $0x60] sm:$0xf]
        %v1955 = vld [vmem:[#allocation10 + $0x64] sm:$0xf]
        %v1956 = vld [vmem:[#allocation10 + $0x68] sm:$0xf]
        %v1957 = vld [vmem:[#allocation10 + $0x6c] sm:$0xf]
        %v1958 = vld [vmem:[#allocation10 + $0x70] sm:$0xf]
        %v1959 = vld [vmem:[#allocation10 + $0x74] sm:$0xf]
        %v1960 = vld [vmem:[#allocation10 + $0x78] sm:$0xf]
        %v1961 = vld [vmem:[#allocation10 + $0x7c] sm:$0xf]
        %v1962 = vld [vmem:[#allocation10 + $0x80] sm:$0xf]
        %v1963 = vld [vmem:[#allocation10 + $0x84] sm:$0xf]
        %v1964 = vld [vmem:[#allocation10 + $0x88] sm:$0xf]
        %v1965 = vld [vmem:[#allocation10 + $0x8c] sm:$0xf]
        %v1966 = vld [vmem:[#allocation10 + $0x90] sm:$0xf]
        %v1967 = vld [vmem:[#allocation10 + $0x94] sm:$0xf]
        %v1968 = vld [vmem:[#allocation10 + $0x98] sm:$0xf]
        %v1969 = vld [vmem:[#allocation10 + $0x9c] sm:$0xf]
        %v1970 = vld [vmem:[#allocation10 + $0xa0] sm:$0xf]
        %v1971 = vld [vmem:[#allocation10 + $0xa4] sm:$0xf]
        %v1972 = vld [vmem:[#allocation10 + $0xa8] sm:$0xf]
        %v1973 = vld [vmem:[#allocation10 + $0xac] sm:$0xf]
        %v1974 = vld [vmem:[#allocation10 + $0xb0] sm:$0xf]
        %v1975 = vld [vmem:[#allocation10 + $0xb4] sm:$0xf]
        %v1976 = vld [vmem:[#allocation10 + $0xb8] sm:$0xf]
        %v1977 = vld [vmem:[#allocation10 + $0xbc] sm:$0xf]
        %v1978 = vld [vmem:[#allocation10 + $0xc0] sm:$0xf]
        %v1979 = vld [vmem:[#allocation10 + $0xc4] sm:$0xf]
        %v1980 = vld [vmem:[#allocation10 + $0xc8] sm:$0xf]
        %v1981 = vld [vmem:[#allocation10 + $0xcc] sm:$0xf]
        %v1982 = vld [vmem:[#allocation10 + $0xd0] sm:$0xf]
        %v1983 = vld [vmem:[#allocation10 + $0xd4] sm:$0xf]
        %v1984 = vld [vmem:[#allocation10 + $0xd8] sm:$0xf]
        %v1985 = vld [vmem:[#allocation10 + $0xdc] sm:$0xf]
        %v1986 = vld [vmem:[#allocation10 + $0xe0] sm:$0xf]
        %v1987 = vld [vmem:[#allocation10 + $0xe4] sm:$0xf]
        %v1988 = vld [vmem:[#allocation10 + $0xe8] sm:$0xf]
        %v1989 = vld [vmem:[#allocation10 + $0xec] sm:$0xf]
        %v1990 = vld [vmem:[#allocation10 + $0xf0] sm:$0xf]
        %v1991 = vld [vmem:[#allocation10 + $0xf4] sm:$0xf]
        %v1992 = vld [vmem:[#allocation10 + $0xf8] sm:$0xf]
        %v1993 = vld [vmem:[#allocation10 + $0xfc] sm:$0xf]
        %v1994 = vlaneseq
        %v1995 = vshrl.u32 %v1994, 7
        %v1996 = vsub.s32 0, %v1995
        %v1997 = vrot.slane %v419, %v1996
        %v2062 = vunpack.c.l.b16 %v1930
        %v2063 = vunpack.c.l.b16 %v1931
        %v2064 = vunpack.c.l.b16 %v1932
        %v2065 = vunpack.c.l.b16 %v1933
        %v2066 = vunpack.c.l.b16 %v1934
        %v2067 = vunpack.c.l.b16 %v1935
        %v2068 = vunpack.c.l.b16 %v1936
        %v2069 = vunpack.c.l.b16 %v1937
        %v2070 = vunpack.c.l.b16 %v1938
        %v2071 = vunpack.c.l.b16 %v1939
        %v2072 = vunpack.c.l.b16 %v1940
        %v2073 = vunpack.c.l.b16 %v1941
        %v2074 = vunpack.c.l.b16 %v1942
        %v2075 = vunpack.c.l.b16 %v1943
        %v2076 = vunpack.c.l.b16 %v1944
        %v2077 = vunpack.c.l.b16 %v1945
        %v2078 = vunpack.c.l.b16 %v1946
        %v2079 = vunpack.c.l.b16 %v1947
        %v2080 = vunpack.c.l.b16 %v1948
        %v2081 = vunpack.c.l.b16 %v1949
        %v2082 = vunpack.c.l.b16 %v1950
        %v2083 = vunpack.c.l.b16 %v1951
        %v2084 = vunpack.c.l.b16 %v1952
        %v2085 = vunpack.c.l.b16 %v1953
        %v2086 = vunpack.c.l.b16 %v1954
        %v2087 = vunpack.c.l.b16 %v1955
        %v2088 = vunpack.c.l.b16 %v1956
        %v2089 = vunpack.c.l.b16 %v1957
        %v2090 = vunpack.c.l.b16 %v1958
        %v2091 = vunpack.c.l.b16 %v1959
        %v2092 = vunpack.c.l.b16 %v1960
        %v2093 = vunpack.c.l.b16 %v1961
        %v2094 = vunpack.c.l.b16 %v1962
        %v2095 = vunpack.c.l.b16 %v1963
        %v2096 = vunpack.c.l.b16 %v1964
        %v2097 = vunpack.c.l.b16 %v1965
        %v2098 = vunpack.c.l.b16 %v1966
        %v2099 = vunpack.c.l.b16 %v1967
        %v2100 = vunpack.c.l.b16 %v1968
        %v2101 = vunpack.c.l.b16 %v1969
        %v2102 = vunpack.c.l.b16 %v1970
        %v2103 = vunpack.c.l.b16 %v1971
        %v2104 = vunpack.c.l.b16 %v1972
        %v2105 = vunpack.c.l.b16 %v1973
        %v2106 = vunpack.c.l.b16 %v1974
        %v2107 = vunpack.c.l.b16 %v1975
        %v2108 = vunpack.c.l.b16 %v1976
        %v2109 = vunpack.c.l.b16 %v1977
        %v2110 = vunpack.c.l.b16 %v1978
        %v2111 = vunpack.c.l.b16 %v1979
        %v2112 = vunpack.c.l.b16 %v1980
        %v2113 = vunpack.c.l.b16 %v1981
        %v2114 = vunpack.c.l.b16 %v1982
        %v2115 = vunpack.c.l.b16 %v1983
        %v2116 = vunpack.c.l.b16 %v1984
        %v2117 = vunpack.c.l.b16 %v1985
        %v2118 = vunpack.c.l.b16 %v1986
        %v2119 = vunpack.c.l.b16 %v1987
        %v2120 = vunpack.c.l.b16 %v1988
        %v2121 = vunpack.c.l.b16 %v1989
        %v2122 = vunpack.c.l.b16 %v1990
        %v2123 = vunpack.c.l.b16 %v1991
        %v2124 = vunpack.c.l.b16 %v1992
        %v2125 = vunpack.c.l.b16 %v1993
        %v2126 = vpack.c.b16 %v2063, %v2062
        %v2127 = vpack.c.b16 %v2065, %v2064
        %v2128 = vpack.c.b16 %v2067, %v2066
        %v2129 = vpack.c.b16 %v2069, %v2068
        %v2130 = vpack.c.b16 %v2071, %v2070
        %v2131 = vpack.c.b16 %v2073, %v2072
        %v2132 = vpack.c.b16 %v2075, %v2074
        %v2133 = vpack.c.b16 %v2077, %v2076
        %v2134 = vpack.c.b16 %v2079, %v2078
        %v2135 = vpack.c.b16 %v2081, %v2080
        %v2136 = vpack.c.b16 %v2083, %v2082
        %v2137 = vpack.c.b16 %v2085, %v2084
        %v2138 = vpack.c.b16 %v2087, %v2086
        %v2139 = vpack.c.b16 %v2089, %v2088
        %v2140 = vpack.c.b16 %v2091, %v2090
        %v2141 = vpack.c.b16 %v2093, %v2092
        %v2142 = vpack.c.b16 %v2095, %v2094
        %v2143 = vpack.c.b16 %v2097, %v2096
        %v2144 = vpack.c.b16 %v2099, %v2098
        %v2145 = vpack.c.b16 %v2101, %v2100
        %v2146 = vpack.c.b16 %v2103, %v2102
        %v2147 = vpack.c.b16 %v2105, %v2104
        %v2148 = vpack.c.b16 %v2107, %v2106
        %v2149 = vpack.c.b16 %v2109, %v2108
        %v2150 = vpack.c.b16 %v2111, %v2110
        %v2151 = vpack.c.b16 %v2113, %v2112
        %v2152 = vpack.c.b16 %v2115, %v2114
        %v2153 = vpack.c.b16 %v2117, %v2116
        %v2154 = vpack.c.b16 %v2119, %v2118
        %v2155 = vpack.c.b16 %v2121, %v2120
        %v2156 = vpack.c.b16 %v2123, %v2122
        %v2157 = vpack.c.b16 %v2125, %v2124
        %2190 = vmatprep.subr.bf16.mxu0 0
        %2191 = vmatpush1.bf16.msra.mxu0 %v2133
        %2192 = vmatprep.subr.bf16.mxu0 0
        %2193 = vmatpush1.bf16.msra.mxu0 %v2132
        %2194 = vmatprep.subr.bf16.mxu0 0
        %2195 = vmatpush1.bf16.msra.mxu0 %v2131
        %2196 = vmatprep.subr.bf16.mxu0 0
        %2197 = vmatpush1.bf16.msra.mxu0 %v2130
        %2198 = vmatprep.subr.bf16.mxu0 0
        %2199 = vmatpush1.bf16.msra.mxu0 %v2129
        %2200 = vmatprep.subr.bf16.mxu0 0
        %2201 = vmatpush1.bf16.msra.mxu0 %v2128
        %2202 = vmatprep.subr.bf16.mxu0 0
        %2203 = vmatpush1.bf16.msra.mxu0 %v2127
        %2204 = vmatprep.subr.bf16.mxu0 0
        %2205 = vmatpush1.bf16.msra.mxu0 %v2126
        %2206 = vmatprep.subr.bf16.mxu0 0
        %2207 = vmatpush2.bf16.msra.mxu0 %v2141
        %2208 = vmatprep.subr.bf16.mxu0 0
        %2209 = vmatpush2.bf16.msra.mxu0 %v2140
        %2210 = vmatprep.subr.bf16.mxu0 0
        %2211 = vmatpush2.bf16.msra.mxu0 %v2139
        %2212 = vmatprep.subr.bf16.mxu0 0
        %2213 = vmatpush2.bf16.msra.mxu0 %v2138
        %2214 = vmatprep.subr.bf16.mxu0 0
        %2215 = vmatpush2.bf16.msra.mxu0 %v2137
        %2216 = vmatprep.subr.bf16.mxu0 0
        %2217 = vmatpush2.bf16.msra.mxu0 %v2136
        %2218 = vmatprep.subr.bf16.mxu0 0
        %2219 = vmatpush2.bf16.msra.mxu0 %v2135
        %2220 = vmatprep.subr.bf16.mxu0 0
        %2221 = vmatpush2.bf16.msra.mxu0 %v2134
        %2222 = vmatprep.mubr.bf16.mxu0 %v1899
        %2223 = vmatmul.mubr.bf16.gmra.mxu0 %v1898
        %v2224 = vpop.f32.mrf.mxu0
        %v2225 = vadd.f32 %v1997, %v2224
        %v2226 = vpop.f32.mrf.mxu0
        %v2227 = vpop.f32.mrf.mxu0
        %v2228 = vadd.f32 %v1997, %v2227
        %v2229 = vpop.f32.mrf.mxu0
        %2230 = vmatprep.mubr.bf16.mxu0 %v1903
        %2231 = vmatmul.mubr.bf16.gmra.mxu0 %v1902
        %v2232 = vpop.f32.mrf.mxu0
        %v2233 = vadd.f32 %v1997, %v2232
        %v2234 = vpop.f32.mrf.mxu0
        %v2235 = vpop.f32.mrf.mxu0
        %v2236 = vadd.f32 %v1997, %v2235
        %v2237 = vpop.f32.mrf.mxu0
        %2238 = vmatprep.mubr.bf16.mxu0 %v1907
        %2239 = vmatmul.mubr.bf16.gmra.mxu0 %v1906
        %v2240 = vpop.f32.mrf.mxu0
        %v2241 = vadd.f32 %v1997, %v2240
        %v2242 = vpop.f32.mrf.mxu0
        %v2243 = vpop.f32.mrf.mxu0
        %v2244 = vadd.f32 %v1997, %v2243
        %v2245 = vpop.f32.mrf.mxu0
        %2246 = vmatprep.mubr.bf16.mxu0 %v1911
        %2247 = vmatmul.mubr.bf16.gmra.mxu0 %v1910
        %v2248 = vpop.f32.mrf.mxu0
        %v2249 = vadd.f32 %v1997, %v2248
        %v2250 = vpop.f32.mrf.mxu0
        %v2251 = vpop.f32.mrf.mxu0
        %v2252 = vadd.f32 %v1997, %v2251
        %v2253 = vpop.f32.mrf.mxu0
        %2254 = vmatprep.mubr.bf16.mxu0 %v1915
        %2255 = vmatmul.mubr.bf16.gmra.mxu0 %v1914
        %v2256 = vpop.f32.mrf.mxu0
        %v2257 = vadd.f32 %v1997, %v2256
        %v2258 = vpop.f32.mrf.mxu0
        %v2259 = vpop.f32.mrf.mxu0
        %v2260 = vadd.f32 %v1997, %v2259
        %v2261 = vpop.f32.mrf.mxu0
        %2262 = vmatprep.mubr.bf16.mxu0 %v1919
        %2263 = vmatmul.mubr.bf16.gmra.mxu0 %v1918
        %v2264 = vpop.f32.mrf.mxu0
        %v2265 = vadd.f32 %v1997, %v2264
        %v2266 = vpop.f32.mrf.mxu0
        %v2267 = vpop.f32.mrf.mxu0
        %v2268 = vadd.f32 %v1997, %v2267
        %v2269 = vpop.f32.mrf.mxu0
        %2270 = vmatprep.mubr.bf16.mxu0 %v1923
        %2271 = vmatmul.mubr.bf16.gmra.mxu0 %v1922
        %v2272 = vpop.f32.mrf.mxu0
        %v2273 = vadd.f32 %v1997, %v2272
        %v2274 = vpop.f32.mrf.mxu0
        %v2275 = vpop.f32.mrf.mxu0
        %v2276 = vadd.f32 %v1997, %v2275
        %v2277 = vpop.f32.mrf.mxu0
        %2278 = vmatprep.mubr.bf16.mxu0 %v1927
        %2279 = vmatmul.mubr.bf16.gmra.mxu0 %v1926
        %v2280 = vpop.f32.mrf.mxu0
        %v2281 = vadd.f32 %v1997, %v2280
        %v2282 = vpop.f32.mrf.mxu0
        %v2283 = vpop.f32.mrf.mxu0
        %v2284 = vadd.f32 %v1997, %v2283
        %v2285 = vpop.f32.mrf.mxu0
        %2286 = vdwg.mxu0
        %2287 = vmatprep.subr.bf16.mxu0 0
        %2288 = vmatpush1.bf16.msra.mxu0 %v2149
        %2289 = vmatprep.subr.bf16.mxu0 0
        %2290 = vmatpush1.bf16.msra.mxu0 %v2148
        %2291 = vmatprep.subr.bf16.mxu0 0
        %2292 = vmatpush1.bf16.msra.mxu0 %v2147
        %2293 = vmatprep.subr.bf16.mxu0 0
        %2294 = vmatpush1.bf16.msra.mxu0 %v2146
        %2295 = vmatprep.subr.bf16.mxu0 0
        %2296 = vmatpush1.bf16.msra.mxu0 %v2145
        %2297 = vmatprep.subr.bf16.mxu0 0
        %2298 = vmatpush1.bf16.msra.mxu0 %v2144
        %2299 = vmatprep.subr.bf16.mxu0 0
        %2300 = vmatpush1.bf16.msra.mxu0 %v2143
        %2301 = vmatprep.subr.bf16.mxu0 0
        %2302 = vmatpush1.bf16.msra.mxu0 %v2142
        %2303 = vmatprep.subr.bf16.mxu0 0
        %2304 = vmatpush2.bf16.msra.mxu0 %v2157
        %2305 = vmatprep.subr.bf16.mxu0 0
        %2306 = vmatpush2.bf16.msra.mxu0 %v2156
        %2307 = vmatprep.subr.bf16.mxu0 0
        %2308 = vmatpush2.bf16.msra.mxu0 %v2155
        %2309 = vmatprep.subr.bf16.mxu0 0
        %2310 = vmatpush2.bf16.msra.mxu0 %v2154
        %2311 = vmatprep.subr.bf16.mxu0 0
        %2312 = vmatpush2.bf16.msra.mxu0 %v2153
        %2313 = vmatprep.subr.bf16.mxu0 0
        %2314 = vmatpush2.bf16.msra.mxu0 %v2152
        %2315 = vmatprep.subr.bf16.mxu0 0
        %2316 = vmatpush2.bf16.msra.mxu0 %v2151
        %2317 = vmatprep.subr.bf16.mxu0 0
        %2318 = vmatpush2.bf16.msra.mxu0 %v2150
        %2319 = vmatprep.mubr.bf16.mxu0 %v1901
        %2320 = vmatmul.mubr.bf16.gmra.mxu0 %v1900
        %v2321 = vpop.f32.mrf.mxu0
        %v2322 = vadd.f32 %v2225, %v2321
        %v2323 = vpop.f32.mrf.mxu0
        %v2324 = vpop.f32.mrf.mxu0
        %v2325 = vadd.f32 %v2228, %v2324
        %v2326 = vpop.f32.mrf.mxu0
        %2327 = vmatprep.mubr.bf16.mxu0 %v1905
        %2328 = vmatmul.mubr.bf16.gmra.mxu0 %v1904
        %v2329 = vpop.f32.mrf.mxu0
        %v2330 = vadd.f32 %v2233, %v2329
        %v2331 = vpop.f32.mrf.mxu0
        %v2332 = vpop.f32.mrf.mxu0
        %v2333 = vadd.f32 %v2236, %v2332
        %v2334 = vpop.f32.mrf.mxu0
        %2335 = vmatprep.mubr.bf16.mxu0 %v1909
        %2336 = vmatmul.mubr.bf16.gmra.mxu0 %v1908
        %v2337 = vpop.f32.mrf.mxu0
        %v2338 = vadd.f32 %v2241, %v2337
        %v2339 = vpop.f32.mrf.mxu0
        %v2340 = vpop.f32.mrf.mxu0
        %v2341 = vadd.f32 %v2244, %v2340
        %v2342 = vpop.f32.mrf.mxu0
        %2343 = vmatprep.mubr.bf16.mxu0 %v1913
        %2344 = vmatmul.mubr.bf16.gmra.mxu0 %v1912
        %v2345 = vpop.f32.mrf.mxu0
        %v2346 = vadd.f32 %v2249, %v2345
        %v2347 = vpop.f32.mrf.mxu0
        %v2348 = vpop.f32.mrf.mxu0
        %v2349 = vadd.f32 %v2252, %v2348
        %v2350 = vpop.f32.mrf.mxu0
        %2351 = vmatprep.mubr.bf16.mxu0 %v1917
        %2352 = vmatmul.mubr.bf16.gmra.mxu0 %v1916
        %v2353 = vpop.f32.mrf.mxu0
        %v2354 = vadd.f32 %v2257, %v2353
        %v2355 = vpop.f32.mrf.mxu0
        %v2356 = vpop.f32.mrf.mxu0
        %v2357 = vadd.f32 %v2260, %v2356
        %v2358 = vpop.f32.mrf.mxu0
        %2359 = vmatprep.mubr.bf16.mxu0 %v1921
        %2360 = vmatmul.mubr.bf16.gmra.mxu0 %v1920
        %v2361 = vpop.f32.mrf.mxu0
        %v2362 = vadd.f32 %v2265, %v2361
        %v2363 = vpop.f32.mrf.mxu0
        %v2364 = vpop.f32.mrf.mxu0
        %v2365 = vadd.f32 %v2268, %v2364
        %v2366 = vpop.f32.mrf.mxu0
        %2367 = vmatprep.mubr.bf16.mxu0 %v1925
        %2368 = vmatmul.mubr.bf16.gmra.mxu0 %v1924
        %v2369 = vpop.f32.mrf.mxu0
        %v2370 = vadd.f32 %v2273, %v2369
        %v2371 = vpop.f32.mrf.mxu0
        %v2372 = vpop.f32.mrf.mxu0
        %v2373 = vadd.f32 %v2276, %v2372
        %v2374 = vpop.f32.mrf.mxu0
        %2375 = vmatprep.mubr.bf16.mxu0 %v1929
        %2376 = vmatmul.mubr.bf16.gmra.mxu0 %v1928
        %v2377 = vpop.f32.mrf.mxu0
        %v2378 = vadd.f32 %v2281, %v2377
        %v2379 = vpop.f32.mrf.mxu0
        %v2380 = vpop.f32.mrf.mxu0
        %v2381 = vadd.f32 %v2284, %v2380
        %v2382 = vpop.f32.mrf.mxu0
        %2383 = vdwg.mxu0
        %v2384 = vadd.f32 %v609, %v2322
        %v2385 = vadd.f32 %v610, %v2325
        %v2386 = vadd.f32 %v611, %v2330
        %v2387 = vadd.f32 %v612, %v2333
        %v2388 = vadd.f32 %v613, %v2338
        %v2389 = vadd.f32 %v614, %v2341
        %v2390 = vadd.f32 %v615, %v2346
        %v2391 = vadd.f32 %v616, %v2349
        %v2392 = vadd.f32 %v617, %v2354
        %v2393 = vadd.f32 %v618, %v2357
        %v2394 = vadd.f32 %v619, %v2362
        %v2395 = vadd.f32 %v620, %v2365
        %v2396 = vadd.f32 %v621, %v2370
        %v2397 = vadd.f32 %v622, %v2373
        %v2398 = vadd.f32 %v623, %v2378
        %v2399 = vadd.f32 %v624, %v2381
        %2400 = vst [vmem:[%s379] sm:$0xff] %v2384
        %2401 = vst [vmem:[%s379 + $0x8] sm:$0xff] %v2385
        %2402 = vst [vmem:[%s379 + $0x10] sm:$0xff] %v2386
        %2403 = vst [vmem:[%s379 + $0x18] sm:$0xff] %v2387
        %2404 = vst [vmem:[%s379 + $0x20] sm:$0xff] %v2388
        %2405 = vst [vmem:[%s379 + $0x28] sm:$0xff] %v2389
        %2406 = vst [vmem:[%s379 + $0x30] sm:$0xff] %v2390
        %2407 = vst [vmem:[%s379 + $0x38] sm:$0xff] %v2391
        %2408 = vst [vmem:[%s379 + $0x40] sm:$0xff] %v2392
        %2409 = vst [vmem:[%s379 + $0x48] sm:$0xff] %v2393
        %2410 = vst [vmem:[%s379 + $0x50] sm:$0xff] %v2394
        %2411 = vst [vmem:[%s379 + $0x58] sm:$0xff] %v2395
        %2412 = vst [vmem:[%s379 + $0x60] sm:$0xff] %v2396
        %2413 = vst [vmem:[%s379 + $0x68] sm:$0xff] %v2397
        %2414 = vst [vmem:[%s379 + $0x70] sm:$0xff] %v2398
        %2415 = vst [vmem:[%s379 + $0x78] sm:$0xff] %v2399
        %s2416 = sand.u32 %s193, 1
        %s2417 = scalar_lea.sflag [#allocation4], %s2416
        %s2418 = sand.u32 %s193, 1
        %s2419 = smul.addr %s2418, 128
        %s2420 = scalar_lea.vmem [#allocation11], %s2419
        // Predicated region
        $region69: #{tpu_custom_call.1} parent=47 // pred_check
          %p2421 = pneg %p203
        $region70: #{tpu_custom_call.1} parent=47 // pred_check_branch
          %2423 = sbr.rel (%p2421) target = $region72
        $region71: #{tpu_custom_call.1} parent=47 // pred_region
          %s2424 = smul.u32 16, %s28
          %s2426 = ssub.s32 2048, 2048
          %2427 = vsyncadd %s2417, %s2426
          %s2428 = smul.addr %s2424, 128
          %s2429 = scalar_lea.hbm %s7, %s2428
          %s2430 = sshll.u32 %s2420, 4
          %s2431 = int_to_ptr.vmem [resolvable:$true] %s2430
          %2436 = dma.vmem_to_hbm [thread:$0]  %s2431, 2048, %s2429, %s2417, 128, 128, 8
        $region72: #{tpu_custom_call.1} parent=47 // pred_fallthru
          _
      $region48: #{tpu_custom_call.1} parent=5 // pred_fallthru
        _
      %p2437 = scmp.le.s32.totalorder 2, %s23
      // Predicated region
      $region73: #{tpu_custom_call.1} parent=5 // pred_check
        %p2438 = pneg %p2437
      $region74: #{tpu_custom_call.1} parent=5 // pred_check_branch
        %2440 = sbr.rel (%p2438) target = $region76
      $region75: #{tpu_custom_call.1} parent=5 // pred_region
        %s2441 = ssub.s32 %s23, 2
        // Predicated region
        $region77: #{tpu_custom_call.1} parent=75 // pred_check
          %p2442 = pneg %p209
        $region78: #{tpu_custom_call.1} parent=75 // pred_check_branch
          %2444 = sbr.rel (%p2442) target = $region80
        $region79: #{tpu_custom_call.1} parent=75 // pred_region
          %s2445 = sand.u32 %s194, 1
          %s2446 = scalar_lea.sflag [#allocation4], %s2445
          %s2447 = sand.u32 %s194, 1
          %s2448 = smul.addr %s2447, 128
          %s2449 = scalar_lea.vmem [#allocation11], %s2448
          %2450 = dma.done %s2446, 2048
        $region80: #{tpu_custom_call.1} parent=75 // pred_fallthru
          _
      $region76: #{tpu_custom_call.1} parent=5 // pred_fallthru
        _
    $region6: #{tpu_custom_call.1} parent=1 // loop_footer
      %s27 = sadd.s32 1, %s23
    $region7: #{tpu_custom_call.1} parent=1 // loop_footer_branch
      %22 = sbr.rel target = $region3
    $region8: #{tpu_custom_call.1} parent=1 // loop_exit
      _
    %2451 = vsyncpa [#allocation3], 1
    %s2452 = scalar_lea.sflag [#allocation3], 1
    %2453 = vsyncpa %s2452, 1
    %2454 = vsyncpa [#allocation6], 1
    %s2455 = scalar_lea.sflag [#allocation6], 1
    %2456 = vsyncpa %s2455, 1
    %2457 = vsyncpa [#allocation9], 1
    %2458 = vsyncpa [#allocation4], 1
    %s2459 = scalar_lea.sflag [#allocation4], 1
    %2460 = vsyncpa %s2459, 1

</llo_original>
